<compile_context>
chip_gen: v5e
topology: v5e:2x2
jax: 0.10.0
libtpu: 0.0.40
codegen_flags: <defaults>
</compile_context>

<pallas_src>
import functools

import jax
import jax.numpy as jnp
import numpy as np
from jax.experimental import pallas as pl
from jax.experimental.pallas import tpu as pltpu


_TK_STREAM = 512   # contraction block when a weight has to be streamed


# ------------------------- generation-aware sizing -------------------------

@functools.lru_cache(maxsize=None)
def _tpu_vmem_capacity_bytes():
    """Physical per-core VMEM (falls back to 128 MiB if the query fails)."""
    try:
        info = pltpu.get_tpu_info()
        cap = int(getattr(info, "vmem_capacity_bytes", 0))
        if cap > 0:
            return cap
    except Exception:  # pragma: no cover - conservative fallback
        pass
    return 128 * 1024 * 1024


def _vmem_limit_bytes():
    # ~60% of physical VMEM, clamped: v5e/v6e (128 MiB) -> ~76 MiB, v7x (64 MiB) -> ~38 MiB.
    cap = _tpu_vmem_capacity_bytes()
    return max(32 * 1024 * 1024, min(int(cap * 0.6), 100 * 1024 * 1024))


def _row_tile_target():
    # Bigger M tiles on 128 MiB parts (fewer grid steps on low-BW v5e), smaller on v7x.
    return 512 if _tpu_vmem_capacity_bytes() >= 100 * 1024 * 1024 else 256


def _tile(dim, target):
    """Block size: full dim if small / indivisible, else the target."""
    if dim <= target or dim % target != 0:
        return dim
    return target


def _row_tile(m):
    """Row tile, preferring >=2 tiles on the parallel axis (v7x megacore)."""
    tm = _tile(m, _row_tile_target())
    if m // tm < 2:
        for cand in (m // 2, m // 4):
            if cand >= 8 and m % cand == 0 and cand % 8 == 0:
                tm = cand
                break
    return tm


def _pick_tk(K, N, w_itemsize):
    """Full-K (weight fully VMEM-resident) when it fits comfortably, else stream."""
    if 2 * K * N * w_itemsize <= _vmem_limit_bytes() // 3:
        return K
    return _tile(K, _TK_STREAM)


def _cparams(*sem):
    return pltpu.CompilerParams(
        dimension_semantics=sem,
        vmem_limit_bytes=_vmem_limit_bytes())


# ----------------------------- Pallas kernels ------------------------------

def _linear_kernel(x_ref, w_ref, b_ref, o_ref, acc_ref, *, activation):
    # x: (tm, tk), w: (tk, N) bf16, b: (1, N) f32 -> o: (tm, N)
    k = pl.program_id(1)

    @pl.when(k == 0)
    def _():
        acc_ref[...] = jnp.zeros_like(acc_ref)

    acc_ref[...] += jnp.dot(x_ref[...].astype(jnp.bfloat16),
                            w_ref[...].astype(jnp.bfloat16),
                            preferred_element_type=jnp.float32)

    @pl.when(k == pl.num_programs(1) - 1)
    def _():
        y = acc_ref[...] + b_ref[...]
        if activation == "gelu":
            # TODO(synk): HF BERT uses erf-gelu; tanh approximation is numerically close.
            y = jax.nn.gelu(y, approximate=True)
        o_ref[...] = y.astype(o_ref.dtype)


def _linear_ln_kernel(x_ref, w_ref, b_ref, r_ref, g_ref, bt_ref,
                      of_ref, ob_ref, acc_ref, *, eps):
    # matmul + bias, then residual-add + LayerNorm fused into the epilogue.
    # Dual output: f32 residual stream + bf16 copy feeding the next matmul.
    k = pl.program_id(1)

    @pl.when(k == 0)
    def _():
        acc_ref[...] = jnp.zeros_like(acc_ref)

    acc_ref[...] += jnp.dot(x_ref[...].astype(jnp.bfloat16),
                            w_ref[...].astype(jnp.bfloat16),
                            preferred_element_type=jnp.float32)

    @pl.when(k == pl.num_programs(1) - 1)
    def _():
        h = acc_ref[...] + b_ref[...] + r_ref[...]
        mu = jnp.mean(h, axis=-1, keepdims=True)
        var = jnp.maximum(jnp.mean(h * h, axis=-1, keepdims=True) - mu * mu, 0.0)
        y = (h - mu) * jax.lax.rsqrt(var + eps) * g_ref[...] + bt_ref[...]
        of_ref[...] = y
        ob_ref[...] = y.astype(jnp.bfloat16)


def _layernorm_kernel(x_ref, g_ref, b_ref, of_ref, ob_ref, *, eps):
    # Residual-free LayerNorm (embeddings).  Dual f32/bf16 output.
    h = x_ref[...]
    mu = jnp.mean(h, axis=-1, keepdims=True)
    var = jnp.maximum(jnp.mean(h * h, axis=-1, keepdims=True) - mu * mu, 0.0)
    y = (h - mu) * jax.lax.rsqrt(var + eps) * g_ref[...] + b_ref[...]
    of_ref[...] = y
    ob_ref[...] = y.astype(jnp.bfloat16)


def _attention_kernel(q_ref, kv_ref, mask_ref, o_ref, *, heads, scale):
    # q_ref : (1, tq, 3D) bf16  -- only the Q columns of this query block are used.
    # kv_ref: (1, S, 3D)  bf16  -- K / V columns for all keys.
    # mask  : (1, 1, S)   f32 additive.   out: (1, tq, D) bf16.
    D = o_ref.shape[2]
    dh = D // heads
    m = mask_ref[0]                                        # (1, S)

    # Group heads so every output store is >=128 lanes wide (unmasked vst).
    grp = max(1, min(heads, 128 // max(dh, 1)))
    while heads % grp:
        grp -= 1

    for g0 in range(0, heads, grp):
        parts = []
        for h in range(g0, g0 + grp):
            hs, he = h * dh, (h + 1) * dh
            q = q_ref[0, :, hs:he] * scale                 # scale q (S*dh muls), stays bf16
            k = kv_ref[0, :, D + hs:D + he]                # (S, dh)
            v = kv_ref[0, :, 2 * D + hs:2 * D + he]        # (S, dh)
            # QK^T without materializing k.T: contract last dims of both.
            s = jax.lax.dot_general(q, k, (((1,), (1,)), ((), ())),
                                    preferred_element_type=jnp.float32)
            s = s + m                                      # broadcast additive mask
            s = s - jnp.max(s, axis=-1, keepdims=True)
            p = jnp.exp(s)
            p = p * pl.reciprocal(jnp.sum(p, axis=-1, keepdims=True), approx=True)
            parts.append(jnp.dot(p.astype(jnp.bfloat16), v,
                                 preferred_element_type=jnp.float32))
        blk = parts[0] if grp == 1 else jnp.concatenate(parts, axis=-1)
        o_ref[0, :, g0 * dh:(g0 + grp) * dh] = blk.astype(o_ref.dtype)


# ----------------------------- kernel wrappers ------------------------------

def pallas_linear(x, w, b, activation=None, out_dtype=jnp.bfloat16):
    M, K = x.shape
    N = w.shape[1]
    tm = _row_tile(M)
    tk = _pick_tk(K, N, w.dtype.itemsize)
    return pl.pallas_call(
        functools.partial(_linear_kernel, activation=activation),
        out_shape=jax.ShapeDtypeStruct((M, N), out_dtype),
        grid=(M // tm, K // tk),
        in_specs=[
            pl.BlockSpec((tm, tk), lambda i, k: (i, k)),
            pl.BlockSpec((tk, N), lambda i, k: (k, 0)),   # tk==K -> weight resident
            pl.BlockSpec((1, N), lambda i, k: (0, 0)),
        ],
        out_specs=pl.BlockSpec((tm, N), lambda i, k: (i, 0)),
        scratch_shapes=[pltpu.VMEM((tm, N), jnp.float32)],
        compiler_params=_cparams("parallel", "arbitrary"),
    )(x, w, b.reshape(1, N))


def pallas_linear_ln(x, w, b, residual, gamma, beta, eps=1e-12):
    M, K = x.shape
    N = w.shape[1]
    tm = _row_tile(M)
    tk = _pick_tk(K, N, w.dtype.itemsize)
    return pl.pallas_call(
        functools.partial(_linear_ln_kernel, eps=eps),
        out_shape=(jax.ShapeDtypeStruct((M, N), jnp.float32),
                   jax.ShapeDtypeStruct((M, N), jnp.bfloat16)),
        grid=(M // tm, K // tk),
        in_specs=[
            pl.BlockSpec((tm, tk), lambda i, k: (i, k)),
            pl.BlockSpec((tk, N), lambda i, k: (k, 0)),
            pl.BlockSpec((1, N), lambda i, k: (0, 0)),
            pl.BlockSpec((tm, N), lambda i, k: (i, 0)),
            pl.BlockSpec((1, N), lambda i, k: (0, 0)),
            pl.BlockSpec((1, N), lambda i, k: (0, 0)),
        ],
        out_specs=(pl.BlockSpec((tm, N), lambda i, k: (i, 0)),
                   pl.BlockSpec((tm, N), lambda i, k: (i, 0))),
        scratch_shapes=[pltpu.VMEM((tm, N), jnp.float32)],
        compiler_params=_cparams("parallel", "arbitrary"),
    )(x, w, b.reshape(1, N), residual, gamma.reshape(1, N), beta.reshape(1, N))


def pallas_layernorm(x, gamma, beta, eps=1e-12):
    M, D = x.shape
    tm = _row_tile(M)
    return pl.pallas_call(
        functools.partial(_layernorm_kernel, eps=eps),
        out_shape=(jax.ShapeDtypeStruct((M, D), jnp.float32),
                   jax.ShapeDtypeStruct((M, D), jnp.bfloat16)),
        grid=(M // tm,),
        in_specs=[
            pl.BlockSpec((tm, D), lambda i: (i, 0)),
            pl.BlockSpec((1, D), lambda i: (0, 0)),
            pl.BlockSpec((1, D), lambda i: (0, 0)),
        ],
        out_specs=(pl.BlockSpec((tm, D), lambda i: (i, 0)),
                   pl.BlockSpec((tm, D), lambda i: (i, 0))),
        compiler_params=_cparams("parallel"),
    )(x, gamma.reshape(1, D), beta.reshape(1, D))


def pallas_attention(qkv, add_mask, *, heads):
    # qkv: (B, S, 3D) bf16; add_mask: (B, 1, S) f32 additive mask.
    B, S, threeD = qkv.shape
    D = threeD // 3
    dh = D // heads
    scale = 1.0 / float(np.sqrt(dh))
    # Query-block tiling: bounds (tq, S) score temporaries and yields >=2
    # parallel grid points even at small B (dual-TC v7x).
    tq = S if (S <= 256 or S % 256 != 0) else 256
    return pl.pallas_call(
        functools.partial(_attention_kernel, heads=heads, scale=scale),
        out_shape=jax.ShapeDtypeStruct((B, S, D), jnp.bfloat16),
        grid=(B, S // tq),
        in_specs=[
            pl.BlockSpec((1, tq, threeD), lambda b, qi: (b, qi, 0)),  # query block
            pl.BlockSpec((1, S, threeD), lambda b, qi: (b, 0, 0)),    # full K/V
            pl.BlockSpec((1, 1, S), lambda b, qi: (b, 0, 0)),
        ],
        out_specs=pl.BlockSpec((1, tq, D), lambda b, qi: (b, qi, 0)),
        compiler_params=_cparams("parallel", "parallel"),
    )(qkv, qkv, add_mask)


# ------------------------------- model glue --------------------------------

def init_params(key, *, vocab, max_pos, hidden, heads, layers, ffn,
                n_action, n_verb, n_noun):
    def nrm(k, shape, dtype=jnp.bfloat16):
        return (jax.random.normal(k, shape, jnp.float32) * 0.02).astype(dtype)

    n_total = n_action + n_verb + n_noun
    n_pad = ((n_total + 127) // 128) * 128    # lane-dense fused head; slice later

    keys = iter(jax.random.split(key, 8 + 8 * layers))
    p = {
        "word_emb": nrm(next(keys), (vocab, hidden), jnp.float32),
        "pos_emb": nrm(next(keys), (max_pos, hidden), jnp.float32),
        "type_emb": nrm(next(keys), (2, hidden), jnp.float32),
        "emb_ln_g": jnp.ones((hidden,), jnp.float32),
        "emb_ln_b": jnp.zeros((hidden,), jnp.float32),
        "layers": [],
        # Fused + lane-padded classifier-head weight: one dense matmul for all 3 heads.
        "head_w": nrm(next(keys), (hidden, n_pad)),
        "head_b": jnp.zeros((n_pad,), jnp.float32),
    }
    for _ in range(layers):
        p["layers"].append({
            # Fused Q/K/V projection weight.
            "w_qkv": nrm(next(keys), (hidden, 3 * hidden)),
            "b_qkv": jnp.zeros((3 * hidden,), jnp.float32),
            "wo": nrm(next(keys), (hidden, hidden)),
            "bo": jnp.zeros((hidden,), jnp.float32),
            "ln1_g": jnp.ones((hidden,), jnp.float32),
            "ln1_b": jnp.zeros((hidden,), jnp.float32),
            "w1": nrm(next(keys), (hidden, ffn)),
            "b1": jnp.zeros((ffn,), jnp.float32),
            "w2": nrm(next(keys), (ffn, hidden)),
            "b2": jnp.zeros((hidden,), jnp.float32),
            "ln2_g": jnp.ones((hidden,), jnp.float32),
            "ln2_b": jnp.zeros((hidden,), jnp.float32),
        })
    return p


def encoder_layer(x_f32, x_bf16, add_mask, lp, heads, B, S, D):
    # x_f32: (B*S, D) f32 residual stream, x_bf16: bf16 copy feeding matmuls.
    qkv = pallas_linear(x_bf16, lp["w_qkv"], lp["b_qkv"]).reshape(B, S, 3 * D)
    ctx = pallas_attention(qkv, add_mask, heads=heads).reshape(B * S, D)
    # Output projection with residual-add + LayerNorm fused into the epilogue.
    x_f32, x_bf16 = pallas_linear_ln(ctx, lp["wo"], lp["bo"], x_f32,
                                     lp["ln1_g"], lp["ln1_b"])
    # FFN: gelu matmul, then second matmul fused with residual + LayerNorm.
    ff = pallas_linear(x_bf16, lp["w1"], lp["b1"], activation="gelu")
    x_f32, x_bf16 = pallas_linear_ln(ff, lp["w2"], lp["b2"], x_f32,
                                     lp["ln2_g"], lp["ln2_b"])
    return x_f32, x_bf16


def egtea_forward(params, input_ids, attn_mask, *, heads, n_action, n_verb, n_noun):
    B, S = input_ids.shape
    D = params["word_emb"].shape[1]

    # Embeddings (gather is XLA glue; LN is a residual-free dual-output kernel).
    # TODO(synk): token_type_ids assumed all-zero (matches reference forward signature).
    pos = jnp.arange(S, dtype=jnp.int32)
    emb = (jnp.take(params["word_emb"], input_ids, axis=0)
           + jnp.take(params["pos_emb"], pos, axis=0)[None, :, :]
           + params["type_emb"][0][None, None, :])
    x_f32, x_bf16 = pallas_layernorm(emb.reshape(B * S, D),
                                     params["emb_ln_g"], params["emb_ln_b"])

    # HF-style additive attention mask (kept in f32 for the softmax).
    add_mask = ((1.0 - attn_mask.astype(jnp.float32)) * -1e9).reshape(B, 1, S)

    for lp in params["layers"]:
        x_f32, x_bf16 = encoder_layer(x_f32, x_bf16, add_mask, lp, heads, B, S, D)

    cls_f32 = x_f32.reshape(B, S, D)[:, 0, :]     # (B, D) -> LM_feat
    cls_bf16 = x_bf16.reshape(B, S, D)[:, 0, :]   # bf16 input to the head matmul

    # Fused action/verb/noun heads: one lane-dense (padded) matmul, slice after.
    logits = pallas_linear(cls_bf16, params["head_w"], params["head_b"],
                           out_dtype=jnp.float32)
    n_total = n_action + n_verb + n_noun
    return {
        "logit_action": logits[:, :n_action],
        "logit_verb": logits[:, n_action:n_action + n_verb],
        "logit_noun": logits[:, n_action + n_verb:n_total],
        "LM_feat": cls_f32,
    }


# ---------------------------------- main ------------------------------------

if __name__ == "__main__":
    B, S = 2, 8
    VOCAB, MAX_POS = 100, 16
    HIDDEN, HEADS, LAYERS, FFN = 32, 2, 2, 64
    N_ACTION, N_VERB, N_NOUN = 16, 8, 12

    key = jax.random.PRNGKey(0)
    k_param, k_ids = jax.random.split(key)
    params = init_params(k_param, vocab=VOCAB, max_pos=MAX_POS, hidden=HIDDEN,
                         heads=HEADS, layers=LAYERS, ffn=FFN,
                         n_action=N_ACTION, n_verb=N_VERB, n_noun=N_NOUN)

    input_ids = jax.random.randint(k_ids, (B, S), 0, VOCAB, dtype=jnp.int32)
    attn_mask = jnp.ones((B, S), dtype=jnp.int32)

    fwd = jax.jit(functools.partial(egtea_forward, heads=HEADS,
                                    n_action=N_ACTION, n_verb=N_VERB,
                                    n_noun=N_NOUN))
    out = fwd(params, input_ids, attn_mask)
    jax.block_until_ready(out)

    assert out["logit_action"].shape == (B, N_ACTION)
    assert out["logit_verb"].shape == (B, N_VERB)
    assert out["logit_noun"].shape == (B, N_NOUN)
    assert out["LM_feat"].shape == (B, HIDDEN)
    assert all(bool(jnp.isfinite(v).all()) for v in out.values())
    print("KERNEL_OK")
</pallas_src>

<mosaic_0001>
module attributes {stable_mosaic.version = 11 : i64} {
  func.func @_linear_ln_kernel(%arg0: i32, %arg1: i32, %arg2: memref<8x32xbf16, #tpu.memory_space<vmem>>, %arg3: memref<32x32xbf16, #tpu.memory_space<vmem>>, %arg4: memref<1x32xf32, #tpu.memory_space<vmem>>, %arg5: memref<8x32xf32, #tpu.memory_space<vmem>>, %arg6: memref<1x32xf32, #tpu.memory_space<vmem>>, %arg7: memref<1x32xf32, #tpu.memory_space<vmem>>, %arg8: memref<8x32xf32, #tpu.memory_space<vmem>>, %arg9: memref<8x32xbf16, #tpu.memory_space<vmem>>, %arg10: memref<8x32xf32, #tpu.memory_space<vmem>>) attributes {dimension_semantics = [#tpu.dimension_semantics<parallel>, #tpu.dimension_semantics<arbitrary>], iteration_bounds = array<i64: 2, 1>, scalar_prefetch = 0 : i64, scratch_operands = 1 : i64, tpu.core_type = #tpu.core_type<tc>, window_params = [{transform_indices = @transform_0, window_bounds = array<i64: 8, 32>}, {transform_indices = @transform_1, window_bounds = array<i64: 32, 32>}, {pipeline_mode = #tpu.pipeline_mode<synchronous>, transform_indices = @transform_2, window_bounds = array<i64: 1, 32>}, {transform_indices = @transform_3, window_bounds = array<i64: 8, 32>}, {pipeline_mode = #tpu.pipeline_mode<synchronous>, transform_indices = @transform_4, window_bounds = array<i64: 1, 32>}, {pipeline_mode = #tpu.pipeline_mode<synchronous>, transform_indices = @transform_5, window_bounds = array<i64: 1, 32>}, {transform_indices = @transform_6, window_bounds = array<i64: 8, 32>}, {transform_indices = @transform_7, window_bounds = array<i64: 8, 32>}]} {
    %c0_i32 = arith.constant 0 : i32
    %0 = arith.cmpi eq, %arg1, %c0_i32 : i32
    %1 = arith.extui %0 : i1 to i32
    %c0_i32_0 = arith.constant 0 : i32
    %2 = arith.cmpi ne, %1, %c0_i32_0 : i32
    scf.if %2 {
      %cst_10 = arith.constant 0.000000e+00 : f32
      %12 = vector.broadcast %cst_10 : f32 to vector<8x32xf32>
      %c0_11 = arith.constant 0 : index
      %c0_12 = arith.constant 0 : index
      %13 = vector.load %arg10[%c0_11, %c0_12] : memref<8x32xf32, #tpu.memory_space<vmem>>, vector<8x32xf32>
      tpu.vector_store %arg10[%c0_11, %c0_12], %12 {strides = array<i32>} : memref<8x32xf32, #tpu.memory_space<vmem>>, vector<8x32xf32>,
    } else {
    }
    %c0 = arith.constant 0 : index
    %c0_1 = arith.constant 0 : index
    %3 = vector.load %arg10[%c0, %c0_1] : memref<8x32xf32, #tpu.memory_space<vmem>>, vector<8x32xf32>
    %c0_2 = arith.constant 0 : index
    %c0_3 = arith.constant 0 : index
    %4 = vector.load %arg2[%c0_2, %c0_3] : memref<8x32xbf16, #tpu.memory_space<vmem>>, vector<8x32xbf16>
    %c0_4 = arith.constant 0 : index
    %c0_5 = arith.constant 0 : index
    %5 = vector.load %arg3[%c0_4, %c0_5] : memref<32x32xbf16, #tpu.memory_space<vmem>>, vector<32x32xbf16>
    %cst = arith.constant dense<0.000000e+00> : vector<8x32xf32>
    %6 = tpu.matmul %4, %5, %cst {dimension_numbers = #tpu.dot_dimension_numbers<[1], [0], [0], [1], [0, 0, 1, 1], [], []>} : vector<8x32xbf16>, vector<32x32xbf16>, vector<8x32xf32> -> vector<8x32xf32>
    %7 = arith.addf %3, %6 : vector<8x32xf32>
    %c0_6 = arith.constant 0 : index
    %c0_7 = arith.constant 0 : index
    %8 = vector.load %arg10[%c0_6, %c0_7] : memref<8x32xf32, #tpu.memory_space<vmem>>, vector<8x32xf32>
    tpu.vector_store %arg10[%c0_6, %c0_7], %7 {strides = array<i32>} : memref<8x32xf32, #tpu.memory_space<vmem>>, vector<8x32xf32>,
    %c0_i32_8 = arith.constant 0 : i32
    %9 = arith.cmpi eq, %arg1, %c0_i32_8 : i32
    %10 = arith.extui %9 : i1 to i32
    %c0_i32_9 = arith.constant 0 : i32
    %11 = arith.cmpi ne, %10, %c0_i32_9 : i32
    scf.if %11 {
      %c0_10 = arith.constant 0 : index
      %c0_11 = arith.constant 0 : index
      %12 = vector.load %arg10[%c0_10, %c0_11] : memref<8x32xf32, #tpu.memory_space<vmem>>, vector<8x32xf32>
      %c0_12 = arith.constant 0 : index
      %c0_13 = arith.constant 0 : index
      %13 = vector.load %arg4[%c0_12, %c0_13] : memref<1x32xf32, #tpu.memory_space<vmem>>, vector<1x32xf32>
      %14 = vector.broadcast %13 : vector<1x32xf32> to vector<8x32xf32>
      %15 = arith.addf %12, %14 : vector<8x32xf32>
      %c0_14 = arith.constant 0 : index
      %c0_15 = arith.constant 0 : index
      %16 = vector.load %arg5[%c0_14, %c0_15] : memref<8x32xf32, #tpu.memory_space<vmem>>, vector<8x32xf32>
      %17 = arith.addf %15, %16 : vector<8x32xf32>
      %cst_16 = arith.constant dense<0.000000e+00> : vector<8xf32>
      %18 = vector.multi_reduction <add>, %17, %cst_16 [1] : vector<8x32xf32> to vector<8xf32>
      %19 = vector.shape_cast %18 : vector<8xf32> to vector<8x1xf32>
      %cst_17 = arith.constant 3.200000e+01 : f32
      %20 = vector.broadcast %cst_17 : f32 to vector<8x1xf32>
      %21 = arith.divf %19, %20 : vector<8x1xf32>
      %22 = arith.mulf %17, %17 : vector<8x32xf32>
      %cst_18 = arith.constant dense<0.000000e+00> : vector<8xf32>
      %23 = vector.multi_reduction <add>, %22, %cst_18 [1] : vector<8x32xf32> to vector<8xf32>
      %24 = vector.shape_cast %23 : vector<8xf32> to vector<8x1xf32>
      %cst_19 = arith.constant 3.200000e+01 : f32
      %25 = vector.broadcast %cst_19 : f32 to vector<8x1xf32>
      %26 = arith.divf %24, %25 : vector<8x1xf32>
      %27 = arith.mulf %21, %21 : vector<8x1xf32>
      %28 = arith.subf %26, %27 : vector<8x1xf32>
      %cst_20 = arith.constant 0.000000e+00 : f32
      %29 = vector.broadcast %cst_20 : f32 to vector<8x1xf32>
      %30 = arith.maximumf %28, %29 : vector<8x1xf32>
      %31 = vector.broadcast %21 : vector<8x1xf32> to vector<8x32xf32>
      %32 = arith.subf %17, %31 : vector<8x32xf32>
      %cst_21 = arith.constant 9.99999996E-13 : f32
      %33 = vector.broadcast %cst_21 : f32 to vector<8x1xf32>
      %34 = arith.addf %30, %33 : vector<8x1xf32>
      %35 = math.rsqrt %34 : vector<8x1xf32>
      %36 = vector.broadcast %35 : vector<8x1xf32> to vector<8x32xf32>
      %37 = arith.mulf %32, %36 : vector<8x32xf32>
      %c0_22 = arith.constant 0 : index
      %c0_23 = arith.constant 0 : index
      %38 = vector.load %arg6[%c0_22, %c0_23] : memref<1x32xf32, #tpu.memory_space<vmem>>, vector<1x32xf32>
      %39 = vector.broadcast %38 : vector<1x32xf32> to vector<8x32xf32>
      %40 = arith.mulf %37, %39 : vector<8x32xf32>
      %c0_24 = arith.constant 0 : index
      %c0_25 = arith.constant 0 : index
      %41 = vector.load %arg7[%c0_24, %c0_25] : memref<1x32xf32, #tpu.memory_space<vmem>>, vector<1x32xf32>
      %42 = vector.broadcast %41 : vector<1x32xf32> to vector<8x32xf32>
      %43 = arith.addf %40, %42 : vector<8x32xf32>
      %c0_26 = arith.constant 0 : index
      %c0_27 = arith.constant 0 : index
      %44 = vector.load %arg8[%c0_26, %c0_27] : memref<8x32xf32, #tpu.memory_space<vmem>>, vector<8x32xf32>
      tpu.vector_store %arg8[%c0_26, %c0_27], %43 {strides = array<i32>} : memref<8x32xf32, #tpu.memory_space<vmem>>, vector<8x32xf32>,
      %45 = arith.truncf %43 : vector<8x32xf32> to vector<8x32xbf16>
      %c0_28 = arith.constant 0 : index
      %c0_29 = arith.constant 0 : index
      %46 = vector.load %arg9[%c0_28, %c0_29] : memref<8x32xbf16, #tpu.memory_space<vmem>>, vector<8x32xbf16>
      tpu.vector_store %arg9[%c0_28, %c0_29], %45 {strides = array<i32>} : memref<8x32xbf16, #tpu.memory_space<vmem>>, vector<8x32xbf16>,
    } else {
    }
    return
  }
  func.func @transform_0(%arg0: i32, %arg1: i32) -> (i32, i32) {
    %c0_i32 = arith.constant 0 : i32
    return %arg0, %arg1 : i32, i32
  }
  func.func @transform_1(%arg0: i32, %arg1: i32) -> (i32, i32) {
    %c0_i32 = arith.constant 0 : i32
    %c0_i32_0 = arith.constant 0 : i32
    return %arg1, %c0_i32 : i32, i32
  }
  func.func @transform_2(%arg0: i32, %arg1: i32) -> (i32, i32) {
    %c0_i32 = arith.constant 0 : i32
    %c0_i32_0 = arith.constant 0 : i32
    %c0_i32_1 = arith.constant 0 : i32
    return %c0_i32, %c0_i32_0 : i32, i32
  }
  func.func @transform_3(%arg0: i32, %arg1: i32) -> (i32, i32) {
    %c0_i32 = arith.constant 0 : i32
    %c0_i32_0 = arith.constant 0 : i32
    return %arg0, %c0_i32 : i32, i32
  }
  func.func @transform_4(%arg0: i32, %arg1: i32) -> (i32, i32) {
    %c0_i32 = arith.constant 0 : i32
    %c0_i32_0 = arith.constant 0 : i32
    %c0_i32_1 = arith.constant 0 : i32
    return %c0_i32, %c0_i32_0 : i32, i32
  }
  func.func @transform_5(%arg0: i32, %arg1: i32) -> (i32, i32) {
    %c0_i32 = arith.constant 0 : i32
    %c0_i32_0 = arith.constant 0 : i32
    %c0_i32_1 = arith.constant 0 : i32
    return %c0_i32, %c0_i32_0 : i32, i32
  }
  func.func @transform_6(%arg0: i32, %arg1: i32) -> (i32, i32) {
    %c0_i32 = arith.constant 0 : i32
    %c0_i32_0 = arith.constant 0 : i32
    return %arg0, %c0_i32 : i32, i32
  }
  func.func @transform_7(%arg0: i32, %arg1: i32) -> (i32, i32) {
    %c0_i32 = arith.constant 0 : i32
    %c0_i32_0 = arith.constant 0 : i32
    return %arg0, %c0_i32 : i32, i32
  }
}

module attributes {stable_mosaic.version = 11 : i64} {
  func.func @_linear_kernel(%arg0: i32, %arg1: i32, %arg2: memref<8x32xbf16, #tpu.memory_space<vmem>>, %arg3: memref<32x96xbf16, #tpu.memory_space<vmem>>, %arg4: memref<1x96xf32, #tpu.memory_space<vmem>>, %arg5: memref<8x96xbf16, #tpu.memory_space<vmem>>, %arg6: memref<8x96xf32, #tpu.memory_space<vmem>>) attributes {dimension_semantics = [#tpu.dimension_semantics<parallel>, #tpu.dimension_semantics<arbitrary>], iteration_bounds = array<i64: 2, 1>, scalar_prefetch = 0 : i64, scratch_operands = 1 : i64, tpu.core_type = #tpu.core_type<tc>, window_params = [{transform_indices = @transform_0, window_bounds = array<i64: 8, 32>}, {transform_indices = @transform_1, window_bounds = array<i64: 32, 96>}, {pipeline_mode = #tpu.pipeline_mode<synchronous>, transform_indices = @transform_2, window_bounds = array<i64: 1, 96>}, {transform_indices = @transform_3, window_bounds = array<i64: 8, 96>}]} {
    %c0_i32 = arith.constant 0 : i32
    %0 = arith.cmpi eq, %arg1, %c0_i32 : i32
    %1 = arith.extui %0 : i1 to i32
    %c0_i32_0 = arith.constant 0 : i32
    %2 = arith.cmpi ne, %1, %c0_i32_0 : i32
    scf.if %2 {
      %cst_10 = arith.constant 0.000000e+00 : f32
      %12 = vector.broadcast %cst_10 : f32 to vector<8x96xf32>
      %c0_11 = arith.constant 0 : index
      %c0_12 = arith.constant 0 : index
      %13 = vector.load %arg6[%c0_11, %c0_12] : memref<8x96xf32, #tpu.memory_space<vmem>>, vector<8x96xf32>
      tpu.vector_store %arg6[%c0_11, %c0_12], %12 {strides = array<i32>} : memref<8x96xf32, #tpu.memory_space<vmem>>, vector<8x96xf32>,
    } else {
    }
    %c0 = arith.constant 0 : index
    %c0_1 = arith.constant 0 : index
    %3 = vector.load %arg6[%c0, %c0_1] : memref<8x96xf32, #tpu.memory_space<vmem>>, vector<8x96xf32>
    %c0_2 = arith.constant 0 : index
    %c0_3 = arith.constant 0 : index
    %4 = vector.load %arg2[%c0_2, %c0_3] : memref<8x32xbf16, #tpu.memory_space<vmem>>, vector<8x32xbf16>
    %c0_4 = arith.constant 0 : index
    %c0_5 = arith.constant 0 : index
    %5 = vector.load %arg3[%c0_4, %c0_5] : memref<32x96xbf16, #tpu.memory_space<vmem>>, vector<32x96xbf16>
    %cst = arith.constant dense<0.000000e+00> : vector<8x96xf32>
    %6 = tpu.matmul %4, %5, %cst {dimension_numbers = #tpu.dot_dimension_numbers<[1], [0], [0], [1], [0, 0, 1, 1], [], []>} : vector<8x32xbf16>, vector<32x96xbf16>, vector<8x96xf32> -> vector<8x96xf32>
    %7 = arith.addf %3, %6 : vector<8x96xf32>
    %c0_6 = arith.constant 0 : index
    %c0_7 = arith.constant 0 : index
    %8 = vector.load %arg6[%c0_6, %c0_7] : memref<8x96xf32, #tpu.memory_space<vmem>>, vector<8x96xf32>
    tpu.vector_store %arg6[%c0_6, %c0_7], %7 {strides = array<i32>} : memref<8x96xf32, #tpu.memory_space<vmem>>, vector<8x96xf32>,
    %c0_i32_8 = arith.constant 0 : i32
    %9 = arith.cmpi eq, %arg1, %c0_i32_8 : i32
    %10 = arith.extui %9 : i1 to i32
    %c0_i32_9 = arith.constant 0 : i32
    %11 = arith.cmpi ne, %10, %c0_i32_9 : i32
    scf.if %11 {
      %c0_10 = arith.constant 0 : index
      %c0_11 = arith.constant 0 : index
      %12 = vector.load %arg6[%c0_10, %c0_11] : memref<8x96xf32, #tpu.memory_space<vmem>>, vector<8x96xf32>
      %c0_12 = arith.constant 0 : index
      %c0_13 = arith.constant 0 : index
      %13 = vector.load %arg4[%c0_12, %c0_13] : memref<1x96xf32, #tpu.memory_space<vmem>>, vector<1x96xf32>
      %14 = vector.broadcast %13 : vector<1x96xf32> to vector<8x96xf32>
      %15 = arith.addf %12, %14 : vector<8x96xf32>
      %16 = arith.truncf %15 : vector<8x96xf32> to vector<8x96xbf16>
      %c0_14 = arith.constant 0 : index
      %c0_15 = arith.constant 0 : index
      %17 = vector.load %arg5[%c0_14, %c0_15] : memref<8x96xbf16, #tpu.memory_space<vmem>>, vector<8x96xbf16>
      tpu.vector_store %arg5[%c0_14, %c0_15], %16 {strides = array<i32>} : memref<8x96xbf16, #tpu.memory_space<vmem>>, vector<8x96xbf16>,
    } else {
    }
    return
  }
  func.func @transform_0(%arg0: i32, %arg1: i32) -> (i32, i32) {
    %c0_i32 = arith.constant 0 : i32
    return %arg0, %arg1 : i32, i32
  }
  func.func @transform_1(%arg0: i32, %arg1: i32) -> (i32, i32) {
    %c0_i32 = arith.constant 0 : i32
    %c0_i32_0 = arith.constant 0 : i32
    return %arg1, %c0_i32 : i32, i32
  }
  func.func @transform_2(%arg0: i32, %arg1: i32) -> (i32, i32) {
    %c0_i32 = arith.constant 0 : i32
    %c0_i32_0 = arith.constant 0 : i32
    %c0_i32_1 = arith.constant 0 : i32
    return %c0_i32, %c0_i32_0 : i32, i32
  }
  func.func @transform_3(%arg0: i32, %arg1: i32) -> (i32, i32) {
    %c0_i32 = arith.constant 0 : i32
    %c0_i32_0 = arith.constant 0 : i32
    return %arg0, %c0_i32 : i32, i32
  }
}

module attributes {stable_mosaic.version = 11 : i64} {
  func.func @_layernorm_kernel(%arg0: i32, %arg1: memref<8x32xf32, #tpu.memory_space<vmem>>, %arg2: memref<1x32xf32, #tpu.memory_space<vmem>>, %arg3: memref<1x32xf32, #tpu.memory_space<vmem>>, %arg4: memref<8x32xf32, #tpu.memory_space<vmem>>, %arg5: memref<8x32xbf16, #tpu.memory_space<vmem>>) attributes {dimension_semantics = [#tpu.dimension_semantics<parallel>], iteration_bounds = array<i64: 2>, scalar_prefetch = 0 : i64, scratch_operands = 0 : i64, tpu.core_type = #tpu.core_type<tc>, window_params = [{transform_indices = @transform_0, window_bounds = array<i64: 8, 32>}, {pipeline_mode = #tpu.pipeline_mode<synchronous>, transform_indices = @transform_1, window_bounds = array<i64: 1, 32>}, {pipeline_mode = #tpu.pipeline_mode<synchronous>, transform_indices = @transform_2, window_bounds = array<i64: 1, 32>}, {transform_indices = @transform_3, window_bounds = array<i64: 8, 32>}, {transform_indices = @transform_4, window_bounds = array<i64: 8, 32>}]} {
    %c0 = arith.constant 0 : index
    %c0_0 = arith.constant 0 : index
    %0 = vector.load %arg1[%c0, %c0_0] : memref<8x32xf32, #tpu.memory_space<vmem>>, vector<8x32xf32>
    %cst = arith.constant dense<0.000000e+00> : vector<8xf32>
    %1 = vector.multi_reduction <add>, %0, %cst [1] : vector<8x32xf32> to vector<8xf32>
    %2 = vector.shape_cast %1 : vector<8xf32> to vector<8x1xf32>
    %cst_1 = arith.constant 3.200000e+01 : f32
    %3 = vector.broadcast %cst_1 : f32 to vector<8x1xf32>
    %4 = arith.divf %2, %3 : vector<8x1xf32>
    %5 = arith.mulf %0, %0 : vector<8x32xf32>
    %cst_2 = arith.constant dense<0.000000e+00> : vector<8xf32>
    %6 = vector.multi_reduction <add>, %5, %cst_2 [1] : vector<8x32xf32> to vector<8xf32>
    %7 = vector.shape_cast %6 : vector<8xf32> to vector<8x1xf32>
    %cst_3 = arith.constant 3.200000e+01 : f32
    %8 = vector.broadcast %cst_3 : f32 to vector<8x1xf32>
    %9 = arith.divf %7, %8 : vector<8x1xf32>
    %10 = arith.mulf %4, %4 : vector<8x1xf32>
    %11 = arith.subf %9, %10 : vector<8x1xf32>
    %cst_4 = arith.constant 0.000000e+00 : f32
    %12 = vector.broadcast %cst_4 : f32 to vector<8x1xf32>
    %13 = arith.maximumf %11, %12 : vector<8x1xf32>
    %14 = vector.broadcast %4 : vector<8x1xf32> to vector<8x32xf32>
    %15 = arith.subf %0, %14 : vector<8x32xf32>
    %cst_5 = arith.constant 9.99999996E-13 : f32
    %16 = vector.broadcast %cst_5 : f32 to vector<8x1xf32>
    %17 = arith.addf %13, %16 : vector<8x1xf32>
    %18 = math.rsqrt %17 : vector<8x1xf32>
    %19 = vector.broadcast %18 : vector<8x1xf32> to vector<8x32xf32>
    %20 = arith.mulf %15, %19 : vector<8x32xf32>
    %c0_6 = arith.constant 0 : index
    %c0_7 = arith.constant 0 : index
    %21 = vector.load %arg2[%c0_6, %c0_7] : memref<1x32xf32, #tpu.memory_space<vmem>>, vector<1x32xf32>
    %22 = vector.broadcast %21 : vector<1x32xf32> to vector<8x32xf32>
    %23 = arith.mulf %20, %22 : vector<8x32xf32>
    %c0_8 = arith.constant 0 : index
    %c0_9 = arith.constant 0 : index
    %24 = vector.load %arg3[%c0_8, %c0_9] : memref<1x32xf32, #tpu.memory_space<vmem>>, vector<1x32xf32>
    %25 = vector.broadcast %24 : vector<1x32xf32> to vector<8x32xf32>
    %26 = arith.addf %23, %25 : vector<8x32xf32>
    %c0_10 = arith.constant 0 : index
    %c0_11 = arith.constant 0 : index
    %27 = vector.load %arg4[%c0_10, %c0_11] : memref<8x32xf32, #tpu.memory_space<vmem>>, vector<8x32xf32>
    tpu.vector_store %arg4[%c0_10, %c0_11], %26 {strides = array<i32>} : memref<8x32xf32, #tpu.memory_space<vmem>>, vector<8x32xf32>,
    %28 = arith.truncf %26 : vector<8x32xf32> to vector<8x32xbf16>
    %c0_12 = arith.constant 0 : index
    %c0_13 = arith.constant 0 : index
    %29 = vector.load %arg5[%c0_12, %c0_13] : memref<8x32xbf16, #tpu.memory_space<vmem>>, vector<8x32xbf16>
    tpu.vector_store %arg5[%c0_12, %c0_13], %28 {strides = array<i32>} : memref<8x32xbf16, #tpu.memory_space<vmem>>, vector<8x32xbf16>,
    return
  }
  func.func @transform_0(%arg0: i32) -> (i32, i32) {
    %c0_i32 = arith.constant 0 : i32
    %c0_i32_0 = arith.constant 0 : i32
    return %arg0, %c0_i32 : i32, i32
  }
  func.func @transform_1(%arg0: i32) -> (i32, i32) {
    %c0_i32 = arith.constant 0 : i32
    %c0_i32_0 = arith.constant 0 : i32
    %c0_i32_1 = arith.constant 0 : i32
    return %c0_i32, %c0_i32_0 : i32, i32
  }
  func.func @transform_2(%arg0: i32) -> (i32, i32) {
    %c0_i32 = arith.constant 0 : i32
    %c0_i32_0 = arith.constant 0 : i32
    %c0_i32_1 = arith.constant 0 : i32
    return %c0_i32, %c0_i32_0 : i32, i32
  }
  func.func @transform_3(%arg0: i32) -> (i32, i32) {
    %c0_i32 = arith.constant 0 : i32
    %c0_i32_0 = arith.constant 0 : i32
    return %arg0, %c0_i32 : i32, i32
  }
  func.func @transform_4(%arg0: i32) -> (i32, i32) {
    %c0_i32 = arith.constant 0 : i32
    %c0_i32_0 = arith.constant 0 : i32
    return %arg0, %c0_i32 : i32, i32
  }
}

module attributes {stable_mosaic.version = 11 : i64} {
  func.func @_attention_kernel(%arg0: i32, %arg1: i32, %arg2: memref<1x8x96xbf16, #tpu.memory_space<vmem>>, %arg3: memref<1x8x96xbf16, #tpu.memory_space<vmem>>, %arg4: memref<1x1x8xf32, #tpu.memory_space<vmem>>, %arg5: memref<1x8x32xbf16, #tpu.memory_space<vmem>>) attributes {dimension_semantics = [#tpu.dimension_semantics<parallel>, #tpu.dimension_semantics<parallel>], iteration_bounds = array<i64: 2, 1>, scalar_prefetch = 0 : i64, scratch_operands = 0 : i64, tpu.core_type = #tpu.core_type<tc>, window_params = [{transform_indices = @transform_0, window_bounds = array<i64: 1, 8, 96>}, {transform_indices = @transform_1, window_bounds = array<i64: 1, 8, 96>}, {transform_indices = @transform_2, window_bounds = array<i64: 1, 1, 8>}, {transform_indices = @transform_3, window_bounds = array<i64: 1, 8, 32>}]} {
    %c0 = arith.constant 0 : index
    %c0_0 = arith.constant 0 : index
    %c0_1 = arith.constant 0 : index
    %0 = vector.load %arg4[%c0, %c0_0, %c0_1] : memref<1x1x8xf32, #tpu.memory_space<vmem>>, vector<1x1x8xf32>
    %1 = vector.shape_cast %0 : vector<1x1x8xf32> to vector<1x8xf32>
    %c0_2 = arith.constant 0 : index
    %c0_3 = arith.constant 0 : index
    %c0_4 = arith.constant 0 : index
    %2 = vector.load %arg2[%c0_2, %c0_3, %c0_4] : memref<1x8x96xbf16, #tpu.memory_space<vmem>>, vector<1x8x16xbf16>
    %3 = vector.shape_cast %2 : vector<1x8x16xbf16> to vector<8x16xbf16>
    %cst = arith.constant 2.500000e-01 : bf16
    %4 = vector.broadcast %cst : bf16 to vector<8x16xbf16>
    %5 = arith.mulf %3, %4 : vector<8x16xbf16>
    %c0_5 = arith.constant 0 : index
    %c0_6 = arith.constant 0 : index
    %c32 = arith.constant 32 : index
    %6 = vector.load %arg3[%c0_5, %c0_6, %c32] : memref<1x8x96xbf16, #tpu.memory_space<vmem>>, vector<1x8x16xbf16>
    %7 = vector.shape_cast %6 : vector<1x8x16xbf16> to vector<8x16xbf16>
    %c0_7 = arith.constant 0 : index
    %c0_8 = arith.constant 0 : index
    %c64 = arith.constant 64 : index
    %8 = vector.load %arg3[%c0_7, %c0_8, %c64] : memref<1x8x96xbf16, #tpu.memory_space<vmem>>, vector<1x8x16xbf16>
    %9 = vector.shape_cast %8 : vector<1x8x16xbf16> to vector<8x16xbf16>
    %cst_9 = arith.constant dense<0.000000e+00> : vector<8x8xf32>
    %10 = tpu.matmul %5, %7, %cst_9 {dimension_numbers = #tpu.dot_dimension_numbers<[1], [1], [0], [0], [0, 0, 1, 0], [], []>} : vector<8x16xbf16>, vector<8x16xbf16>, vector<8x8xf32> -> vector<8x8xf32>
    %11 = vector.broadcast %1 : vector<1x8xf32> to vector<8x8xf32>
    %12 = arith.addf %10, %11 : vector<8x8xf32>
    %cst_10 = arith.constant dense<0xFF800000> : vector<8xf32>
    %13 = vector.multi_reduction <maximumf>, %12, %cst_10 [1] : vector<8x8xf32> to vector<8xf32>
    %14 = vector.shape_cast %13 : vector<8xf32> to vector<8x1xf32>
    %15 = vector.broadcast %14 : vector<8x1xf32> to vector<8x8xf32>
    %16 = arith.subf %12, %15 : vector<8x8xf32>
    %17 = math.exp %16 : vector<8x8xf32>
    %cst_11 = arith.constant dense<0.000000e+00> : vector<8xf32>
    %18 = vector.multi_reduction <add>, %17, %cst_11 [1] : vector<8x8xf32> to vector<8xf32>
    %19 = vector.shape_cast %18 : vector<8xf32> to vector<8x1xf32>
    %20 = tpu.reciprocal %19 {approx = true} : vector<8x1xf32> -> vector<8x1xf32>
    %21 = vector.broadcast %20 : vector<8x1xf32> to vector<8x8xf32>
    %22 = arith.mulf %17, %21 : vector<8x8xf32>
    %23 = arith.truncf %22 : vector<8x8xf32> to vector<8x8xbf16>
    %cst_12 = arith.constant dense<0.000000e+00> : vector<8x16xf32>
    %24 = tpu.matmul %23, %9, %cst_12 {dimension_numbers = #tpu.dot_dimension_numbers<[1], [0], [0], [1], [0, 0, 1, 1], [], []>} : vector<8x8xbf16>, vector<8x16xbf16>, vector<8x16xf32> -> vector<8x16xf32>
    %c0_13 = arith.constant 0 : index
    %c0_14 = arith.constant 0 : index
    %c16 = arith.constant 16 : index
    %25 = vector.load %arg2[%c0_13, %c0_14, %c16] : memref<1x8x96xbf16, #tpu.memory_space<vmem>>, vector<1x8x16xbf16>
    %26 = vector.shape_cast %25 : vector<1x8x16xbf16> to vector<8x16xbf16>
    %cst_15 = arith.constant 2.500000e-01 : bf16
    %27 = vector.broadcast %cst_15 : bf16 to vector<8x16xbf16>
    %28 = arith.mulf %26, %27 : vector<8x16xbf16>
    %c0_16 = arith.constant 0 : index
    %c0_17 = arith.constant 0 : index
    %c48 = arith.constant 48 : index
    %29 = vector.load %arg3[%c0_16, %c0_17, %c48] : memref<1x8x96xbf16, #tpu.memory_space<vmem>>, vector<1x8x16xbf16>
    %30 = vector.shape_cast %29 : vector<1x8x16xbf16> to vector<8x16xbf16>
    %c0_18 = arith.constant 0 : index
    %c0_19 = arith.constant 0 : index
    %c80 = arith.constant 80 : index
    %31 = vector.load %arg3[%c0_18, %c0_19, %c80] : memref<1x8x96xbf16, #tpu.memory_space<vmem>>, vector<1x8x16xbf16>
    %32 = vector.shape_cast %31 : vector<1x8x16xbf16> to vector<8x16xbf16>
    %cst_20 = arith.constant dense<0.000000e+00> : vector<8x8xf32>
    %33 = tpu.matmul %28, %30, %cst_20 {dimension_numbers = #tpu.dot_dimension_numbers<[1], [1], [0], [0], [0, 0, 1, 0], [], []>} : vector<8x16xbf16>, vector<8x16xbf16>, vector<8x8xf32> -> vector<8x8xf32>
    %34 = vector.broadcast %1 : vector<1x8xf32> to vector<8x8xf32>
    %35 = arith.addf %33, %34 : vector<8x8xf32>
    %cst_21 = arith.constant dense<0xFF800000> : vector<8xf32>
    %36 = vector.multi_reduction <maximumf>, %35, %cst_21 [1] : vector<8x8xf32> to vector<8xf32>
    %37 = vector.shape_cast %36 : vector<8xf32> to vector<8x1xf32>
    %38 = vector.broadcast %37 : vector<8x1xf32> to vector<8x8xf32>
    %39 = arith.subf %35, %38 : vector<8x8xf32>
    %40 = math.exp %39 : vector<8x8xf32>
    %cst_22 = arith.constant dense<0.000000e+00> : vector<8xf32>
    %41 = vector.multi_reduction <add>, %40, %cst_22 [1] : vector<8x8xf32> to vector<8xf32>
    %42 = vector.shape_cast %41 : vector<8xf32> to vector<8x1xf32>
    %43 = tpu.reciprocal %42 {approx = true} : vector<8x1xf32> -> vector<8x1xf32>
    %44 = vector.broadcast %43 : vector<8x1xf32> to vector<8x8xf32>
    %45 = arith.mulf %40, %44 : vector<8x8xf32>
    %46 = arith.truncf %45 : vector<8x8xf32> to vector<8x8xbf16>
    %cst_23 = arith.constant dense<0.000000e+00> : vector<8x16xf32>
    %47 = tpu.matmul %46, %32, %cst_23 {dimension_numbers = #tpu.dot_dimension_numbers<[1], [0], [0], [1], [0, 0, 1, 1], [], []>} : vector<8x8xbf16>, vector<8x16xbf16>, vector<8x16xf32> -> vector<8x16xf32>
    %48 = tpu.concatenate %24, %47 in 1 : vector<8x16xf32>, vector<8x16xf32> -> vector<8x32xf32>
    %49 = arith.truncf %48 : vector<8x32xf32> to vector<8x32xbf16>
    %c0_24 = arith.constant 0 : index
    %c0_25 = arith.constant 0 : index
    %c0_26 = arith.constant 0 : index
    %50 = vector.load %arg5[%c0_24, %c0_25, %c0_26] : memref<1x8x32xbf16, #tpu.memory_space<vmem>>, vector<1x8x32xbf16>
    %51 = vector.shape_cast %50 : vector<1x8x32xbf16> to vector<8x32xbf16>
    %52 = vector.shape_cast %49 : vector<8x32xbf16> to vector<1x8x32xbf16>
    tpu.vector_store %arg5[%c0_24, %c0_25, %c0_26], %52 {strides = array<i32>} : memref<1x8x32xbf16, #tpu.memory_space<vmem>>, vector<1x8x32xbf16>,
    return
  }
  func.func @transform_0(%arg0: i32, %arg1: i32) -> (i32, i32, i32) {
    %c0_i32 = arith.constant 0 : i32
    %c0_i32_0 = arith.constant 0 : i32
    return %arg0, %arg1, %c0_i32 : i32, i32, i32
  }
  func.func @transform_1(%arg0: i32, %arg1: i32) -> (i32, i32, i32) {
    %c0_i32 = arith.constant 0 : i32
    %c0_i32_0 = arith.constant 0 : i32
    %c0_i32_1 = arith.constant 0 : i32
    return %arg0, %c0_i32, %c0_i32_0 : i32, i32, i32
  }
  func.func @transform_2(%arg0: i32, %arg1: i32) -> (i32, i32, i32) {
    %c0_i32 = arith.constant 0 : i32
    %c0_i32_0 = arith.constant 0 : i32
    %c0_i32_1 = arith.constant 0 : i32
    return %arg0, %c0_i32, %c0_i32_0 : i32, i32, i32
  }
  func.func @transform_3(%arg0: i32, %arg1: i32) -> (i32, i32, i32) {
    %c0_i32 = arith.constant 0 : i32
    %c0_i32_0 = arith.constant 0 : i32
    return %arg0, %arg1, %c0_i32 : i32, i32, i32
  }
}

module attributes {stable_mosaic.version = 11 : i64} {
  func.func @_linear_kernel(%arg0: i32, %arg1: i32, %arg2: memref<8x32xbf16, #tpu.memory_space<vmem>>, %arg3: memref<32x64xbf16, #tpu.memory_space<vmem>>, %arg4: memref<1x64xf32, #tpu.memory_space<vmem>>, %arg5: memref<8x64xbf16, #tpu.memory_space<vmem>>, %arg6: memref<8x64xf32, #tpu.memory_space<vmem>>) attributes {dimension_semantics = [#tpu.dimension_semantics<parallel>, #tpu.dimension_semantics<arbitrary>], iteration_bounds = array<i64: 2, 1>, scalar_prefetch = 0 : i64, scratch_operands = 1 : i64, tpu.core_type = #tpu.core_type<tc>, window_params = [{transform_indices = @transform_0, window_bounds = array<i64: 8, 32>}, {transform_indices = @transform_1, window_bounds = array<i64: 32, 64>}, {pipeline_mode = #tpu.pipeline_mode<synchronous>, transform_indices = @transform_2, window_bounds = array<i64: 1, 64>}, {transform_indices = @transform_3, window_bounds = array<i64: 8, 64>}]} {
    %c0_i32 = arith.constant 0 : i32
    %0 = arith.cmpi eq, %arg1, %c0_i32 : i32
    %1 = arith.extui %0 : i1 to i32
    %c0_i32_0 = arith.constant 0 : i32
    %2 = arith.cmpi ne, %1, %c0_i32_0 : i32
    scf.if %2 {
      %cst_10 = arith.constant 0.000000e+00 : f32
      %12 = vector.broadcast %cst_10 : f32 to vector<8x64xf32>
      %c0_11 = arith.constant 0 : index
      %c0_12 = arith.constant 0 : index
      %13 = vector.load %arg6[%c0_11, %c0_12] : memref<8x64xf32, #tpu.memory_space<vmem>>, vector<8x64xf32>
      tpu.vector_store %arg6[%c0_11, %c0_12], %12 {strides = array<i32>} : memref<8x64xf32, #tpu.memory_space<vmem>>, vector<8x64xf32>,
    } else {
    }
    %c0 = arith.constant 0 : index
    %c0_1 = arith.constant 0 : index
    %3 = vector.load %arg6[%c0, %c0_1] : memref<8x64xf32, #tpu.memory_space<vmem>>, vector<8x64xf32>
    %c0_2 = arith.constant 0 : index
    %c0_3 = arith.constant 0 : index
    %4 = vector.load %arg2[%c0_2, %c0_3] : memref<8x32xbf16, #tpu.memory_space<vmem>>, vector<8x32xbf16>
    %c0_4 = arith.constant 0 : index
    %c0_5 = arith.constant 0 : index
    %5 = vector.load %arg3[%c0_4, %c0_5] : memref<32x64xbf16, #tpu.memory_space<vmem>>, vector<32x64xbf16>
    %cst = arith.constant dense<0.000000e+00> : vector<8x64xf32>
    %6 = tpu.matmul %4, %5, %cst {dimension_numbers = #tpu.dot_dimension_numbers<[1], [0], [0], [1], [0, 0, 1, 1], [], []>} : vector<8x32xbf16>, vector<32x64xbf16>, vector<8x64xf32> -> vector<8x64xf32>
    %7 = arith.addf %3, %6 : vector<8x64xf32>
    %c0_6 = arith.constant 0 : index
    %c0_7 = arith.constant 0 : index
    %8 = vector.load %arg6[%c0_6, %c0_7] : memref<8x64xf32, #tpu.memory_space<vmem>>, vector<8x64xf32>
    tpu.vector_store %arg6[%c0_6, %c0_7], %7 {strides = array<i32>} : memref<8x64xf32, #tpu.memory_space<vmem>>, vector<8x64xf32>,
    %c0_i32_8 = arith.constant 0 : i32
    %9 = arith.cmpi eq, %arg1, %c0_i32_8 : i32
    %10 = arith.extui %9 : i1 to i32
    %c0_i32_9 = arith.constant 0 : i32
    %11 = arith.cmpi ne, %10, %c0_i32_9 : i32
    scf.if %11 {
      %c0_10 = arith.constant 0 : index
      %c0_11 = arith.constant 0 : index
      %12 = vector.load %arg6[%c0_10, %c0_11] : memref<8x64xf32, #tpu.memory_space<vmem>>, vector<8x64xf32>
      %c0_12 = arith.constant 0 : index
      %c0_13 = arith.constant 0 : index
      %13 = vector.load %arg4[%c0_12, %c0_13] : memref<1x64xf32, #tpu.memory_space<vmem>>, vector<1x64xf32>
      %14 = vector.broadcast %13 : vector<1x64xf32> to vector<8x64xf32>
      %15 = arith.addf %12, %14 : vector<8x64xf32>
      %16 = arith.mulf %15, %15 : vector<8x64xf32>
      %17 = arith.mulf %15, %16 : vector<8x64xf32>
      %cst_14 = arith.constant 4.471500e-02 : f32
      %18 = vector.broadcast %cst_14 : f32 to vector<8x64xf32>
      %19 = arith.mulf %18, %17 : vector<8x64xf32>
      %20 = arith.addf %15, %19 : vector<8x64xf32>
      %cst_15 = arith.constant 0.797884583 : f32
      %21 = vector.broadcast %cst_15 : f32 to vector<8x64xf32>
      %22 = arith.mulf %21, %20 : vector<8x64xf32>
      %23 = math.tanh %22 : vector<8x64xf32>
      %cst_16 = arith.constant 1.000000e+00 : f32
      %24 = vector.broadcast %cst_16 : f32 to vector<8x64xf32>
      %25 = arith.addf %24, %23 : vector<8x64xf32>
      %cst_17 = arith.constant 5.000000e-01 : f32
      %26 = vector.broadcast %cst_17 : f32 to vector<8x64xf32>
      %27 = arith.mulf %26, %25 : vector<8x64xf32>
      %28 = arith.mulf %15, %27 : vector<8x64xf32>
      %29 = arith.truncf %28 : vector<8x64xf32> to vector<8x64xbf16>
      %c0_18 = arith.constant 0 : index
      %c0_19 = arith.constant 0 : index
      %30 = vector.load %arg5[%c0_18, %c0_19] : memref<8x64xbf16, #tpu.memory_space<vmem>>, vector<8x64xbf16>
      tpu.vector_store %arg5[%c0_18, %c0_19], %29 {strides = array<i32>} : memref<8x64xbf16, #tpu.memory_space<vmem>>, vector<8x64xbf16>,
    } else {
    }
    return
  }
  func.func @transform_0(%arg0: i32, %arg1: i32) -> (i32, i32) {
    %c0_i32 = arith.constant 0 : i32
    return %arg0, %arg1 : i32, i32
  }
  func.func @transform_1(%arg0: i32, %arg1: i32) -> (i32, i32) {
    %c0_i32 = arith.constant 0 : i32
    %c0_i32_0 = arith.constant 0 : i32
    return %arg1, %c0_i32 : i32, i32
  }
  func.func @transform_2(%arg0: i32, %arg1: i32) -> (i32, i32) {
    %c0_i32 = arith.constant 0 : i32
    %c0_i32_0 = arith.constant 0 : i32
    %c0_i32_1 = arith.constant 0 : i32
    return %c0_i32, %c0_i32_0 : i32, i32
  }
  func.func @transform_3(%arg0: i32, %arg1: i32) -> (i32, i32) {
    %c0_i32 = arith.constant 0 : i32
    %c0_i32_0 = arith.constant 0 : i32
    return %arg0, %c0_i32 : i32, i32
  }
}

module attributes {stable_mosaic.version = 11 : i64} {
  func.func @_linear_ln_kernel(%arg0: i32, %arg1: i32, %arg2: memref<8x64xbf16, #tpu.memory_space<vmem>>, %arg3: memref<64x32xbf16, #tpu.memory_space<vmem>>, %arg4: memref<1x32xf32, #tpu.memory_space<vmem>>, %arg5: memref<8x32xf32, #tpu.memory_space<vmem>>, %arg6: memref<1x32xf32, #tpu.memory_space<vmem>>, %arg7: memref<1x32xf32, #tpu.memory_space<vmem>>, %arg8: memref<8x32xf32, #tpu.memory_space<vmem>>, %arg9: memref<8x32xbf16, #tpu.memory_space<vmem>>, %arg10: memref<8x32xf32, #tpu.memory_space<vmem>>) attributes {dimension_semantics = [#tpu.dimension_semantics<parallel>, #tpu.dimension_semantics<arbitrary>], iteration_bounds = array<i64: 2, 1>, scalar_prefetch = 0 : i64, scratch_operands = 1 : i64, tpu.core_type = #tpu.core_type<tc>, window_params = [{transform_indices = @transform_0, window_bounds = array<i64: 8, 64>}, {transform_indices = @transform_1, window_bounds = array<i64: 64, 32>}, {pipeline_mode = #tpu.pipeline_mode<synchronous>, transform_indices = @transform_2, window_bounds = array<i64: 1, 32>}, {transform_indices = @transform_3, window_bounds = array<i64: 8, 32>}, {pipeline_mode = #tpu.pipeline_mode<synchronous>, transform_indices = @transform_4, window_bounds = array<i64: 1, 32>}, {pipeline_mode = #tpu.pipeline_mode<synchronous>, transform_indices = @transform_5, window_bounds = array<i64: 1, 32>}, {transform_indices = @transform_6, window_bounds = array<i64: 8, 32>}, {transform_indices = @transform_7, window_bounds = array<i64: 8, 32>}]} {
    %c0_i32 = arith.constant 0 : i32
    %0 = arith.cmpi eq, %arg1, %c0_i32 : i32
    %1 = arith.extui %0 : i1 to i32
    %c0_i32_0 = arith.constant 0 : i32
    %2 = arith.cmpi ne, %1, %c0_i32_0 : i32
    scf.if %2 {
      %cst_10 = arith.constant 0.000000e+00 : f32
      %12 = vector.broadcast %cst_10 : f32 to vector<8x32xf32>
      %c0_11 = arith.constant 0 : index
      %c0_12 = arith.constant 0 : index
      %13 = vector.load %arg10[%c0_11, %c0_12] : memref<8x32xf32, #tpu.memory_space<vmem>>, vector<8x32xf32>
      tpu.vector_store %arg10[%c0_11, %c0_12], %12 {strides = array<i32>} : memref<8x32xf32, #tpu.memory_space<vmem>>, vector<8x32xf32>,
    } else {
    }
    %c0 = arith.constant 0 : index
    %c0_1 = arith.constant 0 : index
    %3 = vector.load %arg10[%c0, %c0_1] : memref<8x32xf32, #tpu.memory_space<vmem>>, vector<8x32xf32>
    %c0_2 = arith.constant 0 : index
    %c0_3 = arith.constant 0 : index
    %4 = vector.load %arg2[%c0_2, %c0_3] : memref<8x64xbf16, #tpu.memory_space<vmem>>, vector<8x64xbf16>
    %c0_4 = arith.constant 0 : index
    %c0_5 = arith.constant 0 : index
    %5 = vector.load %arg3[%c0_4, %c0_5] : memref<64x32xbf16, #tpu.memory_space<vmem>>, vector<64x32xbf16>
    %cst = arith.constant dense<0.000000e+00> : vector<8x32xf32>
    %6 = tpu.matmul %4, %5, %cst {dimension_numbers = #tpu.dot_dimension_numbers<[1], [0], [0], [1], [0, 0, 1, 1], [], []>} : vector<8x64xbf16>, vector<64x32xbf16>, vector<8x32xf32> -> vector<8x32xf32>
    %7 = arith.addf %3, %6 : vector<8x32xf32>
    %c0_6 = arith.constant 0 : index
    %c0_7 = arith.constant 0 : index
    %8 = vector.load %arg10[%c0_6, %c0_7] : memref<8x32xf32, #tpu.memory_space<vmem>>, vector<8x32xf32>
    tpu.vector_store %arg10[%c0_6, %c0_7], %7 {strides = array<i32>} : memref<8x32xf32, #tpu.memory_space<vmem>>, vector<8x32xf32>,
    %c0_i32_8 = arith.constant 0 : i32
    %9 = arith.cmpi eq, %arg1, %c0_i32_8 : i32
    %10 = arith.extui %9 : i1 to i32
    %c0_i32_9 = arith.constant 0 : i32
    %11 = arith.cmpi ne, %10, %c0_i32_9 : i32
    scf.if %11 {
      %c0_10 = arith.constant 0 : index
      %c0_11 = arith.constant 0 : index
      %12 = vector.load %arg10[%c0_10, %c0_11] : memref<8x32xf32, #tpu.memory_space<vmem>>, vector<8x32xf32>
      %c0_12 = arith.constant 0 : index
      %c0_13 = arith.constant 0 : index
      %13 = vector.load %arg4[%c0_12, %c0_13] : memref<1x32xf32, #tpu.memory_space<vmem>>, vector<1x32xf32>
      %14 = vector.broadcast %13 : vector<1x32xf32> to vector<8x32xf32>
      %15 = arith.addf %12, %14 : vector<8x32xf32>
      %c0_14 = arith.constant 0 : index
      %c0_15 = arith.constant 0 : index
      %16 = vector.load %arg5[%c0_14, %c0_15] : memref<8x32xf32, #tpu.memory_space<vmem>>, vector<8x32xf32>
      %17 = arith.addf %15, %16 : vector<8x32xf32>
      %cst_16 = arith.constant dense<0.000000e+00> : vector<8xf32>
      %18 = vector.multi_reduction <add>, %17, %cst_16 [1] : vector<8x32xf32> to vector<8xf32>
      %19 = vector.shape_cast %18 : vector<8xf32> to vector<8x1xf32>
      %cst_17 = arith.constant 3.200000e+01 : f32
      %20 = vector.broadcast %cst_17 : f32 to vector<8x1xf32>
      %21 = arith.divf %19, %20 : vector<8x1xf32>
      %22 = arith.mulf %17, %17 : vector<8x32xf32>
      %cst_18 = arith.constant dense<0.000000e+00> : vector<8xf32>
      %23 = vector.multi_reduction <add>, %22, %cst_18 [1] : vector<8x32xf32> to vector<8xf32>
      %24 = vector.shape_cast %23 : vector<8xf32> to vector<8x1xf32>
      %cst_19 = arith.constant 3.200000e+01 : f32
      %25 = vector.broadcast %cst_19 : f32 to vector<8x1xf32>
      %26 = arith.divf %24, %25 : vector<8x1xf32>
      %27 = arith.mulf %21, %21 : vector<8x1xf32>
      %28 = arith.subf %26, %27 : vector<8x1xf32>
      %cst_20 = arith.constant 0.000000e+00 : f32
      %29 = vector.broadcast %cst_20 : f32 to vector<8x1xf32>
      %30 = arith.maximumf %28, %29 : vector<8x1xf32>
      %31 = vector.broadcast %21 : vector<8x1xf32> to vector<8x32xf32>
      %32 = arith.subf %17, %31 : vector<8x32xf32>
      %cst_21 = arith.constant 9.99999996E-13 : f32
      %33 = vector.broadcast %cst_21 : f32 to vector<8x1xf32>
      %34 = arith.addf %30, %33 : vector<8x1xf32>
      %35 = math.rsqrt %34 : vector<8x1xf32>
      %36 = vector.broadcast %35 : vector<8x1xf32> to vector<8x32xf32>
      %37 = arith.mulf %32, %36 : vector<8x32xf32>
      %c0_22 = arith.constant 0 : index
      %c0_23 = arith.constant 0 : index
      %38 = vector.load %arg6[%c0_22, %c0_23] : memref<1x32xf32, #tpu.memory_space<vmem>>, vector<1x32xf32>
      %39 = vector.broadcast %38 : vector<1x32xf32> to vector<8x32xf32>
      %40 = arith.mulf %37, %39 : vector<8x32xf32>
      %c0_24 = arith.constant 0 : index
      %c0_25 = arith.constant 0 : index
      %41 = vector.load %arg7[%c0_24, %c0_25] : memref<1x32xf32, #tpu.memory_space<vmem>>, vector<1x32xf32>
      %42 = vector.broadcast %41 : vector<1x32xf32> to vector<8x32xf32>
      %43 = arith.addf %40, %42 : vector<8x32xf32>
      %c0_26 = arith.constant 0 : index
      %c0_27 = arith.constant 0 : index
      %44 = vector.load %arg8[%c0_26, %c0_27] : memref<8x32xf32, #tpu.memory_space<vmem>>, vector<8x32xf32>
      tpu.vector_store %arg8[%c0_26, %c0_27], %43 {strides = array<i32>} : memref<8x32xf32, #tpu.memory_space<vmem>>, vector<8x32xf32>,
      %45 = arith.truncf %43 : vector<8x32xf32> to vector<8x32xbf16>
      %c0_28 = arith.constant 0 : index
      %c0_29 = arith.constant 0 : index
      %46 = vector.load %arg9[%c0_28, %c0_29] : memref<8x32xbf16, #tpu.memory_space<vmem>>, vector<8x32xbf16>
      tpu.vector_store %arg9[%c0_28, %c0_29], %45 {strides = array<i32>} : memref<8x32xbf16, #tpu.memory_space<vmem>>, vector<8x32xbf16>,
    } else {
    }
    return
  }
  func.func @transform_0(%arg0: i32, %arg1: i32) -> (i32, i32) {
    %c0_i32 = arith.constant 0 : i32
    return %arg0, %arg1 : i32, i32
  }
  func.func @transform_1(%arg0: i32, %arg1: i32) -> (i32, i32) {
    %c0_i32 = arith.constant 0 : i32
    %c0_i32_0 = arith.constant 0 : i32
    return %arg1, %c0_i32 : i32, i32
  }
  func.func @transform_2(%arg0: i32, %arg1: i32) -> (i32, i32) {
    %c0_i32 = arith.constant 0 : i32
    %c0_i32_0 = arith.constant 0 : i32
    %c0_i32_1 = arith.constant 0 : i32
    return %c0_i32, %c0_i32_0 : i32, i32
  }
  func.func @transform_3(%arg0: i32, %arg1: i32) -> (i32, i32) {
    %c0_i32 = arith.constant 0 : i32
    %c0_i32_0 = arith.constant 0 : i32
    return %arg0, %c0_i32 : i32, i32
  }
  func.func @transform_4(%arg0: i32, %arg1: i32) -> (i32, i32) {
    %c0_i32 = arith.constant 0 : i32
    %c0_i32_0 = arith.constant 0 : i32
    %c0_i32_1 = arith.constant 0 : i32
    return %c0_i32, %c0_i32_0 : i32, i32
  }
  func.func @transform_5(%arg0: i32, %arg1: i32) -> (i32, i32) {
    %c0_i32 = arith.constant 0 : i32
    %c0_i32_0 = arith.constant 0 : i32
    %c0_i32_1 = arith.constant 0 : i32
    return %c0_i32, %c0_i32_0 : i32, i32
  }
  func.func @transform_6(%arg0: i32, %arg1: i32) -> (i32, i32) {
    %c0_i32 = arith.constant 0 : i32
    %c0_i32_0 = arith.constant 0 : i32
    return %arg0, %c0_i32 : i32, i32
  }
  func.func @transform_7(%arg0: i32, %arg1: i32) -> (i32, i32) {
    %c0_i32 = arith.constant 0 : i32
    %c0_i32_0 = arith.constant 0 : i32
    return %arg0, %c0_i32 : i32, i32
  }
}

module attributes {stable_mosaic.version = 11 : i64} {
  func.func @_linear_kernel(%arg0: i32, %arg1: i32, %arg2: memref<2x32xbf16, #tpu.memory_space<vmem>>, %arg3: memref<32x128xbf16, #tpu.memory_space<vmem>>, %arg4: memref<1x128xf32, #tpu.memory_space<vmem>>, %arg5: memref<2x128xf32, #tpu.memory_space<vmem>>, %arg6: memref<2x128xf32, #tpu.memory_space<vmem>>) attributes {dimension_semantics = [#tpu.dimension_semantics<parallel>, #tpu.dimension_semantics<arbitrary>], iteration_bounds = array<i64: 1, 1>, scalar_prefetch = 0 : i64, scratch_operands = 1 : i64, tpu.core_type = #tpu.core_type<tc>, window_params = [{transform_indices = @transform_0, window_bounds = array<i64: 2, 32>}, {transform_indices = @transform_1, window_bounds = array<i64: 32, 128>}, {pipeline_mode = #tpu.pipeline_mode<synchronous>, transform_indices = @transform_2, window_bounds = array<i64: 1, 128>}, {transform_indices = @transform_3, window_bounds = array<i64: 2, 128>}]} {
    %c0_i32 = arith.constant 0 : i32
    %0 = arith.cmpi eq, %arg1, %c0_i32 : i32
    %1 = arith.extui %0 : i1 to i32
    %c0_i32_0 = arith.constant 0 : i32
    %2 = arith.cmpi ne, %1, %c0_i32_0 : i32
    scf.if %2 {
      %cst_10 = arith.constant 0.000000e+00 : f32
      %12 = vector.broadcast %cst_10 : f32 to vector<2x128xf32>
      %c0_11 = arith.constant 0 : index
      %c0_12 = arith.constant 0 : index
      %13 = vector.load %arg6[%c0_11, %c0_12] : memref<2x128xf32, #tpu.memory_space<vmem>>, vector<2x128xf32>
      tpu.vector_store %arg6[%c0_11, %c0_12], %12 {strides = array<i32>} : memref<2x128xf32, #tpu.memory_space<vmem>>, vector<2x128xf32>,
    } else {
    }
    %c0 = arith.constant 0 : index
    %c0_1 = arith.constant 0 : index
    %3 = vector.load %arg6[%c0, %c0_1] : memref<2x128xf32, #tpu.memory_space<vmem>>, vector<2x128xf32>
    %c0_2 = arith.constant 0 : index
    %c0_3 = arith.constant 0 : index
    %4 = vector.load %arg2[%c0_2, %c0_3] : memref<2x32xbf16, #tpu.memory_space<vmem>>, vector<2x32xbf16>
    %c0_4 = arith.constant 0 : index
    %c0_5 = arith.constant 0 : index
    %5 = vector.load %arg3[%c0_4, %c0_5] : memref<32x128xbf16, #tpu.memory_space<vmem>>, vector<32x128xbf16>
    %cst = arith.constant dense<0.000000e+00> : vector<2x128xf32>
    %6 = tpu.matmul %4, %5, %cst {dimension_numbers = #tpu.dot_dimension_numbers<[1], [0], [0], [1], [0, 0, 1, 1], [], []>} : vector<2x32xbf16>, vector<32x128xbf16>, vector<2x128xf32> -> vector<2x128xf32>
    %7 = arith.addf %3, %6 : vector<2x128xf32>
    %c0_6 = arith.constant 0 : index
    %c0_7 = arith.constant 0 : index
    %8 = vector.load %arg6[%c0_6, %c0_7] : memref<2x128xf32, #tpu.memory_space<vmem>>, vector<2x128xf32>
    tpu.vector_store %arg6[%c0_6, %c0_7], %7 {strides = array<i32>} : memref<2x128xf32, #tpu.memory_space<vmem>>, vector<2x128xf32>,
    %c0_i32_8 = arith.constant 0 : i32
    %9 = arith.cmpi eq, %arg1, %c0_i32_8 : i32
    %10 = arith.extui %9 : i1 to i32
    %c0_i32_9 = arith.constant 0 : i32
    %11 = arith.cmpi ne, %10, %c0_i32_9 : i32
    scf.if %11 {
      %c0_10 = arith.constant 0 : index
      %c0_11 = arith.constant 0 : index
      %12 = vector.load %arg6[%c0_10, %c0_11] : memref<2x128xf32, #tpu.memory_space<vmem>>, vector<2x128xf32>
      %c0_12 = arith.constant 0 : index
      %c0_13 = arith.constant 0 : index
      %13 = vector.load %arg4[%c0_12, %c0_13] : memref<1x128xf32, #tpu.memory_space<vmem>>, vector<1x128xf32>
      %14 = vector.broadcast %13 : vector<1x128xf32> to vector<2x128xf32>
      %15 = arith.addf %12, %14 : vector<2x128xf32>
      %c0_14 = arith.constant 0 : index
      %c0_15 = arith.constant 0 : index
      %16 = vector.load %arg5[%c0_14, %c0_15] : memref<2x128xf32, #tpu.memory_space<vmem>>, vector<2x128xf32>
      tpu.vector_store %arg5[%c0_14, %c0_15], %15 {strides = array<i32>} : memref<2x128xf32, #tpu.memory_space<vmem>>, vector<2x128xf32>,
    } else {
    }
    return
  }
  func.func @transform_0(%arg0: i32, %arg1: i32) -> (i32, i32) {
    %c0_i32 = arith.constant 0 : i32
    return %arg0, %arg1 : i32, i32
  }
  func.func @transform_1(%arg0: i32, %arg1: i32) -> (i32, i32) {
    %c0_i32 = arith.constant 0 : i32
    %c0_i32_0 = arith.constant 0 : i32
    return %arg1, %c0_i32 : i32, i32
  }
  func.func @transform_2(%arg0: i32, %arg1: i32) -> (i32, i32) {
    %c0_i32 = arith.constant 0 : i32
    %c0_i32_0 = arith.constant 0 : i32
    %c0_i32_1 = arith.constant 0 : i32
    return %c0_i32, %c0_i32_0 : i32, i32
  }
  func.func @transform_3(%arg0: i32, %arg1: i32) -> (i32, i32) {
    %c0_i32 = arith.constant 0 : i32
    %c0_i32_0 = arith.constant 0 : i32
    return %arg0, %c0_i32 : i32, i32
  }
}

</mosaic_0001>

<llo_original>
// kernel: egtea_forward.15
$region0: #{egtea_forward.15}
  #allocation0 [shape = 'u32[]', space=smem, size = 0x4, offset = 0x4, fixed_abs, tag = 'smem constant byte address 0x4 - core index']
  #allocation1 [shape = 'u32[72,128]{1,0:T(1,128)}', space=vmem, size = 0x9000, scoped, tag = 'internal scratch']
  #allocation2 [shape = 'f32[8,32]{1,0:T(8,128)}', space=vmem, size = 0x1000, scoped, tag = 'scratch operand']
  %s0 = inlined_call_operand.vmem [shape: bf16[16,32], index: 0, kind: input, shape index: {}]
  %s1 = inlined_call_operand.vmem [shape: bf16[32,32], index: 1, kind: input, shape index: {}]
  %s2 = inlined_call_operand.vmem [shape: f32[1,32], index: 2, kind: input, shape index: {}]
  %s3 = inlined_call_operand.vmem [shape: f32[16,32], index: 3, kind: input, shape index: {}]
  %s4 = inlined_call_operand.vmem [shape: f32[1,32], index: 4, kind: input, shape index: {}]
  %s5 = inlined_call_operand.vmem [shape: f32[1,32], index: 5, kind: input, shape index: {}]
  %s6 = inlined_call_operand.vmem [shape: f32[16,32], index: 6, kind: output, shape index: {0}]
  %s7 = inlined_call_operand.vmem [shape: bf16[16,32], index: 7, kind: output, shape index: {1}]
  %8 = xla_tuple %s6, %s7
  %s9 = sld [smem:[#allocation0]]
  $region73: #{egtea_forward.15} parent=0
    _
  %s11 = ssub.s32 1, %s9
  %s12 = scalar_select 0, %s11, %s9
  loop: start=0, step=1, limit=4
  $region2: #{egtea_forward.15} parent=0 // loop_pre_header
    _
  $region3: #{egtea_forward.15} parent=0 // loop_header
    %s14 = sphi 0, %s18
    %p15 = scmp.ge.s32.totalorder %s14, 4
    %s21 = sphi 0, %s33
    %s22 = sphi 0, %s29
    %s23 = sphi 0, %s21
    %s24 = sphi 0, %s22
    %s25 = sphi 0, %s23
    %s26 = sphi 0, %s24
    %s38 = sphi 0, %s40
    %s41 = sphi 0, %s38
    %s42 = sphi 0, %s41
    %s58 = sphi 0, %s42
    %s64 = sphi 0, %s66
    %s67 = sphi 0, %s64
    %s68 = sphi 0, %s67
    %s84 = sphi 0, %s68
    %s88 = sphi 0, %s88
    %s90 = sphi 0, %s88
    %s91 = sphi 0, %s90
    %s105 = sphi 0, %s91
    %s111 = sphi 0, %s113
    %s114 = sphi 0, %s111
    %s115 = sphi 0, %s114
    %s131 = sphi 0, %s115
    %s135 = sphi 0, %s135
    %s137 = sphi 0, %s135
    %s138 = sphi 0, %s137
    %s152 = sphi 0, %s138
    %s156 = sphi 0, %s156
    %s158 = sphi 0, %s156
    %s159 = sphi 0, %s158
    %s173 = sphi 0, %s159
    %s179 = sphi 0, %s181
    %s182 = sphi 0, %s179
    %s183 = sphi 0, %s182
    %s199 = sphi 0, %s183
    %s205 = sphi 0, %s207
    %s208 = sphi 0, %s205
    %s209 = sphi 0, %s208
    %s225 = sphi 0, %s209
  $region4: #{egtea_forward.15} parent=0 // loop_header_branch
    %17 = sbr.rel (%p15) target = $region8
  $region5: #{egtea_forward.15} parent=0 // loop_body
    %s19 = ssub.s32 %s14, 1
    %s20 = ssub.s32 %s14, 2
    %s27 = sadd.s32 1, %s22
    %p28 = scmp.ge.s32.totalorder %s27, 1
    %s29 = scalar_select %p28, 0, %s27
    %s30 = sadd.s32 1, %s21
    %s31 = scalar_select %p28, %s30, %s21
    %p32 = scmp.ge.s32.totalorder %s31, 2
    %s33 = scalar_select %p32, 0, %s31
    %s34 = ssub.s32 %s21, %s33
    %s35 = ssub.s32 %s22, %s29
    %s36 = sor.u32 %s34, %s35
    %p37 = scmp.eq.s32.totalorder %s36, 0
    %s39 = sadd.s32 %s38, 1
    %s40 = scalar_select %p37, %s38, %s39
    %p43 = pneg %p37
    %p44 = scmp.eq.s32.totalorder %s14, 1
    %p45 = por %p43, %p44
    %p46 = scmp.ne.s32.totalorder %s38, %s41
    %p47 = scmp.eq.s32.totalorder %s14, 0
    %p48 = por %p46, %p47
    %p49 = scmp.ne.s32.totalorder %s38, %s41
    %p50 = scmp.eq.s32.totalorder %s19, 1
    %p51 = por %p49, %p50
    %p52 = scmp.ne.s32.totalorder %s41, %s42
    %p53 = scmp.eq.s32.totalorder %s19, 0
    %p54 = por %p52, %p53
    %p55 = scmp.ne.s32.totalorder %s41, %s42
    %p56 = scmp.eq.s32.totalorder %s20, 1
    %p57 = por %p55, %p56
    %p59 = scmp.ne.s32.totalorder %s42, %s58
    %p60 = scmp.eq.s32.totalorder %s20, 0
    %p61 = por %p59, %p60
    %s62 = ssub.s32 %s22, %s29
    %p63 = scmp.eq.s32.totalorder %s62, 0
    %s65 = sadd.s32 %s64, 1
    %s66 = scalar_select %p63, %s64, %s65
    %p69 = pneg %p63
    %p70 = scmp.eq.s32.totalorder %s14, 1
    %p71 = por %p69, %p70
    %p72 = scmp.ne.s32.totalorder %s64, %s67
    %p73 = scmp.eq.s32.totalorder %s14, 0
    %p74 = por %p72, %p73
    %p75 = scmp.ne.s32.totalorder %s64, %s67
    %p76 = scmp.eq.s32.totalorder %s19, 1
    %p77 = por %p75, %p76
    %p78 = scmp.ne.s32.totalorder %s67, %s68
    %p79 = scmp.eq.s32.totalorder %s19, 0
    %p80 = por %p78, %p79
    %p81 = scmp.ne.s32.totalorder %s67, %s68
    %p82 = scmp.eq.s32.totalorder %s20, 1
    %p83 = por %p81, %p82
    %p85 = scmp.ne.s32.totalorder %s68, %s84
    %p86 = scmp.eq.s32.totalorder %s20, 0
    %p87 = por %p85, %p86
    %s89 = sadd.s32 %s88, 1
    %p92 = scmp.eq.s32.totalorder %s14, 1
    %p93 = scmp.ne.s32.totalorder %s88, %s90
    %p94 = scmp.eq.s32.totalorder %s14, 0
    %p95 = por %p93, %p94
    %p96 = scmp.ne.s32.totalorder %s88, %s90
    %p97 = scmp.eq.s32.totalorder %s19, 1
    %p98 = por %p96, %p97
    %p99 = scmp.ne.s32.totalorder %s90, %s91
    %p100 = scmp.eq.s32.totalorder %s19, 0
    %p101 = por %p99, %p100
    %p102 = scmp.ne.s32.totalorder %s90, %s91
    %p103 = scmp.eq.s32.totalorder %s20, 1
    %p104 = por %p102, %p103
    %p106 = scmp.ne.s32.totalorder %s91, %s105
    %p107 = scmp.eq.s32.totalorder %s20, 0
    %p108 = por %p106, %p107
    %s109 = ssub.s32 %s21, %s33
    %p110 = scmp.eq.s32.totalorder %s109, 0
    %s112 = sadd.s32 %s111, 1
    %s113 = scalar_select %p110, %s111, %s112
    %p116 = pneg %p110
    %p117 = scmp.eq.s32.totalorder %s14, 1
    %p118 = por %p116, %p117
    %p119 = scmp.ne.s32.totalorder %s111, %s114
    %p120 = scmp.eq.s32.totalorder %s14, 0
    %p121 = por %p119, %p120
    %p122 = scmp.ne.s32.totalorder %s111, %s114
    %p123 = scmp.eq.s32.totalorder %s19, 1
    %p124 = por %p122, %p123
    %p125 = scmp.ne.s32.totalorder %s114, %s115
    %p126 = scmp.eq.s32.totalorder %s19, 0
    %p127 = por %p125, %p126
    %p128 = scmp.ne.s32.totalorder %s114, %s115
    %p129 = scmp.eq.s32.totalorder %s20, 1
    %p130 = por %p128, %p129
    %p132 = scmp.ne.s32.totalorder %s115, %s131
    %p133 = scmp.eq.s32.totalorder %s20, 0
    %p134 = por %p132, %p133
    %s136 = sadd.s32 %s135, 1
    %p139 = scmp.eq.s32.totalorder %s14, 1
    %p140 = scmp.ne.s32.totalorder %s135, %s137
    %p141 = scmp.eq.s32.totalorder %s14, 0
    %p142 = por %p140, %p141
    %p143 = scmp.ne.s32.totalorder %s135, %s137
    %p144 = scmp.eq.s32.totalorder %s19, 1
    %p145 = por %p143, %p144
    %p146 = scmp.ne.s32.totalorder %s137, %s138
    %p147 = scmp.eq.s32.totalorder %s19, 0
    %p148 = por %p146, %p147
    %p149 = scmp.ne.s32.totalorder %s137, %s138
    %p150 = scmp.eq.s32.totalorder %s20, 1
    %p151 = por %p149, %p150
    %p153 = scmp.ne.s32.totalorder %s138, %s152
    %p154 = scmp.eq.s32.totalorder %s20, 0
    %p155 = por %p153, %p154
    %s157 = sadd.s32 %s156, 1
    %p160 = scmp.eq.s32.totalorder %s14, 1
    %p161 = scmp.ne.s32.totalorder %s156, %s158
    %p162 = scmp.eq.s32.totalorder %s14, 0
    %p163 = por %p161, %p162
    %p164 = scmp.ne.s32.totalorder %s156, %s158
    %p165 = scmp.eq.s32.totalorder %s19, 1
    %p166 = por %p164, %p165
    %p167 = scmp.ne.s32.totalorder %s158, %s159
    %p168 = scmp.eq.s32.totalorder %s19, 0
    %p169 = por %p167, %p168
    %p170 = scmp.ne.s32.totalorder %s158, %s159
    %p171 = scmp.eq.s32.totalorder %s20, 1
    %p172 = por %p170, %p171
    %p174 = scmp.ne.s32.totalorder %s159, %s173
    %p175 = scmp.eq.s32.totalorder %s20, 0
    %p176 = por %p174, %p175
    %s177 = ssub.s32 %s21, %s33
    %p178 = scmp.eq.s32.totalorder %s177, 0
    %s180 = sadd.s32 %s179, 1
    %s181 = scalar_select %p178, %s179, %s180
    %p184 = pneg %p178
    %p185 = scmp.eq.s32.totalorder %s14, 1
    %p186 = por %p184, %p185
    %p187 = scmp.ne.s32.totalorder %s179, %s182
    %p188 = scmp.eq.s32.totalorder %s14, 0
    %p189 = por %p187, %p188
    %p190 = scmp.ne.s32.totalorder %s179, %s182
    %p191 = scmp.eq.s32.totalorder %s19, 1
    %p192 = por %p190, %p191
    %p193 = scmp.ne.s32.totalorder %s182, %s183
    %p194 = scmp.eq.s32.totalorder %s19, 0
    %p195 = por %p193, %p194
    %p196 = scmp.ne.s32.totalorder %s182, %s183
    %p197 = scmp.eq.s32.totalorder %s20, 1
    %p198 = por %p196, %p197
    %p200 = scmp.ne.s32.totalorder %s183, %s199
    %p201 = scmp.eq.s32.totalorder %s20, 0
    %p202 = por %p200, %p201
    %s203 = ssub.s32 %s21, %s33
    %p204 = scmp.eq.s32.totalorder %s203, 0
    %s206 = sadd.s32 %s205, 1
    %s207 = scalar_select %p204, %s205, %s206
    %p210 = pneg %p204
    %p211 = scmp.eq.s32.totalorder %s14, 1
    %p212 = por %p210, %p211
    %p213 = scmp.ne.s32.totalorder %s205, %s208
    %p214 = scmp.eq.s32.totalorder %s14, 0
    %p215 = por %p213, %p214
    %p216 = scmp.ne.s32.totalorder %s205, %s208
    %p217 = scmp.eq.s32.totalorder %s19, 1
    %p218 = por %p216, %p217
    %p219 = scmp.ne.s32.totalorder %s208, %s209
    %p220 = scmp.eq.s32.totalorder %s19, 0
    %p221 = por %p219, %p220
    %p222 = scmp.ne.s32.totalorder %s208, %s209
    %p223 = scmp.eq.s32.totalorder %s20, 1
    %p224 = por %p222, %p223
    %p226 = scmp.ne.s32.totalorder %s209, %s225
    %p227 = scmp.eq.s32.totalorder %s20, 0
    %p228 = por %p226, %p227
    %p229 = scmp.le.s32.totalorder 1, %s14
    %p230 = scmp.lt.s32.totalorder %s14, 3
    %p231 = pnand %p229, %p230
    %p232 = pneg %p231
    // Predicated region
    $region9: #{egtea_forward.15} parent=5 // pred_check
      _
    $region10: #{egtea_forward.15} parent=5 // pred_check_branch
      %234 = sbr.rel (%p231) target = $region12
    $region11: #{egtea_forward.15} parent=5 // pred_region
      %s235 = ssub.s32 %s14, 1
      // Predicated region
      $region13: #{egtea_forward.15} parent=11 // pred_check
        %p236 = pneg %p80
      $region14: #{egtea_forward.15} parent=11 // pred_check_branch
        %238 = sbr.rel (%p236) target = $region16
      $region15: #{egtea_forward.15} parent=11 // pred_region
        %s239 = smul.u32 4, %s24
        %p240 = scmp.lt.s32.totalorder %s239, 3
        %s241 = scalar_select %p240, %s239, 3
        %s242 = smul.addr %s241, 4
        %s243 = scalar_lea.vmem %s1, %s242
        %s244 = smul.u32 4, %s24
      $region16: #{egtea_forward.15} parent=11 // pred_fallthru
        _
      // Predicated region
      $region17: #{egtea_forward.15} parent=11 // pred_check
        %p245 = pneg %p101
      $region18: #{egtea_forward.15} parent=11 // pred_check_branch
        %247 = sbr.rel (%p245) target = $region20
      $region19: #{egtea_forward.15} parent=11 // pred_region
        _
      $region20: #{egtea_forward.15} parent=11 // pred_fallthru
        _
      // Predicated region
      $region21: #{egtea_forward.15} parent=11 // pred_check
        %p248 = pneg %p148
      $region22: #{egtea_forward.15} parent=11 // pred_check_branch
        %250 = sbr.rel (%p248) target = $region24
      $region23: #{egtea_forward.15} parent=11 // pred_region
        _
      $region24: #{egtea_forward.15} parent=11 // pred_fallthru
        _
      // Predicated region
      $region25: #{egtea_forward.15} parent=11 // pred_check
        %p251 = pneg %p169
      $region26: #{egtea_forward.15} parent=11 // pred_check_branch
        %253 = sbr.rel (%p251) target = $region28
      $region27: #{egtea_forward.15} parent=11 // pred_region
        _
      $region28: #{egtea_forward.15} parent=11 // pred_fallthru
        _
    $region12: #{egtea_forward.15} parent=5 // pred_fallthru
      _
    %p254 = scmp.lt.s32.totalorder %s14, 2
    // Predicated region
    $region29: #{egtea_forward.15} parent=5 // pred_check
      %p255 = pneg %p254
    $region30: #{egtea_forward.15} parent=5 // pred_check_branch
      %257 = sbr.rel (%p255) target = $region32
    $region31: #{egtea_forward.15} parent=5 // pred_region
      // Predicated region
      $region33: #{egtea_forward.15} parent=31 // pred_check
        %p258 = pneg %p48
      $region34: #{egtea_forward.15} parent=31 // pred_check_branch
        %260 = sbr.rel (%p258) target = $region36
      $region35: #{egtea_forward.15} parent=31 // pred_region
        %p261 = scmp.lt.s32.totalorder %s21, 1
        %s262 = scalar_select %p261, %s21, 1
        %p263 = scmp.lt.s32.totalorder %s22, 0
        %s264 = scalar_select %p263, %s22, 0
        %s265 = sadd.s32 %s264, %s262
        %s266 = smul.addr %s265, 4
        %s267 = scalar_lea.vmem %s0, %s266
      $region36: #{egtea_forward.15} parent=31 // pred_fallthru
        _
      // Predicated region
      $region37: #{egtea_forward.15} parent=31 // pred_check
        %p268 = pneg %p121
      $region38: #{egtea_forward.15} parent=31 // pred_check_branch
        %270 = sbr.rel (%p268) target = $region40
      $region39: #{egtea_forward.15} parent=31 // pred_region
        %p271 = scmp.lt.s32.totalorder %s21, 1
        %s272 = scalar_select %p271, %s21, 1
        %s273 = smul.addr %s272, 8
        %s274 = scalar_lea.vmem %s3, %s273
      $region40: #{egtea_forward.15} parent=31 // pred_fallthru
        _
    $region32: #{egtea_forward.15} parent=5 // pred_fallthru
      _
    %p275 = scmp.le.s32.totalorder 1, %s14
    %p276 = scmp.lt.s32.totalorder %s14, 3
    %p277 = pnand %p275, %p276
    %p278 = pneg %p277
    // Predicated region
    $region41: #{egtea_forward.15} parent=5 // pred_check
      _
    $region42: #{egtea_forward.15} parent=5 // pred_check_branch
      %280 = sbr.rel (%p277) target = $region44
    $region43: #{egtea_forward.15} parent=5 // pred_region
      %s281 = ssub.s32 %s14, 1
      %p282 = scmp.lt.s32.totalorder %s23, 1
      %s283 = scalar_select %p282, %s23, 1
      %p284 = scmp.lt.s32.totalorder %s24, 0
      %s285 = scalar_select %p284, %s24, 0
      %s286 = sadd.s32 %s285, %s283
      %s287 = smul.addr %s286, 4
      %s288 = scalar_lea.vmem %s0, %s287
      %p289 = pneg %p54
      %p290 = pneg %p51
      %s291 = smul.u32 4, %s24
      %p292 = scmp.lt.s32.totalorder %s291, 3
      %s293 = scalar_select %p292, %s291, 3
      %s294 = smul.addr %s293, 4
      %s295 = scalar_lea.vmem %s1, %s294
      %p296 = pneg %p80
      %p297 = pneg %p77
      %p298 = pneg %p101
      %p299 = pneg %p98
      %p300 = scmp.lt.s32.totalorder %s23, 1
      %s301 = scalar_select %p300, %s23, 1
      %s302 = smul.addr %s301, 8
      %s303 = scalar_lea.vmem %s3, %s302
      %p304 = pneg %p127
      %p305 = pneg %p124
      %p306 = pneg %p148
      %p307 = pneg %p145
      %p308 = pneg %p169
      %p309 = pneg %p166
      %p310 = pneg %p195
      %p311 = pneg %p192
      %p312 = scmp.lt.s32.totalorder %s23, 1
      %s313 = scalar_select %p312, %s23, 1
      %s314 = smul.addr %s313, 8
      %s315 = scalar_lea.vmem %s6, %s314
      %p316 = pneg %p221
      %p317 = pneg %p218
      %p318 = scmp.lt.s32.totalorder %s23, 1
      %s319 = scalar_select %p318, %s23, 1
      %s320 = smul.addr %s319, 4
      %s321 = scalar_lea.vmem %s7, %s320
      %p322 = scmp.lt.s32.totalorder %s23, 1
      %s323 = scalar_select %p322, %s23, 1
      %p324 = scmp.lt.s32.totalorder %s24, 0
      %s325 = scalar_select %p324, %s24, 0
      %s326 = sadd.s32 %s325, %s323
      %s327 = smul.addr %s326, 4
      %s328 = scalar_lea.vmem %s0, %s327
      %s329 = smul.u32 4, %s24
      %p330 = scmp.lt.s32.totalorder %s329, 3
      %s331 = scalar_select %p330, %s329, 3
      %s332 = smul.addr %s331, 4
      %s333 = scalar_lea.vmem %s1, %s332
      %s334 = smul.u32 4, %s24
      %p335 = scmp.lt.s32.totalorder %s23, 1
      %s336 = scalar_select %p335, %s23, 1
      %s337 = smul.addr %s336, 8
      %s338 = scalar_lea.vmem %s3, %s337
      %p339 = scmp.lt.s32.totalorder %s23, 1
      %s340 = scalar_select %p339, %s23, 1
      %s341 = smul.addr %s340, 8
      %s342 = scalar_lea.vmem %s6, %s341
      %p343 = scmp.lt.s32.totalorder %s23, 1
      %s344 = scalar_select %p343, %s23, 1
      %s345 = smul.addr %s344, 4
      %s346 = scalar_lea.vmem %s7, %s345
      %p348 = scmp.eq.s32.totalorder %s24, 0
      // Predicated region
      $region45: #{egtea_forward.15} parent=43 // pred_check
        %p349 = pneg %p348
      $region46: #{egtea_forward.15} parent=43 // pred_check_branch
        %351 = sbr.rel (%p349) target = $region48
      $region47: #{egtea_forward.15} parent=43 // pred_region
        %vm352 = vcmask 261120
        %353 = vst.msk [vmem:[#allocation2] sm:$0xff] %vm352, 0.0
      $region48: #{egtea_forward.15} parent=43 // pred_fallthru
        _
      %v354 = vld [vmem:[#allocation2] sm:$0xff]
      %v355 = vld [vmem:[%s328] sm:$0xf]
      %v356 = vld [vmem:[%s333] sm:$0xf]
      %v357 = vld [vmem:[%s333 + $0x4] sm:$0xf]
      %v358 = vld [vmem:[%s333 + $0x8] sm:$0xf]
      %v359 = vld [vmem:[%s333 + $0xc] sm:$0xf]
      %v364 = vunpack.c.l.b16 %v356
      %v365 = vunpack.c.l.b16 %v357
      %v366 = vunpack.c.l.b16 %v358
      %v367 = vunpack.c.l.b16 %v359
      %v368 = vpack.c.b16 %v365, %v364
      %v369 = vpack.c.b16 %v367, %v366
      %vm372 = vcmask 261120
      %v374 = vsel %vm372, %v355, 0
      %376 = vmatpush.bf16.msra.mxu0 0
      %377 = vmatpush.bf16.msra.mxu0 0
      %378 = vmatpush.bf16.msra.mxu0 0
      %379 = vmatpush.bf16.msra.mxu0 0
      %380 = vmatpush.bf16.msra.mxu0 0
      %381 = vmatpush.bf16.msra.mxu0 0
      %382 = vmatpush.bf16.msra.mxu0 %v369
      %383 = vmatpush.bf16.msra.mxu0 %v368
      %384 = vmatmul.bf16.gmra.mxu0 %v374
      %v385 = vpop.f32.mrf.mxu0
      %v386 = vadd.f32 0.0, %v385
      %v387 = vpop.f32.mrf.mxu0
      %388 = vdwg.mxu0
      %v389 = vadd.f32 %v354, %v386
      %390 = vst.msk [vmem:[#allocation2] sm:$0xff] %vm372, %v389
      // Predicated region
      $region49: #{egtea_forward.15} parent=43 // pred_check
        %p391 = pneg %p348
      $region50: #{egtea_forward.15} parent=43 // pred_check_branch
        %393 = sbr.rel (%p391) target = $region52
      $region51: #{egtea_forward.15} parent=43 // pred_region
        %v394 = vld [vmem:[#allocation2] sm:$0xff]
        %v395 = vld [vmem:[%s2] sm:$0x1]
        %v397 = vperm.slane %v395, 0
        %v399 = vadd.f32 %v394, %v397
        %v400 = vld [vmem:[%s338] sm:$0xff]
        %v401 = vadd.f32 %v399, %v400
        %v402 = vsel %vm372, %v401, 0.0
        %403 = vadd.xlane.f32.xlu0 %v402
        %v404 = vpop.xlane.xlu0 %403
        %v405 = vrcp.pop 32.0
        %v406 = vmul.f32 32.0, %v405
        %v407 = vsub.f32 1.0, %v406
        %v408 = vmul.f32 %v405, %v407
        %v409 = vadd.f32 %v405, %v408
        %vm410 = vweird.f32 %v405
        %v411 = vsel %vm410, %v405, %v409
        %v412 = vmul.f32 %v404, %v411
        %v413 = vmul.f32 %v401, %v401
        %v414 = vsel %vm372, %v413, 0.0
        %415 = vadd.xlane.f32.xlu0 %v414
        %v416 = vpop.xlane.xlu0 %415
        %v417 = vmul.f32 %v416, %v411
        %v418 = vmul.f32 %v412, %v412
        %v419 = vsub.f32 %v417, %v418
        %v420 = vmax.f32 %v419, 0.0
        %v421 = vsub.f32 %v401, %v412
        %v422 = vadd.f32 %v420, 1e-12
        %v423 = vrsqrt.pop %v422
        %v424 = vmul.f32 %v423, %v422
        %v425 = vmul.f32 %v424, %v423
        %v426 = vmul.f32 0.5, %v425
        %v427 = vsub.f32 1.5, %v426
        %v428 = vmul.f32 %v423, %v427
        %vm429 = vweird.f32 %v422
        %vm430 = vweird.f32 %v423
        %vm431 = vmor %vm429, %vm430
        %v432 = vsel %vm431, %v423, %v428
        %v433 = vmul.f32 %v421, %v432
        %v434 = vld [vmem:[%s4] sm:$0x1]
        %v436 = vperm.slane %v434, 0
        %v438 = vmul.f32 %v433, %v436
        %v439 = vld [vmem:[%s5] sm:$0x1]
        %v441 = vperm.slane %v439, 0
        %v443 = vadd.f32 %v438, %v441
        %444 = vst.msk [vmem:[%s342] sm:$0xff] %vm372, %v443
        %v445 = vpack.c.bf16 %v443, %v443
        %vm446 = vcmask 257024
        %447 = vst.msk [vmem:[%s346] sm:$0xf] %vm446, %v445
      $region52: #{egtea_forward.15} parent=43 // pred_fallthru
        _
      %p448 = scmp.lt.s32.totalorder %s23, 1
      %s449 = scalar_select %p448, %s23, 1
      %s450 = smul.addr %s449, 8
      %s451 = scalar_lea.vmem %s6, %s450
      %p452 = scmp.lt.s32.totalorder %s23, 1
      %s453 = scalar_select %p452, %s23, 1
      %s454 = smul.addr %s453, 4
      %s455 = scalar_lea.vmem %s7, %s454
      // Predicated region
      $region53: #{egtea_forward.15} parent=43 // pred_check
        %p456 = pneg %p192
      $region54: #{egtea_forward.15} parent=43 // pred_check_branch
        %458 = sbr.rel (%p456) target = $region56
      $region55: #{egtea_forward.15} parent=43 // pred_region
        _
      $region56: #{egtea_forward.15} parent=43 // pred_fallthru
        _
      // Predicated region
      $region57: #{egtea_forward.15} parent=43 // pred_check
        %p459 = pneg %p218
      $region58: #{egtea_forward.15} parent=43 // pred_check_branch
        %461 = sbr.rel (%p459) target = $region60
      $region59: #{egtea_forward.15} parent=43 // pred_region
        _
      $region60: #{egtea_forward.15} parent=43 // pred_fallthru
        _
    $region44: #{egtea_forward.15} parent=5 // pred_fallthru
      _
    %p462 = scmp.le.s32.totalorder 2, %s14
    // Predicated region
    $region61: #{egtea_forward.15} parent=5 // pred_check
      %p463 = pneg %p462
    $region62: #{egtea_forward.15} parent=5 // pred_check_branch
      %465 = sbr.rel (%p463) target = $region64
    $region63: #{egtea_forward.15} parent=5 // pred_region
      %s466 = ssub.s32 %s14, 2
      // Predicated region
      $region65: #{egtea_forward.15} parent=63 // pred_check
        %p467 = pneg %p198
      $region66: #{egtea_forward.15} parent=63 // pred_check_branch
        %469 = sbr.rel (%p467) target = $region68
      $region67: #{egtea_forward.15} parent=63 // pred_region
        %p470 = scmp.lt.s32.totalorder %s25, 1
        %s471 = scalar_select %p470, %s25, 1
        %s472 = smul.addr %s471, 8
        %s473 = scalar_lea.vmem %s6, %s472
      $region68: #{egtea_forward.15} parent=63 // pred_fallthru
        _
      // Predicated region
      $region69: #{egtea_forward.15} parent=63 // pred_check
        %p474 = pneg %p224
      $region70: #{egtea_forward.15} parent=63 // pred_check_branch
        %476 = sbr.rel (%p474) target = $region72
      $region71: #{egtea_forward.15} parent=63 // pred_region
        %p477 = scmp.lt.s32.totalorder %s25, 1
        %s478 = scalar_select %p477, %s25, 1
        %s479 = smul.addr %s478, 4
        %s480 = scalar_lea.vmem %s7, %s479
      $region72: #{egtea_forward.15} parent=63 // pred_fallthru
        _
    $region64: #{egtea_forward.15} parent=5 // pred_fallthru
      _
  $region6: #{egtea_forward.15} parent=0 // loop_footer
    %s18 = sadd.s32 1, %s14
  $region7: #{egtea_forward.15} parent=0 // loop_footer_branch
    %13 = sbr.rel target = $region3
  $region8: #{egtea_forward.15} parent=0 // loop_exit
    _

// kernel: egtea_forward.12
$region0: #{egtea_forward.12}
  #allocation0 [shape = 'u32[]', space=smem, size = 0x4, offset = 0x4, fixed_abs, tag = 'smem constant byte address 0x4 - core index']
  #allocation1 [shape = 'u32[72,128]{1,0:T(1,128)}', space=vmem, size = 0x9000, scoped, tag = 'internal scratch']
  %s0 = inlined_call_operand.vmem [shape: f32[16,32], index: 0, kind: input, shape index: {}]
  %s1 = inlined_call_operand.vmem [shape: f32[1,32], index: 1, kind: input, shape index: {}]
  %s2 = inlined_call_operand.vmem [shape: f32[1,32], index: 2, kind: input, shape index: {}]
  %s3 = inlined_call_operand.vmem [shape: f32[16,32], index: 3, kind: output, shape index: {0}]
  %s4 = inlined_call_operand.vmem [shape: bf16[16,32], index: 4, kind: output, shape index: {1}]
  %5 = xla_tuple %s3, %s4
  %s6 = sld [smem:[#allocation0]]
  $region53: #{egtea_forward.12} parent=0
    _
  %s8 = ssub.s32 1, %s6
  %s9 = scalar_select 0, %s8, %s6
  loop: start=0, step=1, limit=4
  $region2: #{egtea_forward.12} parent=0 // loop_pre_header
    _
  $region3: #{egtea_forward.12} parent=0 // loop_header
    %s11 = sphi 0, %s15
    %p12 = scmp.ge.s32.totalorder %s11, 4
    %s21 = sphi 0, %s23
    %s24 = sphi 0, %s21
    %s25 = sphi 0, %s24
    %s41 = sphi 0, %s25
    %s45 = sphi 0, %s45
    %s47 = sphi 0, %s45
    %s48 = sphi 0, %s47
    %s62 = sphi 0, %s48
    %s66 = sphi 0, %s66
    %s68 = sphi 0, %s66
    %s69 = sphi 0, %s68
    %s83 = sphi 0, %s69
    %s89 = sphi 0, %s91
    %s92 = sphi 0, %s89
    %s93 = sphi 0, %s92
    %s109 = sphi 0, %s93
    %s115 = sphi 0, %s117
    %s118 = sphi 0, %s115
    %s119 = sphi 0, %s118
    %s135 = sphi 0, %s119
  $region4: #{egtea_forward.12} parent=0 // loop_header_branch
    %14 = sbr.rel (%p12) target = $region8
  $region5: #{egtea_forward.12} parent=0 // loop_body
    %s16 = ssub.s32 %s11, 1
    %s17 = ssub.s32 %s11, 2
    %s18 = sadd.s32 %s11, 1
    %s19 = ssub.s32 %s11, %s18
    %p20 = scmp.eq.s32.totalorder %s19, 0
    %s22 = sadd.s32 %s21, 1
    %s23 = scalar_select %p20, %s21, %s22
    %p26 = pneg %p20
    %p27 = scmp.eq.s32.totalorder %s11, 1
    %p28 = por %p26, %p27
    %p29 = scmp.ne.s32.totalorder %s21, %s24
    %p30 = scmp.eq.s32.totalorder %s11, 0
    %p31 = por %p29, %p30
    %p32 = scmp.ne.s32.totalorder %s21, %s24
    %p33 = scmp.eq.s32.totalorder %s16, 1
    %p34 = por %p32, %p33
    %p35 = scmp.ne.s32.totalorder %s24, %s25
    %p36 = scmp.eq.s32.totalorder %s16, 0
    %p37 = por %p35, %p36
    %p38 = scmp.ne.s32.totalorder %s24, %s25
    %p39 = scmp.eq.s32.totalorder %s17, 1
    %p40 = por %p38, %p39
    %p42 = scmp.ne.s32.totalorder %s25, %s41
    %p43 = scmp.eq.s32.totalorder %s17, 0
    %p44 = por %p42, %p43
    %s46 = sadd.s32 %s45, 1
    %p49 = scmp.eq.s32.totalorder %s11, 1
    %p50 = scmp.ne.s32.totalorder %s45, %s47
    %p51 = scmp.eq.s32.totalorder %s11, 0
    %p52 = por %p50, %p51
    %p53 = scmp.ne.s32.totalorder %s45, %s47
    %p54 = scmp.eq.s32.totalorder %s16, 1
    %p55 = por %p53, %p54
    %p56 = scmp.ne.s32.totalorder %s47, %s48
    %p57 = scmp.eq.s32.totalorder %s16, 0
    %p58 = por %p56, %p57
    %p59 = scmp.ne.s32.totalorder %s47, %s48
    %p60 = scmp.eq.s32.totalorder %s17, 1
    %p61 = por %p59, %p60
    %p63 = scmp.ne.s32.totalorder %s48, %s62
    %p64 = scmp.eq.s32.totalorder %s17, 0
    %p65 = por %p63, %p64
    %s67 = sadd.s32 %s66, 1
    %p70 = scmp.eq.s32.totalorder %s11, 1
    %p71 = scmp.ne.s32.totalorder %s66, %s68
    %p72 = scmp.eq.s32.totalorder %s11, 0
    %p73 = por %p71, %p72
    %p74 = scmp.ne.s32.totalorder %s66, %s68
    %p75 = scmp.eq.s32.totalorder %s16, 1
    %p76 = por %p74, %p75
    %p77 = scmp.ne.s32.totalorder %s68, %s69
    %p78 = scmp.eq.s32.totalorder %s16, 0
    %p79 = por %p77, %p78
    %p80 = scmp.ne.s32.totalorder %s68, %s69
    %p81 = scmp.eq.s32.totalorder %s17, 1
    %p82 = por %p80, %p81
    %p84 = scmp.ne.s32.totalorder %s69, %s83
    %p85 = scmp.eq.s32.totalorder %s17, 0
    %p86 = por %p84, %p85
    %s87 = ssub.s32 %s11, %s18
    %p88 = scmp.eq.s32.totalorder %s87, 0
    %s90 = sadd.s32 %s89, 1
    %s91 = scalar_select %p88, %s89, %s90
    %p94 = pneg %p88
    %p95 = scmp.eq.s32.totalorder %s11, 1
    %p96 = por %p94, %p95
    %p97 = scmp.ne.s32.totalorder %s89, %s92
    %p98 = scmp.eq.s32.totalorder %s11, 0
    %p99 = por %p97, %p98
    %p100 = scmp.ne.s32.totalorder %s89, %s92
    %p101 = scmp.eq.s32.totalorder %s16, 1
    %p102 = por %p100, %p101
    %p103 = scmp.ne.s32.totalorder %s92, %s93
    %p104 = scmp.eq.s32.totalorder %s16, 0
    %p105 = por %p103, %p104
    %p106 = scmp.ne.s32.totalorder %s92, %s93
    %p107 = scmp.eq.s32.totalorder %s17, 1
    %p108 = por %p106, %p107
    %p110 = scmp.ne.s32.totalorder %s93, %s109
    %p111 = scmp.eq.s32.totalorder %s17, 0
    %p112 = por %p110, %p111
    %s113 = ssub.s32 %s11, %s18
    %p114 = scmp.eq.s32.totalorder %s113, 0
    %s116 = sadd.s32 %s115, 1
    %s117 = scalar_select %p114, %s115, %s116
    %p120 = pneg %p114
    %p121 = scmp.eq.s32.totalorder %s11, 1
    %p122 = por %p120, %p121
    %p123 = scmp.ne.s32.totalorder %s115, %s118
    %p124 = scmp.eq.s32.totalorder %s11, 0
    %p125 = por %p123, %p124
    %p126 = scmp.ne.s32.totalorder %s115, %s118
    %p127 = scmp.eq.s32.totalorder %s16, 1
    %p128 = por %p126, %p127
    %p129 = scmp.ne.s32.totalorder %s118, %s119
    %p130 = scmp.eq.s32.totalorder %s16, 0
    %p131 = por %p129, %p130
    %p132 = scmp.ne.s32.totalorder %s118, %s119
    %p133 = scmp.eq.s32.totalorder %s17, 1
    %p134 = por %p132, %p133
    %p136 = scmp.ne.s32.totalorder %s119, %s135
    %p137 = scmp.eq.s32.totalorder %s17, 0
    %p138 = por %p136, %p137
    %p139 = scmp.le.s32.totalorder 1, %s11
    %p140 = scmp.lt.s32.totalorder %s11, 3
    %p141 = pnand %p139, %p140
    %p142 = pneg %p141
    // Predicated region
    $region9: #{egtea_forward.12} parent=5 // pred_check
      _
    $region10: #{egtea_forward.12} parent=5 // pred_check_branch
      %144 = sbr.rel (%p141) target = $region12
    $region11: #{egtea_forward.12} parent=5 // pred_region
      %s145 = ssub.s32 %s11, 1
      // Predicated region
      $region13: #{egtea_forward.12} parent=11 // pred_check
        %p146 = pneg %p58
      $region14: #{egtea_forward.12} parent=11 // pred_check_branch
        %148 = sbr.rel (%p146) target = $region16
      $region15: #{egtea_forward.12} parent=11 // pred_region
        _
      $region16: #{egtea_forward.12} parent=11 // pred_fallthru
        _
      // Predicated region
      $region17: #{egtea_forward.12} parent=11 // pred_check
        %p149 = pneg %p79
      $region18: #{egtea_forward.12} parent=11 // pred_check_branch
        %151 = sbr.rel (%p149) target = $region20
      $region19: #{egtea_forward.12} parent=11 // pred_region
        _
      $region20: #{egtea_forward.12} parent=11 // pred_fallthru
        _
    $region12: #{egtea_forward.12} parent=5 // pred_fallthru
      _
    %p152 = scmp.lt.s32.totalorder %s11, 2
    // Predicated region
    $region21: #{egtea_forward.12} parent=5 // pred_check
      %p153 = pneg %p152
    $region22: #{egtea_forward.12} parent=5 // pred_check_branch
      %155 = sbr.rel (%p153) target = $region24
    $region23: #{egtea_forward.12} parent=5 // pred_region
      // Predicated region
      $region25: #{egtea_forward.12} parent=23 // pred_check
        %p156 = pneg %p31
      $region26: #{egtea_forward.12} parent=23 // pred_check_branch
        %158 = sbr.rel (%p156) target = $region28
      $region27: #{egtea_forward.12} parent=23 // pred_region
        %p159 = scmp.lt.s32.totalorder %s11, 1
        %s160 = scalar_select %p159, %s11, 1
        %s161 = smul.addr %s160, 8
        %s162 = scalar_lea.vmem %s0, %s161
      $region28: #{egtea_forward.12} parent=23 // pred_fallthru
        _
    $region24: #{egtea_forward.12} parent=5 // pred_fallthru
      _
    %p163 = scmp.le.s32.totalorder 1, %s11
    %p164 = scmp.lt.s32.totalorder %s11, 3
    %p165 = pnand %p163, %p164
    %p166 = pneg %p165
    // Predicated region
    $region29: #{egtea_forward.12} parent=5 // pred_check
      _
    $region30: #{egtea_forward.12} parent=5 // pred_check_branch
      %168 = sbr.rel (%p165) target = $region32
    $region31: #{egtea_forward.12} parent=5 // pred_region
      %s169 = ssub.s32 %s11, 1
      %p170 = scmp.lt.s32.totalorder %s16, 1
      %s171 = scalar_select %p170, %s16, 1
      %s172 = smul.addr %s171, 8
      %s173 = scalar_lea.vmem %s0, %s172
      %p174 = pneg %p37
      %p175 = pneg %p34
      %p176 = pneg %p58
      %p177 = pneg %p55
      %p178 = pneg %p79
      %p179 = pneg %p76
      %p180 = pneg %p105
      %p181 = pneg %p102
      %p182 = scmp.lt.s32.totalorder %s16, 1
      %s183 = scalar_select %p182, %s16, 1
      %s184 = smul.addr %s183, 8
      %s185 = scalar_lea.vmem %s3, %s184
      %p186 = pneg %p131
      %p187 = pneg %p128
      %p188 = scmp.lt.s32.totalorder %s16, 1
      %s189 = scalar_select %p188, %s16, 1
      %s190 = smul.addr %s189, 4
      %s191 = scalar_lea.vmem %s4, %s190
      %p192 = scmp.lt.s32.totalorder %s16, 1
      %s193 = scalar_select %p192, %s16, 1
      %s194 = smul.addr %s193, 8
      %s195 = scalar_lea.vmem %s0, %s194
      %p196 = scmp.lt.s32.totalorder %s16, 1
      %s197 = scalar_select %p196, %s16, 1
      %s198 = smul.addr %s197, 8
      %s199 = scalar_lea.vmem %s3, %s198
      %p200 = scmp.lt.s32.totalorder %s16, 1
      %s201 = scalar_select %p200, %s16, 1
      %s202 = smul.addr %s201, 4
      %s203 = scalar_lea.vmem %s4, %s202
      %v204 = vld [vmem:[%s195] sm:$0xff]
      %vm205 = vcmask 261120
      %v206 = vsel %vm205, %v204, 0.0
      %207 = vadd.xlane.f32.xlu0 %v206
      %v208 = vpop.xlane.xlu0 %207
      %v209 = vrcp.pop 32.0
      %v210 = vmul.f32 32.0, %v209
      %v211 = vsub.f32 1.0, %v210
      %v212 = vmul.f32 %v209, %v211
      %v213 = vadd.f32 %v209, %v212
      %vm214 = vweird.f32 %v209
      %v215 = vsel %vm214, %v209, %v213
      %v216 = vmul.f32 %v208, %v215
      %v217 = vmul.f32 %v204, %v204
      %v218 = vsel %vm205, %v217, 0.0
      %219 = vadd.xlane.f32.xlu0 %v218
      %v220 = vpop.xlane.xlu0 %219
      %v221 = vmul.f32 %v220, %v215
      %v222 = vmul.f32 %v216, %v216
      %v223 = vsub.f32 %v221, %v222
      %v224 = vmax.f32 %v223, 0.0
      %v225 = vsub.f32 %v204, %v216
      %v226 = vadd.f32 %v224, 1e-12
      %v227 = vrsqrt.pop %v226
      %v228 = vmul.f32 %v227, %v226
      %v229 = vmul.f32 %v228, %v227
      %v230 = vmul.f32 0.5, %v229
      %v231 = vsub.f32 1.5, %v230
      %v232 = vmul.f32 %v227, %v231
      %vm233 = vweird.f32 %v226
      %vm234 = vweird.f32 %v227
      %vm235 = vmor %vm233, %vm234
      %v236 = vsel %vm235, %v227, %v232
      %v237 = vmul.f32 %v225, %v236
      %v238 = vld [vmem:[%s1] sm:$0x1]
      %v240 = vperm.slane %v238, 0
      %v242 = vmul.f32 %v237, %v240
      %v243 = vld [vmem:[%s2] sm:$0x1]
      %v245 = vperm.slane %v243, 0
      %v247 = vadd.f32 %v242, %v245
      %248 = vst.msk [vmem:[%s199] sm:$0xff] %vm205, %v247
      %v249 = vpack.c.bf16 %v247, %v247
      %vm250 = vcmask 257024
      %251 = vst.msk [vmem:[%s203] sm:$0xf] %vm250, %v249
      %p252 = scmp.lt.s32.totalorder %s16, 1
      %s253 = scalar_select %p252, %s16, 1
      %s254 = smul.addr %s253, 8
      %s255 = scalar_lea.vmem %s3, %s254
      %p256 = scmp.lt.s32.totalorder %s16, 1
      %s257 = scalar_select %p256, %s16, 1
      %s258 = smul.addr %s257, 4
      %s259 = scalar_lea.vmem %s4, %s258
      // Predicated region
      $region33: #{egtea_forward.12} parent=31 // pred_check
        %p260 = pneg %p102
      $region34: #{egtea_forward.12} parent=31 // pred_check_branch
        %262 = sbr.rel (%p260) target = $region36
      $region35: #{egtea_forward.12} parent=31 // pred_region
        _
      $region36: #{egtea_forward.12} parent=31 // pred_fallthru
        _
      // Predicated region
      $region37: #{egtea_forward.12} parent=31 // pred_check
        %p263 = pneg %p128
      $region38: #{egtea_forward.12} parent=31 // pred_check_branch
        %265 = sbr.rel (%p263) target = $region40
      $region39: #{egtea_forward.12} parent=31 // pred_region
        _
      $region40: #{egtea_forward.12} parent=31 // pred_fallthru
        _
    $region32: #{egtea_forward.12} parent=5 // pred_fallthru
      _
    %p266 = scmp.le.s32.totalorder 2, %s11
    // Predicated region
    $region41: #{egtea_forward.12} parent=5 // pred_check
      %p267 = pneg %p266
    $region42: #{egtea_forward.12} parent=5 // pred_check_branch
      %269 = sbr.rel (%p267) target = $region44
    $region43: #{egtea_forward.12} parent=5 // pred_region
      %s270 = ssub.s32 %s11, 2
      // Predicated region
      $region45: #{egtea_forward.12} parent=43 // pred_check
        %p271 = pneg %p108
      $region46: #{egtea_forward.12} parent=43 // pred_check_branch
        %273 = sbr.rel (%p271) target = $region48
      $region47: #{egtea_forward.12} parent=43 // pred_region
        %p274 = scmp.lt.s32.totalorder %s17, 1
        %s275 = scalar_select %p274, %s17, 1
        %s276 = smul.addr %s275, 8
        %s277 = scalar_lea.vmem %s3, %s276
      $region48: #{egtea_forward.12} parent=43 // pred_fallthru
        _
      // Predicated region
      $region49: #{egtea_forward.12} parent=43 // pred_check
        %p278 = pneg %p134
      $region50: #{egtea_forward.12} parent=43 // pred_check_branch
        %280 = sbr.rel (%p278) target = $region52
      $region51: #{egtea_forward.12} parent=43 // pred_region
        %p281 = scmp.lt.s32.totalorder %s17, 1
        %s282 = scalar_select %p281, %s17, 1
        %s283 = smul.addr %s282, 4
        %s284 = scalar_lea.vmem %s4, %s283
      $region52: #{egtea_forward.12} parent=43 // pred_fallthru
        _
    $region44: #{egtea_forward.12} parent=5 // pred_fallthru
      _
  $region6: #{egtea_forward.12} parent=0 // loop_footer
    %s15 = sadd.s32 1, %s11
  $region7: #{egtea_forward.12} parent=0 // loop_footer_branch
    %10 = sbr.rel target = $region3
  $region8: #{egtea_forward.12} parent=0 // loop_exit
    _

// kernel: egtea_forward.13
$region0: #{egtea_forward.13}
  #allocation0 [shape = 'u32[]', space=smem, size = 0x4, offset = 0x4, fixed_abs, tag = 'smem constant byte address 0x4 - core index']
  #allocation1 [shape = 'u32[72,128]{1,0:T(1,128)}', space=vmem, size = 0x9000, scoped, tag = 'internal scratch']
  #allocation2 [shape = 'f32[8,96]{1,0:T(8,128)}', space=vmem, size = 0x1000, scoped, tag = 'scratch operand']
  %s0 = inlined_call_operand.vmem [shape: bf16[16,32], index: 0, kind: input, shape index: {}]
  %s1 = inlined_call_operand.vmem [shape: bf16[32,96], index: 1, kind: input, shape index: {}]
  %s2 = inlined_call_operand.vmem [shape: f32[1,96], index: 2, kind: input, shape index: {}]
  %s3 = inlined_call_operand.vmem [shape: bf16[16,96], index: 3, kind: output, shape index: {}]
  %s4 = sld [smem:[#allocation0]]
  $region53: #{egtea_forward.13} parent=0
    _
  %s6 = ssub.s32 1, %s4
  %s7 = scalar_select 0, %s6, %s4
  loop: start=0, step=1, limit=4
  $region2: #{egtea_forward.13} parent=0 // loop_pre_header
    _
  $region3: #{egtea_forward.13} parent=0 // loop_header
    %s9 = sphi 0, %s13
    %p10 = scmp.ge.s32.totalorder %s9, 4
    %s16 = sphi 0, %s28
    %s17 = sphi 0, %s24
    %s18 = sphi 0, %s16
    %s19 = sphi 0, %s17
    %s20 = sphi 0, %s18
    %s21 = sphi 0, %s19
    %s33 = sphi 0, %s35
    %s36 = sphi 0, %s33
    %s37 = sphi 0, %s36
    %s53 = sphi 0, %s37
    %s59 = sphi 0, %s61
    %s62 = sphi 0, %s59
    %s63 = sphi 0, %s62
    %s79 = sphi 0, %s63
    %s83 = sphi 0, %s83
    %s85 = sphi 0, %s83
    %s86 = sphi 0, %s85
    %s100 = sphi 0, %s86
    %s106 = sphi 0, %s108
    %s109 = sphi 0, %s106
    %s110 = sphi 0, %s109
    %s126 = sphi 0, %s110
  $region4: #{egtea_forward.13} parent=0 // loop_header_branch
    %12 = sbr.rel (%p10) target = $region8
  $region5: #{egtea_forward.13} parent=0 // loop_body
    %s14 = ssub.s32 %s9, 1
    %s15 = ssub.s32 %s9, 2
    %s22 = sadd.s32 1, %s17
    %p23 = scmp.ge.s32.totalorder %s22, 1
    %s24 = scalar_select %p23, 0, %s22
    %s25 = sadd.s32 1, %s16
    %s26 = scalar_select %p23, %s25, %s16
    %p27 = scmp.ge.s32.totalorder %s26, 2
    %s28 = scalar_select %p27, 0, %s26
    %s29 = ssub.s32 %s16, %s28
    %s30 = ssub.s32 %s17, %s24
    %s31 = sor.u32 %s29, %s30
    %p32 = scmp.eq.s32.totalorder %s31, 0
    %s34 = sadd.s32 %s33, 1
    %s35 = scalar_select %p32, %s33, %s34
    %p38 = pneg %p32
    %p39 = scmp.eq.s32.totalorder %s9, 1
    %p40 = por %p38, %p39
    %p41 = scmp.ne.s32.totalorder %s33, %s36
    %p42 = scmp.eq.s32.totalorder %s9, 0
    %p43 = por %p41, %p42
    %p44 = scmp.ne.s32.totalorder %s33, %s36
    %p45 = scmp.eq.s32.totalorder %s14, 1
    %p46 = por %p44, %p45
    %p47 = scmp.ne.s32.totalorder %s36, %s37
    %p48 = scmp.eq.s32.totalorder %s14, 0
    %p49 = por %p47, %p48
    %p50 = scmp.ne.s32.totalorder %s36, %s37
    %p51 = scmp.eq.s32.totalorder %s15, 1
    %p52 = por %p50, %p51
    %p54 = scmp.ne.s32.totalorder %s37, %s53
    %p55 = scmp.eq.s32.totalorder %s15, 0
    %p56 = por %p54, %p55
    %s57 = ssub.s32 %s17, %s24
    %p58 = scmp.eq.s32.totalorder %s57, 0
    %s60 = sadd.s32 %s59, 1
    %s61 = scalar_select %p58, %s59, %s60
    %p64 = pneg %p58
    %p65 = scmp.eq.s32.totalorder %s9, 1
    %p66 = por %p64, %p65
    %p67 = scmp.ne.s32.totalorder %s59, %s62
    %p68 = scmp.eq.s32.totalorder %s9, 0
    %p69 = por %p67, %p68
    %p70 = scmp.ne.s32.totalorder %s59, %s62
    %p71 = scmp.eq.s32.totalorder %s14, 1
    %p72 = por %p70, %p71
    %p73 = scmp.ne.s32.totalorder %s62, %s63
    %p74 = scmp.eq.s32.totalorder %s14, 0
    %p75 = por %p73, %p74
    %p76 = scmp.ne.s32.totalorder %s62, %s63
    %p77 = scmp.eq.s32.totalorder %s15, 1
    %p78 = por %p76, %p77
    %p80 = scmp.ne.s32.totalorder %s63, %s79
    %p81 = scmp.eq.s32.totalorder %s15, 0
    %p82 = por %p80, %p81
    %s84 = sadd.s32 %s83, 1
    %p87 = scmp.eq.s32.totalorder %s9, 1
    %p88 = scmp.ne.s32.totalorder %s83, %s85
    %p89 = scmp.eq.s32.totalorder %s9, 0
    %p90 = por %p88, %p89
    %p91 = scmp.ne.s32.totalorder %s83, %s85
    %p92 = scmp.eq.s32.totalorder %s14, 1
    %p93 = por %p91, %p92
    %p94 = scmp.ne.s32.totalorder %s85, %s86
    %p95 = scmp.eq.s32.totalorder %s14, 0
    %p96 = por %p94, %p95
    %p97 = scmp.ne.s32.totalorder %s85, %s86
    %p98 = scmp.eq.s32.totalorder %s15, 1
    %p99 = por %p97, %p98
    %p101 = scmp.ne.s32.totalorder %s86, %s100
    %p102 = scmp.eq.s32.totalorder %s15, 0
    %p103 = por %p101, %p102
    %s104 = ssub.s32 %s16, %s28
    %p105 = scmp.eq.s32.totalorder %s104, 0
    %s107 = sadd.s32 %s106, 1
    %s108 = scalar_select %p105, %s106, %s107
    %p111 = pneg %p105
    %p112 = scmp.eq.s32.totalorder %s9, 1
    %p113 = por %p111, %p112
    %p114 = scmp.ne.s32.totalorder %s106, %s109
    %p115 = scmp.eq.s32.totalorder %s9, 0
    %p116 = por %p114, %p115
    %p117 = scmp.ne.s32.totalorder %s106, %s109
    %p118 = scmp.eq.s32.totalorder %s14, 1
    %p119 = por %p117, %p118
    %p120 = scmp.ne.s32.totalorder %s109, %s110
    %p121 = scmp.eq.s32.totalorder %s14, 0
    %p122 = por %p120, %p121
    %p123 = scmp.ne.s32.totalorder %s109, %s110
    %p124 = scmp.eq.s32.totalorder %s15, 1
    %p125 = por %p123, %p124
    %p127 = scmp.ne.s32.totalorder %s110, %s126
    %p128 = scmp.eq.s32.totalorder %s15, 0
    %p129 = por %p127, %p128
    %p130 = scmp.le.s32.totalorder 1, %s9
    %p131 = scmp.lt.s32.totalorder %s9, 3
    %p132 = pnand %p130, %p131
    %p133 = pneg %p132
    // Predicated region
    $region9: #{egtea_forward.13} parent=5 // pred_check
      _
    $region10: #{egtea_forward.13} parent=5 // pred_check_branch
      %135 = sbr.rel (%p132) target = $region12
    $region11: #{egtea_forward.13} parent=5 // pred_region
      %s136 = ssub.s32 %s9, 1
      // Predicated region
      $region13: #{egtea_forward.13} parent=11 // pred_check
        %p137 = pneg %p75
      $region14: #{egtea_forward.13} parent=11 // pred_check_branch
        %139 = sbr.rel (%p137) target = $region16
      $region15: #{egtea_forward.13} parent=11 // pred_region
        %s140 = smul.u32 4, %s19
        %p141 = scmp.lt.s32.totalorder %s140, 3
        %s142 = scalar_select %p141, %s140, 3
        %s143 = smul.addr %s142, 4
        %s144 = scalar_lea.vmem %s1, %s143
        %s145 = smul.u32 4, %s19
      $region16: #{egtea_forward.13} parent=11 // pred_fallthru
        _
      // Predicated region
      $region17: #{egtea_forward.13} parent=11 // pred_check
        %p146 = pneg %p96
      $region18: #{egtea_forward.13} parent=11 // pred_check_branch
        %148 = sbr.rel (%p146) target = $region20
      $region19: #{egtea_forward.13} parent=11 // pred_region
        _
      $region20: #{egtea_forward.13} parent=11 // pred_fallthru
        _
    $region12: #{egtea_forward.13} parent=5 // pred_fallthru
      _
    %p149 = scmp.lt.s32.totalorder %s9, 2
    // Predicated region
    $region21: #{egtea_forward.13} parent=5 // pred_check
      %p150 = pneg %p149
    $region22: #{egtea_forward.13} parent=5 // pred_check_branch
      %152 = sbr.rel (%p150) target = $region24
    $region23: #{egtea_forward.13} parent=5 // pred_region
      // Predicated region
      $region25: #{egtea_forward.13} parent=23 // pred_check
        %p153 = pneg %p43
      $region26: #{egtea_forward.13} parent=23 // pred_check_branch
        %155 = sbr.rel (%p153) target = $region28
      $region27: #{egtea_forward.13} parent=23 // pred_region
        %p156 = scmp.lt.s32.totalorder %s16, 1
        %s157 = scalar_select %p156, %s16, 1
        %p158 = scmp.lt.s32.totalorder %s17, 0
        %s159 = scalar_select %p158, %s17, 0
        %s160 = sadd.s32 %s159, %s157
        %s161 = smul.addr %s160, 4
        %s162 = scalar_lea.vmem %s0, %s161
      $region28: #{egtea_forward.13} parent=23 // pred_fallthru
        _
    $region24: #{egtea_forward.13} parent=5 // pred_fallthru
      _
    %p163 = scmp.le.s32.totalorder 1, %s9
    %p164 = scmp.lt.s32.totalorder %s9, 3
    %p165 = pnand %p163, %p164
    %p166 = pneg %p165
    // Predicated region
    $region29: #{egtea_forward.13} parent=5 // pred_check
      _
    $region30: #{egtea_forward.13} parent=5 // pred_check_branch
      %168 = sbr.rel (%p165) target = $region32
    $region31: #{egtea_forward.13} parent=5 // pred_region
      %s169 = ssub.s32 %s9, 1
      %p170 = scmp.lt.s32.totalorder %s18, 1
      %s171 = scalar_select %p170, %s18, 1
      %p172 = scmp.lt.s32.totalorder %s19, 0
      %s173 = scalar_select %p172, %s19, 0
      %s174 = sadd.s32 %s173, %s171
      %s175 = smul.addr %s174, 4
      %s176 = scalar_lea.vmem %s0, %s175
      %p177 = pneg %p49
      %p178 = pneg %p46
      %s179 = smul.u32 4, %s19
      %p180 = scmp.lt.s32.totalorder %s179, 3
      %s181 = scalar_select %p180, %s179, 3
      %s182 = smul.addr %s181, 4
      %s183 = scalar_lea.vmem %s1, %s182
      %p184 = pneg %p75
      %p185 = pneg %p72
      %p186 = pneg %p96
      %p187 = pneg %p93
      %p188 = pneg %p122
      %p189 = pneg %p119
      %p190 = scmp.lt.s32.totalorder %s18, 1
      %s191 = scalar_select %p190, %s18, 1
      %s192 = smul.addr %s191, 4
      %s193 = scalar_lea.vmem %s3, %s192
      %p194 = scmp.lt.s32.totalorder %s18, 1
      %s195 = scalar_select %p194, %s18, 1
      %p196 = scmp.lt.s32.totalorder %s19, 0
      %s197 = scalar_select %p196, %s19, 0
      %s198 = sadd.s32 %s197, %s195
      %s199 = smul.addr %s198, 4
      %s200 = scalar_lea.vmem %s0, %s199
      %s201 = smul.u32 4, %s19
      %p202 = scmp.lt.s32.totalorder %s201, 3
      %s203 = scalar_select %p202, %s201, 3
      %s204 = smul.addr %s203, 4
      %s205 = scalar_lea.vmem %s1, %s204
      %s206 = smul.u32 4, %s19
      %p207 = scmp.lt.s32.totalorder %s18, 1
      %s208 = scalar_select %p207, %s18, 1
      %s209 = smul.addr %s208, 4
      %s210 = scalar_lea.vmem %s3, %s209
      %p212 = scmp.eq.s32.totalorder %s19, 0
      // Predicated region
      $region33: #{egtea_forward.13} parent=31 // pred_check
        %p213 = pneg %p212
      $region34: #{egtea_forward.13} parent=31 // pred_check_branch
        %215 = sbr.rel (%p213) target = $region36
      $region35: #{egtea_forward.13} parent=31 // pred_region
        %vm216 = vcmask 785408
        %217 = vst.msk [vmem:[#allocation2] sm:$0xff] %vm216, 0.0
      $region36: #{egtea_forward.13} parent=31 // pred_fallthru
        _
      %v218 = vld [vmem:[#allocation2] sm:$0xff]
      %v219 = vld [vmem:[%s200] sm:$0xf]
      %v220 = vld [vmem:[%s205] sm:$0xf]
      %v221 = vld [vmem:[%s205 + $0x4] sm:$0xf]
      %v222 = vld [vmem:[%s205 + $0x8] sm:$0xf]
      %v223 = vld [vmem:[%s205 + $0xc] sm:$0xf]
      %v228 = vunpack.c.l.b16 %v220
      %v229 = vunpack.c.l.b16 %v221
      %v230 = vunpack.c.l.b16 %v222
      %v231 = vunpack.c.l.b16 %v223
      %v232 = vpack.c.b16 %v229, %v228
      %v233 = vpack.c.b16 %v231, %v230
      %vm236 = vcmask 261120
      %v238 = vsel %vm236, %v219, 0
      %240 = vmatpush.bf16.msra.mxu0 0
      %241 = vmatpush.bf16.msra.mxu0 0
      %242 = vmatpush.bf16.msra.mxu0 0
      %243 = vmatpush.bf16.msra.mxu0 0
      %244 = vmatpush.bf16.msra.mxu0 0
      %245 = vmatpush.bf16.msra.mxu0 0
      %246 = vmatpush.bf16.msra.mxu0 %v233
      %247 = vmatpush.bf16.msra.mxu0 %v232
      %248 = vmatmul.bf16.gmra.mxu0 %v238
      %v249 = vpop.f32.mrf.mxu0
      %v250 = vadd.f32 0.0, %v249
      %v251 = vpop.f32.mrf.mxu0
      %252 = vdwg.mxu0
      %v253 = vadd.f32 %v218, %v250
      %vm254 = vcmask 785408
      %255 = vst.msk [vmem:[#allocation2] sm:$0xff] %vm254, %v253
      // Predicated region
      $region37: #{egtea_forward.13} parent=31 // pred_check
        %p256 = pneg %p212
      $region38: #{egtea_forward.13} parent=31 // pred_check_branch
        %258 = sbr.rel (%p256) target = $region40
      $region39: #{egtea_forward.13} parent=31 // pred_region
        %v259 = vld [vmem:[#allocation2] sm:$0xff]
        %v260 = vld [vmem:[%s2] sm:$0x1]
        %v262 = vperm.slane %v260, 0
        %v264 = vadd.f32 %v259, %v262
        %v265 = vpack.c.bf16 %v264, %v264
        %vm266 = vcmask 781312
        %267 = vst.msk [vmem:[%s210] sm:$0xf] %vm266, %v265
      $region40: #{egtea_forward.13} parent=31 // pred_fallthru
        _
      %p268 = scmp.lt.s32.totalorder %s18, 1
      %s269 = scalar_select %p268, %s18, 1
      %s270 = smul.addr %s269, 4
      %s271 = scalar_lea.vmem %s3, %s270
      // Predicated region
      $region41: #{egtea_forward.13} parent=31 // pred_check
        %p272 = pneg %p119
      $region42: #{egtea_forward.13} parent=31 // pred_check_branch
        %274 = sbr.rel (%p272) target = $region44
      $region43: #{egtea_forward.13} parent=31 // pred_region
        _
      $region44: #{egtea_forward.13} parent=31 // pred_fallthru
        _
    $region32: #{egtea_forward.13} parent=5 // pred_fallthru
      _
    %p275 = scmp.le.s32.totalorder 2, %s9
    // Predicated region
    $region45: #{egtea_forward.13} parent=5 // pred_check
      %p276 = pneg %p275
    $region46: #{egtea_forward.13} parent=5 // pred_check_branch
      %278 = sbr.rel (%p276) target = $region48
    $region47: #{egtea_forward.13} parent=5 // pred_region
      %s279 = ssub.s32 %s9, 2
      // Predicated region
      $region49: #{egtea_forward.13} parent=47 // pred_check
        %p280 = pneg %p125
      $region50: #{egtea_forward.13} parent=47 // pred_check_branch
        %282 = sbr.rel (%p280) target = $region52
      $region51: #{egtea_forward.13} parent=47 // pred_region
        %p283 = scmp.lt.s32.totalorder %s20, 1
        %s284 = scalar_select %p283, %s20, 1
        %s285 = smul.addr %s284, 4
        %s286 = scalar_lea.vmem %s3, %s285
      $region52: #{egtea_forward.13} parent=47 // pred_fallthru
        _
    $region48: #{egtea_forward.13} parent=5 // pred_fallthru
      _
  $region6: #{egtea_forward.13} parent=0 // loop_footer
    %s13 = sadd.s32 1, %s9
  $region7: #{egtea_forward.13} parent=0 // loop_footer_branch
    %8 = sbr.rel target = $region3
  $region8: #{egtea_forward.13} parent=0 // loop_exit
    _

// kernel: egtea_forward.14
$region0: #{egtea_forward.14}
  #allocation0 [shape = 'u32[]', space=smem, size = 0x4, offset = 0x4, fixed_abs, tag = 'smem constant byte address 0x4 - core index']
  #allocation1 [shape = 'u32[72,128]{1,0:T(1,128)}', space=vmem, size = 0x9000, scoped, tag = 'internal scratch']
  %s0 = inlined_call_operand.vmem [shape: bf16[2,8,96], index: 0, kind: input, shape index: {}, may-alias: {0,1}]
  %s1 = inlined_call_operand.vmem [shape: bf16[2,8,96], index: 1, kind: input, shape index: {}, may-alias: {0,1}]
  %s2 = inlined_call_operand.vmem [shape: f32[2,1,8], index: 2, kind: input, shape index: {}]
  %s3 = inlined_call_operand.vmem [shape: bf16[2,8,32], index: 3, kind: output, shape index: {}]
  %s4 = sld [smem:[#allocation0]]
  $region45: #{egtea_forward.14} parent=0
    _
  %s6 = ssub.s32 1, %s4
  %s7 = scalar_select 0, %s6, %s4
  loop: start=0, step=1, limit=4
  $region2: #{egtea_forward.14} parent=0 // loop_pre_header
    _
  $region3: #{egtea_forward.14} parent=0 // loop_header
    %s9 = sphi 0, %s13
    %p10 = scmp.ge.s32.totalorder %s9, 4
    %s16 = sphi 0, %s28
    %s17 = sphi 0, %s24
    %s18 = sphi 0, %s16
    %s19 = sphi 0, %s17
    %s20 = sphi 0, %s18
    %s21 = sphi 0, %s19
    %s33 = sphi 0, %s35
    %s36 = sphi 0, %s33
    %s37 = sphi 0, %s36
    %s53 = sphi 0, %s37
    %s59 = sphi 0, %s61
    %s62 = sphi 0, %s59
    %s63 = sphi 0, %s62
    %s79 = sphi 0, %s63
    %s85 = sphi 0, %s87
    %s88 = sphi 0, %s85
    %s89 = sphi 0, %s88
    %s105 = sphi 0, %s89
    %s113 = sphi 0, %s115
    %s116 = sphi 0, %s113
    %s117 = sphi 0, %s116
    %s133 = sphi 0, %s117
  $region4: #{egtea_forward.14} parent=0 // loop_header_branch
    %12 = sbr.rel (%p10) target = $region8
  $region5: #{egtea_forward.14} parent=0 // loop_body
    %s14 = ssub.s32 %s9, 1
    %s15 = ssub.s32 %s9, 2
    %s22 = sadd.s32 1, %s17
    %p23 = scmp.ge.s32.totalorder %s22, 1
    %s24 = scalar_select %p23, 0, %s22
    %s25 = sadd.s32 1, %s16
    %s26 = scalar_select %p23, %s25, %s16
    %p27 = scmp.ge.s32.totalorder %s26, 2
    %s28 = scalar_select %p27, 0, %s26
    %s29 = ssub.s32 %s16, %s28
    %s30 = ssub.s32 %s17, %s24
    %s31 = sor.u32 %s29, %s30
    %p32 = scmp.eq.s32.totalorder %s31, 0
    %s34 = sadd.s32 %s33, 1
    %s35 = scalar_select %p32, %s33, %s34
    %p38 = pneg %p32
    %p39 = scmp.eq.s32.totalorder %s9, 1
    %p40 = por %p38, %p39
    %p41 = scmp.ne.s32.totalorder %s33, %s36
    %p42 = scmp.eq.s32.totalorder %s9, 0
    %p43 = por %p41, %p42
    %p44 = scmp.ne.s32.totalorder %s33, %s36
    %p45 = scmp.eq.s32.totalorder %s14, 1
    %p46 = por %p44, %p45
    %p47 = scmp.ne.s32.totalorder %s36, %s37
    %p48 = scmp.eq.s32.totalorder %s14, 0
    %p49 = por %p47, %p48
    %p50 = scmp.ne.s32.totalorder %s36, %s37
    %p51 = scmp.eq.s32.totalorder %s15, 1
    %p52 = por %p50, %p51
    %p54 = scmp.ne.s32.totalorder %s37, %s53
    %p55 = scmp.eq.s32.totalorder %s15, 0
    %p56 = por %p54, %p55
    %s57 = ssub.s32 %s16, %s28
    %p58 = scmp.eq.s32.totalorder %s57, 0
    %s60 = sadd.s32 %s59, 1
    %s61 = scalar_select %p58, %s59, %s60
    %p64 = pneg %p58
    %p65 = scmp.eq.s32.totalorder %s9, 1
    %p66 = por %p64, %p65
    %p67 = scmp.ne.s32.totalorder %s59, %s62
    %p68 = scmp.eq.s32.totalorder %s9, 0
    %p69 = por %p67, %p68
    %p70 = scmp.ne.s32.totalorder %s59, %s62
    %p71 = scmp.eq.s32.totalorder %s14, 1
    %p72 = por %p70, %p71
    %p73 = scmp.ne.s32.totalorder %s62, %s63
    %p74 = scmp.eq.s32.totalorder %s14, 0
    %p75 = por %p73, %p74
    %p76 = scmp.ne.s32.totalorder %s62, %s63
    %p77 = scmp.eq.s32.totalorder %s15, 1
    %p78 = por %p76, %p77
    %p80 = scmp.ne.s32.totalorder %s63, %s79
    %p81 = scmp.eq.s32.totalorder %s15, 0
    %p82 = por %p80, %p81
    %s83 = ssub.s32 %s16, %s28
    %p84 = scmp.eq.s32.totalorder %s83, 0
    %s86 = sadd.s32 %s85, 1
    %s87 = scalar_select %p84, %s85, %s86
    %p90 = pneg %p84
    %p91 = scmp.eq.s32.totalorder %s9, 1
    %p92 = por %p90, %p91
    %p93 = scmp.ne.s32.totalorder %s85, %s88
    %p94 = scmp.eq.s32.totalorder %s9, 0
    %p95 = por %p93, %p94
    %p96 = scmp.ne.s32.totalorder %s85, %s88
    %p97 = scmp.eq.s32.totalorder %s14, 1
    %p98 = por %p96, %p97
    %p99 = scmp.ne.s32.totalorder %s88, %s89
    %p100 = scmp.eq.s32.totalorder %s14, 0
    %p101 = por %p99, %p100
    %p102 = scmp.ne.s32.totalorder %s88, %s89
    %p103 = scmp.eq.s32.totalorder %s15, 1
    %p104 = por %p102, %p103
    %p106 = scmp.ne.s32.totalorder %s89, %s105
    %p107 = scmp.eq.s32.totalorder %s15, 0
    %p108 = por %p106, %p107
    %s109 = ssub.s32 %s16, %s28
    %s110 = ssub.s32 %s17, %s24
    %s111 = sor.u32 %s109, %s110
    %p112 = scmp.eq.s32.totalorder %s111, 0
    %s114 = sadd.s32 %s113, 1
    %s115 = scalar_select %p112, %s113, %s114
    %p118 = pneg %p112
    %p119 = scmp.eq.s32.totalorder %s9, 1
    %p120 = por %p118, %p119
    %p121 = scmp.ne.s32.totalorder %s113, %s116
    %p122 = scmp.eq.s32.totalorder %s9, 0
    %p123 = por %p121, %p122
    %p124 = scmp.ne.s32.totalorder %s113, %s116
    %p125 = scmp.eq.s32.totalorder %s14, 1
    %p126 = por %p124, %p125
    %p127 = scmp.ne.s32.totalorder %s116, %s117
    %p128 = scmp.eq.s32.totalorder %s14, 0
    %p129 = por %p127, %p128
    %p130 = scmp.ne.s32.totalorder %s116, %s117
    %p131 = scmp.eq.s32.totalorder %s15, 1
    %p132 = por %p130, %p131
    %p134 = scmp.ne.s32.totalorder %s117, %s133
    %p135 = scmp.eq.s32.totalorder %s15, 0
    %p136 = por %p134, %p135
    %p137 = scmp.le.s32.totalorder 1, %s9
    %p138 = scmp.lt.s32.totalorder %s9, 3
    %p139 = pnand %p137, %p138
    %p140 = pneg %p139
    // Predicated region
    $region9: #{egtea_forward.14} parent=5 // pred_check
      _
    $region10: #{egtea_forward.14} parent=5 // pred_check_branch
      %142 = sbr.rel (%p139) target = $region12
    $region11: #{egtea_forward.14} parent=5 // pred_region
      %s143 = ssub.s32 %s9, 1
    $region12: #{egtea_forward.14} parent=5 // pred_fallthru
      _
    %p144 = scmp.lt.s32.totalorder %s9, 2
    // Predicated region
    $region13: #{egtea_forward.14} parent=5 // pred_check
      %p145 = pneg %p144
    $region14: #{egtea_forward.14} parent=5 // pred_check_branch
      %147 = sbr.rel (%p145) target = $region16
    $region15: #{egtea_forward.14} parent=5 // pred_region
      // Predicated region
      $region17: #{egtea_forward.14} parent=15 // pred_check
        %p148 = pneg %p43
      $region18: #{egtea_forward.14} parent=15 // pred_check_branch
        %150 = sbr.rel (%p148) target = $region20
      $region19: #{egtea_forward.14} parent=15 // pred_region
        %p151 = scmp.lt.s32.totalorder %s16, 1
        %s152 = scalar_select %p151, %s16, 1
        %p153 = scmp.lt.s32.totalorder %s17, 0
        %s154 = scalar_select %p153, %s17, 0
        %s155 = sadd.s32 %s154, %s152
        %s156 = smul.addr %s155, 4
        %s157 = scalar_lea.vmem %s0, %s156
      $region20: #{egtea_forward.14} parent=15 // pred_fallthru
        _
      // Predicated region
      $region21: #{egtea_forward.14} parent=15 // pred_check
        %p158 = pneg %p69
      $region22: #{egtea_forward.14} parent=15 // pred_check_branch
        %160 = sbr.rel (%p158) target = $region24
      $region23: #{egtea_forward.14} parent=15 // pred_region
        %p161 = scmp.lt.s32.totalorder %s16, 1
        %s162 = scalar_select %p161, %s16, 1
        %s163 = smul.addr %s162, 4
        %s164 = scalar_lea.vmem %s1, %s163
      $region24: #{egtea_forward.14} parent=15 // pred_fallthru
        _
      // Predicated region
      $region25: #{egtea_forward.14} parent=15 // pred_check
        %p165 = pneg %p95
      $region26: #{egtea_forward.14} parent=15 // pred_check_branch
        %167 = sbr.rel (%p165) target = $region28
      $region27: #{egtea_forward.14} parent=15 // pred_region
        %p168 = scmp.lt.s32.totalorder %s16, 1
        %s169 = scalar_select %p168, %s16, 1
        %s170 = scalar_lea.vmem %s2, %s169
      $region28: #{egtea_forward.14} parent=15 // pred_fallthru
        _
    $region16: #{egtea_forward.14} parent=5 // pred_fallthru
      _
    %p171 = scmp.le.s32.totalorder 1, %s9
    %p172 = scmp.lt.s32.totalorder %s9, 3
    %p173 = pnand %p171, %p172
    %p174 = pneg %p173
    // Predicated region
    $region29: #{egtea_forward.14} parent=5 // pred_check
      _
    $region30: #{egtea_forward.14} parent=5 // pred_check_branch
      %176 = sbr.rel (%p173) target = $region32
    $region31: #{egtea_forward.14} parent=5 // pred_region
      %s177 = ssub.s32 %s9, 1
      %p178 = scmp.lt.s32.totalorder %s18, 1
      %s179 = scalar_select %p178, %s18, 1
      %p180 = scmp.lt.s32.totalorder %s19, 0
      %s181 = scalar_select %p180, %s19, 0
      %s182 = sadd.s32 %s181, %s179
      %s183 = smul.addr %s182, 4
      %s184 = scalar_lea.vmem %s0, %s183
      %p185 = pneg %p49
      %p186 = pneg %p46
      %p187 = scmp.lt.s32.totalorder %s18, 1
      %s188 = scalar_select %p187, %s18, 1
      %s189 = smul.addr %s188, 4
      %s190 = scalar_lea.vmem %s1, %s189
      %p191 = pneg %p75
      %p192 = pneg %p72
      %p193 = scmp.lt.s32.totalorder %s18, 1
      %s194 = scalar_select %p193, %s18, 1
      %s195 = scalar_lea.vmem %s2, %s194
      %p196 = pneg %p101
      %p197 = pneg %p98
      %p198 = pneg %p129
      %p199 = pneg %p126
      %p200 = scmp.lt.s32.totalorder %s18, 1
      %s201 = scalar_select %p200, %s18, 1
      %p202 = scmp.lt.s32.totalorder %s19, 0
      %s203 = scalar_select %p202, %s19, 0
      %s204 = sadd.s32 %s203, %s201
      %s205 = smul.addr %s204, 4
      %s206 = scalar_lea.vmem %s3, %s205
      %p207 = scmp.lt.s32.totalorder %s18, 1
      %s208 = scalar_select %p207, %s18, 1
      %p209 = scmp.lt.s32.totalorder %s19, 0
      %s210 = scalar_select %p209, %s19, 0
      %s211 = sadd.s32 %s210, %s208
      %s212 = smul.addr %s211, 4
      %s213 = scalar_lea.vmem %s0, %s212
      %p214 = scmp.lt.s32.totalorder %s18, 1
      %s215 = scalar_select %p214, %s18, 1
      %s216 = smul.addr %s215, 4
      %s217 = scalar_lea.vmem %s1, %s216
      %p218 = scmp.lt.s32.totalorder %s18, 1
      %s219 = scalar_select %p218, %s18, 1
      %s220 = scalar_lea.vmem %s2, %s219
      %p221 = scmp.lt.s32.totalorder %s18, 1
      %s222 = scalar_select %p221, %s18, 1
      %p223 = scmp.lt.s32.totalorder %s19, 0
      %s224 = scalar_select %p223, %s19, 0
      %s225 = sadd.s32 %s224, %s222
      %s226 = smul.addr %s225, 4
      %s227 = scalar_lea.vmem %s3, %s226
      %v229 = vld [vmem:[%s220] sm:$0x1]
      %v230 = vld [vmem:[%s213] sm:$0xf]
      %v231 = vunpack.c.l.bf16 %v230
      %v232 = vmul.f32 %v231, 0.25
      %v233 = vpack.c.bf16 %v232, %v232
      %v234 = vld [vmem:[%s217] sm:$0xf]
      %v236 = vperm.slane %v229, 0
      %v239 = vunpack.c.l.b16 %v234
      %v240 = vpack.c.b16 %v239, %v239
      %241 = vrot.lane.b32.xlu0 %v240, 96
      %v242 = vpop.permute.xlu0 %241
      %vm243 = vcmask 130048
      %v245 = vsel %vm243, %v233, 0
      %v248 = vsel %vm243, %v242, 0
      %250 = vmatpush.bf16.xpose.msra.mxu0 0
      %251 = vmatpush.bf16.xpose.msra.mxu0 0
      %252 = vmatpush.bf16.xpose.msra.mxu0 0
      %253 = vmatpush.bf16.xpose.msra.mxu0 0
      %254 = vmatpush.bf16.xpose.msra.mxu0 0
      %255 = vmatpush.bf16.xpose.msra.mxu0 0
      %256 = vmatpush.bf16.xpose.msra.mxu0 0
      %257 = vmatpush.bf16.xpose.msra.mxu0 %v248
      %258 = vmatmul.bf16.gmra.mxu0 %v245
      %v259 = vpop.f32.mrf.mxu0
      %v260 = vadd.f32 %v236, %v259
      %v261 = vpop.f32.mrf.mxu0
      %262 = vdwg.mxu0
      %vm263 = vcmask 64512
      %v264 = vsel %vm263, %v260, -inf
      %265 = vmax.xlane.f32.xlu0 %v264
      %v266 = vpop.xlane.xlu0 %265
      %v267 = vsub.f32 %v260, %v266
      %v268 = vmul.f32 %v267, 1.442695
      %v269 = vpow.pop %v268
      %v270 = vsel %vm263, %v269, 0.0
      %271 = vadd.xlane.f32.xlu0 %v270
      %v272 = vpop.xlane.xlu0 %271
      %v273 = vrcp.pop %v272
      %v274 = vmul.f32 %v269, %v273
      %v275 = vpack.c.bf16 %v274, %v274
      %276 = vrot.lane.b32.xlu0 %v240, 64
      %v277 = vpop.permute.xlu0 %276
      %v279 = vsel %vm263, %v275, 0
      %vm281 = vcmask 1043456
      %v283 = vsel %vm281, %v277, 0
      %285 = vmatpush.bf16.msra.mxu0 0
      %286 = vmatpush.bf16.msra.mxu0 0
      %287 = vmatpush.bf16.msra.mxu0 0
      %288 = vmatpush.bf16.msra.mxu0 0
      %289 = vmatpush.bf16.msra.mxu0 0
      %290 = vmatpush.bf16.msra.mxu0 0
      %291 = vmatpush.bf16.msra.mxu0 0
      %292 = vmatpush.bf16.msra.mxu0 %v283
      %293 = vmatmul.bf16.gmra.mxu0 %v279
      %v294 = vpop.f32.mrf.mxu0
      %v295 = vadd.f32 0.0, %v294
      %v296 = vpop.f32.mrf.mxu0
      %297 = vdwg.mxu0
      %299 = vrot.lane.b32.xlu0 %v233, 112
      %v300 = vpop.permute.xlu0 %299
      %301 = vrot.lane.b32.xlu0 %v240, 80
      %v302 = vpop.permute.xlu0 %301
      %v304 = vsel %vm243, %v300, 0
      %v307 = vsel %vm243, %v302, 0
      %309 = vmatpush.bf16.xpose.msra.mxu0 0
      %310 = vmatpush.bf16.xpose.msra.mxu0 0
      %311 = vmatpush.bf16.xpose.msra.mxu0 0
      %312 = vmatpush.bf16.xpose.msra.mxu0 0
      %313 = vmatpush.bf16.xpose.msra.mxu0 0
      %314 = vmatpush.bf16.xpose.msra.mxu0 0
      %315 = vmatpush.bf16.xpose.msra.mxu0 0
      %316 = vmatpush.bf16.xpose.msra.mxu0 %v307
      %317 = vmatmul.bf16.gmra.mxu0 %v304
      %v318 = vpop.f32.mrf.mxu0
      %v319 = vadd.f32 %v236, %v318
      %v320 = vpop.f32.mrf.mxu0
      %321 = vdwg.mxu0
      %v322 = vsel %vm263, %v319, -inf
      %323 = vmax.xlane.f32.xlu0 %v322
      %v324 = vpop.xlane.xlu0 %323
      %v325 = vsub.f32 %v319, %v324
      %v326 = vmul.f32 %v325, 1.442695
      %v327 = vpow.pop %v326
      %v328 = vsel %vm263, %v327, 0.0
      %329 = vadd.xlane.f32.xlu0 %v328
      %v330 = vpop.xlane.xlu0 %329
      %v331 = vrcp.pop %v330
      %v332 = vmul.f32 %v327, %v331
      %v333 = vpack.c.bf16 %v332, %v332
      %334 = vrot.lane.b32.xlu0 %v240, 48
      %v335 = vpop.permute.xlu0 %334
      %v337 = vsel %vm263, %v333, 0
      %v340 = vsel %vm281, %v335, 0
      %342 = vmatpush.bf16.msra.mxu0 0
      %343 = vmatpush.bf16.msra.mxu0 0
      %344 = vmatpush.bf16.msra.mxu0 0
      %345 = vmatpush.bf16.msra.mxu0 0
      %346 = vmatpush.bf16.msra.mxu0 0
      %347 = vmatpush.bf16.msra.mxu0 0
      %348 = vmatpush.bf16.msra.mxu0 0
      %349 = vmatpush.bf16.msra.mxu0 %v340
      %350 = vmatmul.bf16.gmra.mxu0 %v337
      %v351 = vpop.f32.mrf.mxu0
      %v352 = vadd.f32 0.0, %v351
      %v353 = vpop.f32.mrf.mxu0
      %354 = vdwg.mxu0
      %356 = vrot.lane.b32.xlu0 %v352, 16
      %v357 = vpop.permute.xlu0 %356
      %v359 = vsel %vm243, %v295, %v357
      %v360 = vpack.c.bf16 %v359, %v359
      %vm361 = vcmask 257024
      %362 = vst.msk [vmem:[%s227] sm:$0xf] %vm361, %v360
      %p363 = scmp.lt.s32.totalorder %s18, 1
      %s364 = scalar_select %p363, %s18, 1
      %p365 = scmp.lt.s32.totalorder %s19, 0
      %s366 = scalar_select %p365, %s19, 0
      %s367 = sadd.s32 %s366, %s364
      %s368 = smul.addr %s367, 4
      %s369 = scalar_lea.vmem %s3, %s368
      // Predicated region
      $region33: #{egtea_forward.14} parent=31 // pred_check
        %p370 = pneg %p126
      $region34: #{egtea_forward.14} parent=31 // pred_check_branch
        %372 = sbr.rel (%p370) target = $region36
      $region35: #{egtea_forward.14} parent=31 // pred_region
        _
      $region36: #{egtea_forward.14} parent=31 // pred_fallthru
        _
    $region32: #{egtea_forward.14} parent=5 // pred_fallthru
      _
    %p373 = scmp.le.s32.totalorder 2, %s9
    // Predicated region
    $region37: #{egtea_forward.14} parent=5 // pred_check
      %p374 = pneg %p373
    $region38: #{egtea_forward.14} parent=5 // pred_check_branch
      %376 = sbr.rel (%p374) target = $region40
    $region39: #{egtea_forward.14} parent=5 // pred_region
      %s377 = ssub.s32 %s9, 2
      // Predicated region
      $region41: #{egtea_forward.14} parent=39 // pred_check
        %p378 = pneg %p132
      $region42: #{egtea_forward.14} parent=39 // pred_check_branch
        %380 = sbr.rel (%p378) target = $region44
      $region43: #{egtea_forward.14} parent=39 // pred_region
        %p381 = scmp.lt.s32.totalorder %s20, 1
        %s382 = scalar_select %p381, %s20, 1
        %p383 = scmp.lt.s32.totalorder %s21, 0
        %s384 = scalar_select %p383, %s21, 0
        %s385 = sadd.s32 %s384, %s382
        %s386 = smul.addr %s385, 4
        %s387 = scalar_lea.vmem %s3, %s386
      $region44: #{egtea_forward.14} parent=39 // pred_fallthru
        _
    $region40: #{egtea_forward.14} parent=5 // pred_fallthru
      _
  $region6: #{egtea_forward.14} parent=0 // loop_footer
    %s13 = sadd.s32 1, %s9
  $region7: #{egtea_forward.14} parent=0 // loop_footer_branch
    %8 = sbr.rel target = $region3
  $region8: #{egtea_forward.14} parent=0 // loop_exit
    _

// kernel: egtea_forward.16
$region0: #{egtea_forward.16}
  #allocation0 [shape = 'u32[]', space=smem, size = 0x4, offset = 0x4, fixed_abs, tag = 'smem constant byte address 0x4 - core index']
  #allocation1 [shape = 'u32[72,128]{1,0:T(1,128)}', space=vmem, size = 0x9000, scoped, tag = 'internal scratch']
  #allocation2 [shape = 'f32[8,64]{1,0:T(8,128)}', space=vmem, size = 0x1000, scoped, tag = 'scratch operand']
  %s0 = inlined_call_operand.vmem [shape: bf16[16,32], index: 0, kind: input, shape index: {}]
  %s1 = inlined_call_operand.vmem [shape: bf16[32,64], index: 1, kind: input, shape index: {}]
  %s2 = inlined_call_operand.vmem [shape: f32[1,64], index: 2, kind: input, shape index: {}]
  %s3 = inlined_call_operand.vmem [shape: bf16[16,64], index: 3, kind: output, shape index: {}]
  %s4 = sld [smem:[#allocation0]]
  $region53: #{egtea_forward.16} parent=0
    _
  %s6 = ssub.s32 1, %s4
  %s7 = scalar_select 0, %s6, %s4
  loop: start=0, step=1, limit=4
  $region2: #{egtea_forward.16} parent=0 // loop_pre_header
    _
  $region3: #{egtea_forward.16} parent=0 // loop_header
    %s9 = sphi 0, %s13
    %p10 = scmp.ge.s32.totalorder %s9, 4
    %s16 = sphi 0, %s28
    %s17 = sphi 0, %s24
    %s18 = sphi 0, %s16
    %s19 = sphi 0, %s17
    %s20 = sphi 0, %s18
    %s21 = sphi 0, %s19
    %s33 = sphi 0, %s35
    %s36 = sphi 0, %s33
    %s37 = sphi 0, %s36
    %s53 = sphi 0, %s37
    %s59 = sphi 0, %s61
    %s62 = sphi 0, %s59
    %s63 = sphi 0, %s62
    %s79 = sphi 0, %s63
    %s83 = sphi 0, %s83
    %s85 = sphi 0, %s83
    %s86 = sphi 0, %s85
    %s100 = sphi 0, %s86
    %s106 = sphi 0, %s108
    %s109 = sphi 0, %s106
    %s110 = sphi 0, %s109
    %s126 = sphi 0, %s110
  $region4: #{egtea_forward.16} parent=0 // loop_header_branch
    %12 = sbr.rel (%p10) target = $region8
  $region5: #{egtea_forward.16} parent=0 // loop_body
    %s14 = ssub.s32 %s9, 1
    %s15 = ssub.s32 %s9, 2
    %s22 = sadd.s32 1, %s17
    %p23 = scmp.ge.s32.totalorder %s22, 1
    %s24 = scalar_select %p23, 0, %s22
    %s25 = sadd.s32 1, %s16
    %s26 = scalar_select %p23, %s25, %s16
    %p27 = scmp.ge.s32.totalorder %s26, 2
    %s28 = scalar_select %p27, 0, %s26
    %s29 = ssub.s32 %s16, %s28
    %s30 = ssub.s32 %s17, %s24
    %s31 = sor.u32 %s29, %s30
    %p32 = scmp.eq.s32.totalorder %s31, 0
    %s34 = sadd.s32 %s33, 1
    %s35 = scalar_select %p32, %s33, %s34
    %p38 = pneg %p32
    %p39 = scmp.eq.s32.totalorder %s9, 1
    %p40 = por %p38, %p39
    %p41 = scmp.ne.s32.totalorder %s33, %s36
    %p42 = scmp.eq.s32.totalorder %s9, 0
    %p43 = por %p41, %p42
    %p44 = scmp.ne.s32.totalorder %s33, %s36
    %p45 = scmp.eq.s32.totalorder %s14, 1
    %p46 = por %p44, %p45
    %p47 = scmp.ne.s32.totalorder %s36, %s37
    %p48 = scmp.eq.s32.totalorder %s14, 0
    %p49 = por %p47, %p48
    %p50 = scmp.ne.s32.totalorder %s36, %s37
    %p51 = scmp.eq.s32.totalorder %s15, 1
    %p52 = por %p50, %p51
    %p54 = scmp.ne.s32.totalorder %s37, %s53
    %p55 = scmp.eq.s32.totalorder %s15, 0
    %p56 = por %p54, %p55
    %s57 = ssub.s32 %s17, %s24
    %p58 = scmp.eq.s32.totalorder %s57, 0
    %s60 = sadd.s32 %s59, 1
    %s61 = scalar_select %p58, %s59, %s60
    %p64 = pneg %p58
    %p65 = scmp.eq.s32.totalorder %s9, 1
    %p66 = por %p64, %p65
    %p67 = scmp.ne.s32.totalorder %s59, %s62
    %p68 = scmp.eq.s32.totalorder %s9, 0
    %p69 = por %p67, %p68
    %p70 = scmp.ne.s32.totalorder %s59, %s62
    %p71 = scmp.eq.s32.totalorder %s14, 1
    %p72 = por %p70, %p71
    %p73 = scmp.ne.s32.totalorder %s62, %s63
    %p74 = scmp.eq.s32.totalorder %s14, 0
    %p75 = por %p73, %p74
    %p76 = scmp.ne.s32.totalorder %s62, %s63
    %p77 = scmp.eq.s32.totalorder %s15, 1
    %p78 = por %p76, %p77
    %p80 = scmp.ne.s32.totalorder %s63, %s79
    %p81 = scmp.eq.s32.totalorder %s15, 0
    %p82 = por %p80, %p81
    %s84 = sadd.s32 %s83, 1
    %p87 = scmp.eq.s32.totalorder %s9, 1
    %p88 = scmp.ne.s32.totalorder %s83, %s85
    %p89 = scmp.eq.s32.totalorder %s9, 0
    %p90 = por %p88, %p89
    %p91 = scmp.ne.s32.totalorder %s83, %s85
    %p92 = scmp.eq.s32.totalorder %s14, 1
    %p93 = por %p91, %p92
    %p94 = scmp.ne.s32.totalorder %s85, %s86
    %p95 = scmp.eq.s32.totalorder %s14, 0
    %p96 = por %p94, %p95
    %p97 = scmp.ne.s32.totalorder %s85, %s86
    %p98 = scmp.eq.s32.totalorder %s15, 1
    %p99 = por %p97, %p98
    %p101 = scmp.ne.s32.totalorder %s86, %s100
    %p102 = scmp.eq.s32.totalorder %s15, 0
    %p103 = por %p101, %p102
    %s104 = ssub.s32 %s16, %s28
    %p105 = scmp.eq.s32.totalorder %s104, 0
    %s107 = sadd.s32 %s106, 1
    %s108 = scalar_select %p105, %s106, %s107
    %p111 = pneg %p105
    %p112 = scmp.eq.s32.totalorder %s9, 1
    %p113 = por %p111, %p112
    %p114 = scmp.ne.s32.totalorder %s106, %s109
    %p115 = scmp.eq.s32.totalorder %s9, 0
    %p116 = por %p114, %p115
    %p117 = scmp.ne.s32.totalorder %s106, %s109
    %p118 = scmp.eq.s32.totalorder %s14, 1
    %p119 = por %p117, %p118
    %p120 = scmp.ne.s32.totalorder %s109, %s110
    %p121 = scmp.eq.s32.totalorder %s14, 0
    %p122 = por %p120, %p121
    %p123 = scmp.ne.s32.totalorder %s109, %s110
    %p124 = scmp.eq.s32.totalorder %s15, 1
    %p125 = por %p123, %p124
    %p127 = scmp.ne.s32.totalorder %s110, %s126
    %p128 = scmp.eq.s32.totalorder %s15, 0
    %p129 = por %p127, %p128
    %p130 = scmp.le.s32.totalorder 1, %s9
    %p131 = scmp.lt.s32.totalorder %s9, 3
    %p132 = pnand %p130, %p131
    %p133 = pneg %p132
    // Predicated region
    $region9: #{egtea_forward.16} parent=5 // pred_check
      _
    $region10: #{egtea_forward.16} parent=5 // pred_check_branch
      %135 = sbr.rel (%p132) target = $region12
    $region11: #{egtea_forward.16} parent=5 // pred_region
      %s136 = ssub.s32 %s9, 1
      // Predicated region
      $region13: #{egtea_forward.16} parent=11 // pred_check
        %p137 = pneg %p75
      $region14: #{egtea_forward.16} parent=11 // pred_check_branch
        %139 = sbr.rel (%p137) target = $region16
      $region15: #{egtea_forward.16} parent=11 // pred_region
        %s140 = smul.u32 4, %s19
        %p141 = scmp.lt.s32.totalorder %s140, 3
        %s142 = scalar_select %p141, %s140, 3
        %s143 = smul.addr %s142, 4
        %s144 = scalar_lea.vmem %s1, %s143
        %s145 = smul.u32 4, %s19
      $region16: #{egtea_forward.16} parent=11 // pred_fallthru
        _
      // Predicated region
      $region17: #{egtea_forward.16} parent=11 // pred_check
        %p146 = pneg %p96
      $region18: #{egtea_forward.16} parent=11 // pred_check_branch
        %148 = sbr.rel (%p146) target = $region20
      $region19: #{egtea_forward.16} parent=11 // pred_region
        _
      $region20: #{egtea_forward.16} parent=11 // pred_fallthru
        _
    $region12: #{egtea_forward.16} parent=5 // pred_fallthru
      _
    %p149 = scmp.lt.s32.totalorder %s9, 2
    // Predicated region
    $region21: #{egtea_forward.16} parent=5 // pred_check
      %p150 = pneg %p149
    $region22: #{egtea_forward.16} parent=5 // pred_check_branch
      %152 = sbr.rel (%p150) target = $region24
    $region23: #{egtea_forward.16} parent=5 // pred_region
      // Predicated region
      $region25: #{egtea_forward.16} parent=23 // pred_check
        %p153 = pneg %p43
      $region26: #{egtea_forward.16} parent=23 // pred_check_branch
        %155 = sbr.rel (%p153) target = $region28
      $region27: #{egtea_forward.16} parent=23 // pred_region
        %p156 = scmp.lt.s32.totalorder %s16, 1
        %s157 = scalar_select %p156, %s16, 1
        %p158 = scmp.lt.s32.totalorder %s17, 0
        %s159 = scalar_select %p158, %s17, 0
        %s160 = sadd.s32 %s159, %s157
        %s161 = smul.addr %s160, 4
        %s162 = scalar_lea.vmem %s0, %s161
      $region28: #{egtea_forward.16} parent=23 // pred_fallthru
        _
    $region24: #{egtea_forward.16} parent=5 // pred_fallthru
      _
    %p163 = scmp.le.s32.totalorder 1, %s9
    %p164 = scmp.lt.s32.totalorder %s9, 3
    %p165 = pnand %p163, %p164
    %p166 = pneg %p165
    // Predicated region
    $region29: #{egtea_forward.16} parent=5 // pred_check
      _
    $region30: #{egtea_forward.16} parent=5 // pred_check_branch
      %168 = sbr.rel (%p165) target = $region32
    $region31: #{egtea_forward.16} parent=5 // pred_region
      %s169 = ssub.s32 %s9, 1
      %p170 = scmp.lt.s32.totalorder %s18, 1
      %s171 = scalar_select %p170, %s18, 1
      %p172 = scmp.lt.s32.totalorder %s19, 0
      %s173 = scalar_select %p172, %s19, 0
      %s174 = sadd.s32 %s173, %s171
      %s175 = smul.addr %s174, 4
      %s176 = scalar_lea.vmem %s0, %s175
      %p177 = pneg %p49
      %p178 = pneg %p46
      %s179 = smul.u32 4, %s19
      %p180 = scmp.lt.s32.totalorder %s179, 3
      %s181 = scalar_select %p180, %s179, 3
      %s182 = smul.addr %s181, 4
      %s183 = scalar_lea.vmem %s1, %s182
      %p184 = pneg %p75
      %p185 = pneg %p72
      %p186 = pneg %p96
      %p187 = pneg %p93
      %p188 = pneg %p122
      %p189 = pneg %p119
      %p190 = scmp.lt.s32.totalorder %s18, 1
      %s191 = scalar_select %p190, %s18, 1
      %s192 = smul.addr %s191, 4
      %s193 = scalar_lea.vmem %s3, %s192
      %p194 = scmp.lt.s32.totalorder %s18, 1
      %s195 = scalar_select %p194, %s18, 1
      %p196 = scmp.lt.s32.totalorder %s19, 0
      %s197 = scalar_select %p196, %s19, 0
      %s198 = sadd.s32 %s197, %s195
      %s199 = smul.addr %s198, 4
      %s200 = scalar_lea.vmem %s0, %s199
      %s201 = smul.u32 4, %s19
      %p202 = scmp.lt.s32.totalorder %s201, 3
      %s203 = scalar_select %p202, %s201, 3
      %s204 = smul.addr %s203, 4
      %s205 = scalar_lea.vmem %s1, %s204
      %s206 = smul.u32 4, %s19
      %p207 = scmp.lt.s32.totalorder %s18, 1
      %s208 = scalar_select %p207, %s18, 1
      %s209 = smul.addr %s208, 4
      %s210 = scalar_lea.vmem %s3, %s209
      %p212 = scmp.eq.s32.totalorder %s19, 0
      // Predicated region
      $region33: #{egtea_forward.16} parent=31 // pred_check
        %p213 = pneg %p212
      $region34: #{egtea_forward.16} parent=31 // pred_check_branch
        %215 = sbr.rel (%p213) target = $region36
      $region35: #{egtea_forward.16} parent=31 // pred_region
        %vm216 = vcmask 523264
        %217 = vst.msk [vmem:[#allocation2] sm:$0xff] %vm216, 0.0
      $region36: #{egtea_forward.16} parent=31 // pred_fallthru
        _
      %v218 = vld [vmem:[#allocation2] sm:$0xff]
      %v219 = vld [vmem:[%s200] sm:$0xf]
      %v220 = vld [vmem:[%s205] sm:$0xf]
      %v221 = vld [vmem:[%s205 + $0x4] sm:$0xf]
      %v222 = vld [vmem:[%s205 + $0x8] sm:$0xf]
      %v223 = vld [vmem:[%s205 + $0xc] sm:$0xf]
      %v228 = vunpack.c.l.b16 %v220
      %v229 = vunpack.c.l.b16 %v221
      %v230 = vunpack.c.l.b16 %v222
      %v231 = vunpack.c.l.b16 %v223
      %v232 = vpack.c.b16 %v229, %v228
      %v233 = vpack.c.b16 %v231, %v230
      %vm236 = vcmask 261120
      %v238 = vsel %vm236, %v219, 0
      %240 = vmatpush.bf16.msra.mxu0 0
      %241 = vmatpush.bf16.msra.mxu0 0
      %242 = vmatpush.bf16.msra.mxu0 0
      %243 = vmatpush.bf16.msra.mxu0 0
      %244 = vmatpush.bf16.msra.mxu0 0
      %245 = vmatpush.bf16.msra.mxu0 0
      %246 = vmatpush.bf16.msra.mxu0 %v233
      %247 = vmatpush.bf16.msra.mxu0 %v232
      %248 = vmatmul.bf16.gmra.mxu0 %v238
      %v249 = vpop.f32.mrf.mxu0
      %v250 = vadd.f32 0.0, %v249
      %v251 = vpop.f32.mrf.mxu0
      %252 = vdwg.mxu0
      %v253 = vadd.f32 %v218, %v250
      %vm254 = vcmask 523264
      %255 = vst.msk [vmem:[#allocation2] sm:$0xff] %vm254, %v253
      // Predicated region
      $region37: #{egtea_forward.16} parent=31 // pred_check
        %p256 = pneg %p212
      $region38: #{egtea_forward.16} parent=31 // pred_check_branch
        %258 = sbr.rel (%p256) target = $region40
      $region39: #{egtea_forward.16} parent=31 // pred_region
        %v259 = vld [vmem:[#allocation2] sm:$0xff]
        %v260 = vld [vmem:[%s2] sm:$0x1]
        %v262 = vperm.slane %v260, 0
        %v264 = vadd.f32 %v259, %v262
        %v265 = vmul.f32 %v264, %v264
        %v266 = vmul.f32 %v264, %v265
        %v267 = vmul.f32 %v266, 0.044715
        %v268 = vadd.f32 %v264, %v267
        %v269 = vmul.f32 %v268, 0.7978846
        %v270 = vtanh.pop %v269
        %v271 = vadd.f32 %v270, 1.0
        %v272 = vmul.f32 %v271, 0.5
        %v273 = vmul.f32 %v264, %v272
        %v274 = vpack.c.bf16 %v273, %v273
        %vm275 = vcmask 519168
        %276 = vst.msk [vmem:[%s210] sm:$0xf] %vm275, %v274
      $region40: #{egtea_forward.16} parent=31 // pred_fallthru
        _
      %p277 = scmp.lt.s32.totalorder %s18, 1
      %s278 = scalar_select %p277, %s18, 1
      %s279 = smul.addr %s278, 4
      %s280 = scalar_lea.vmem %s3, %s279
      // Predicated region
      $region41: #{egtea_forward.16} parent=31 // pred_check
        %p281 = pneg %p119
      $region42: #{egtea_forward.16} parent=31 // pred_check_branch
        %283 = sbr.rel (%p281) target = $region44
      $region43: #{egtea_forward.16} parent=31 // pred_region
        _
      $region44: #{egtea_forward.16} parent=31 // pred_fallthru
        _
    $region32: #{egtea_forward.16} parent=5 // pred_fallthru
      _
    %p284 = scmp.le.s32.totalorder 2, %s9
    // Predicated region
    $region45: #{egtea_forward.16} parent=5 // pred_check
      %p285 = pneg %p284
    $region46: #{egtea_forward.16} parent=5 // pred_check_branch
      %287 = sbr.rel (%p285) target = $region48
    $region47: #{egtea_forward.16} parent=5 // pred_region
      %s288 = ssub.s32 %s9, 2
      // Predicated region
      $region49: #{egtea_forward.16} parent=47 // pred_check
        %p289 = pneg %p125
      $region50: #{egtea_forward.16} parent=47 // pred_check_branch
        %291 = sbr.rel (%p289) target = $region52
      $region51: #{egtea_forward.16} parent=47 // pred_region
        %p292 = scmp.lt.s32.totalorder %s20, 1
        %s293 = scalar_select %p292, %s20, 1
        %s294 = smul.addr %s293, 4
        %s295 = scalar_lea.vmem %s3, %s294
      $region52: #{egtea_forward.16} parent=47 // pred_fallthru
        _
    $region48: #{egtea_forward.16} parent=5 // pred_fallthru
      _
  $region6: #{egtea_forward.16} parent=0 // loop_footer
    %s13 = sadd.s32 1, %s9
  $region7: #{egtea_forward.16} parent=0 // loop_footer_branch
    %8 = sbr.rel target = $region3
  $region8: #{egtea_forward.16} parent=0 // loop_exit
    _

// kernel: egtea_forward.23
$region0: #{egtea_forward.23}
  #allocation0 [shape = 'u32[]', space=smem, size = 0x4, offset = 0x4, fixed_abs, tag = 'smem constant byte address 0x4 - core index']
  #allocation1 [shape = 'u32[72,128]{1,0:T(1,128)}', space=vmem, size = 0x9000, scoped, tag = 'internal scratch']
  #allocation2 [shape = 'f32[2,128]{1,0:T(2,128)}', space=vmem, size = 0x400, scoped, tag = 'scratch operand']
  %s0 = inlined_call_operand.vmem [shape: bf16[2,32], index: 0, kind: input, shape index: {}]
  %s1 = inlined_call_operand.vmem [shape: bf16[32,128], index: 1, kind: input, shape index: {}]
  %s2 = inlined_call_operand.vmem [shape: f32[1,128], index: 2, kind: input, shape index: {}]
  %s3 = inlined_call_operand.vmem [shape: f32[2,128], index: 3, kind: output, shape index: {}]
  %s4 = sld [smem:[#allocation0]]
  $region30: #{egtea_forward.23} parent=0
    _
  %s6 = ssub.s32 1, %s4
  %s7 = scalar_select 0, %s6, %s4
  // Predicated region
  $region2: #{egtea_forward.23} parent=0 // pred_check
    _
  $region3: #{egtea_forward.23} parent=0 // pred_check_branch
    %9 = sbr.rel (0) target = $region5
  $region4: #{egtea_forward.23} parent=0 // pred_region
    _
  $region5: #{egtea_forward.23} parent=0 // pred_fallthru
    _
  // Predicated region
  $region6: #{egtea_forward.23} parent=0 // pred_check
    _
  $region7: #{egtea_forward.23} parent=0 // pred_check_branch
    %11 = sbr.rel (0) target = $region9
  $region8: #{egtea_forward.23} parent=0 // pred_region
    _
  $region9: #{egtea_forward.23} parent=0 // pred_fallthru
    _
  // Predicated region
  $region10: #{egtea_forward.23} parent=0 // pred_check
    _
  $region11: #{egtea_forward.23} parent=0 // pred_check_branch
    %13 = sbr.rel (0) target = $region13
  $region12: #{egtea_forward.23} parent=0 // pred_region
    _
  $region13: #{egtea_forward.23} parent=0 // pred_fallthru
    _
  %p15 = scmp.eq.s32.totalorder 0, 0
  // Predicated region
  $region14: #{egtea_forward.23} parent=0 // pred_check
    %p16 = pneg %p15
  $region15: #{egtea_forward.23} parent=0 // pred_check_branch
    %18 = sbr.rel (%p16) target = $region17
  $region16: #{egtea_forward.23} parent=0 // pred_region
    %19 = vst [vmem:[#allocation2] sm:$0x3] 0.0
  $region17: #{egtea_forward.23} parent=0 // pred_fallthru
    _
  %v20 = vld [vmem:[#allocation2] sm:$0x3]
  %v21 = vld [vmem:[%s0] sm:$0x1]
  %v22 = vld [vmem:[%s1] sm:$0xf]
  %v23 = vld [vmem:[%s1 + $0x4] sm:$0xf]
  %v24 = vld [vmem:[%s1 + $0x8] sm:$0xf]
  %v25 = vld [vmem:[%s1 + $0xc] sm:$0xf]
  %v30 = vunpack.c.l.b16 %v22
  %v31 = vunpack.c.l.b16 %v23
  %v32 = vunpack.c.l.b16 %v24
  %v33 = vunpack.c.l.b16 %v25
  %v34 = vpack.c.b16 %v31, %v30
  %v35 = vpack.c.b16 %v33, %v32
  %vm38 = vcmask 261120
  %v40 = vsel %vm38, %v21, 0
  %42 = vmatpush.bf16.msra.mxu0 0
  %43 = vmatpush.bf16.msra.mxu0 0
  %44 = vmatpush.bf16.msra.mxu0 0
  %45 = vmatpush.bf16.msra.mxu0 0
  %46 = vmatpush.bf16.msra.mxu0 0
  %47 = vmatpush.bf16.msra.mxu0 0
  %48 = vmatpush.bf16.msra.mxu0 %v35
  %49 = vmatpush.bf16.msra.mxu0 %v34
  %50 = vmatmul.bf16.gmra.mxu0 %v40
  %v51 = vpop.f32.mrf.mxu0
  %v52 = vadd.f32 0.0, %v51
  %v53 = vpop.f32.mrf.mxu0
  %54 = vdwg.mxu0
  %v55 = vadd.f32 %v20, %v52
  %56 = vst [vmem:[#allocation2] sm:$0x3] %v55
  // Predicated region
  $region18: #{egtea_forward.23} parent=0 // pred_check
    %p57 = pneg %p15
  $region19: #{egtea_forward.23} parent=0 // pred_check_branch
    %59 = sbr.rel (%p57) target = $region21
  $region20: #{egtea_forward.23} parent=0 // pred_region
    %v60 = vld [vmem:[#allocation2] sm:$0x3]
    %v61 = vld [vmem:[%s2] sm:$0x1]
    %v63 = vperm.slane %v61, 0
    %v65 = vadd.f32 %v60, %v63
    %66 = vst [vmem:[%s3] sm:$0x3] %v65
  $region21: #{egtea_forward.23} parent=0 // pred_fallthru
    _
  // Predicated region
  $region22: #{egtea_forward.23} parent=0 // pred_check
    _
  $region23: #{egtea_forward.23} parent=0 // pred_check_branch
    %68 = sbr.rel (0) target = $region25
  $region24: #{egtea_forward.23} parent=0 // pred_region
    _
  $region25: #{egtea_forward.23} parent=0 // pred_fallthru
    _
  // Predicated region
  $region26: #{egtea_forward.23} parent=0 // pred_check
    _
  $region27: #{egtea_forward.23} parent=0 // pred_check_branch
    %70 = sbr.rel (0) target = $region29
  $region28: #{egtea_forward.23} parent=0 // pred_region
    _
  $region29: #{egtea_forward.23} parent=0 // pred_fallthru
    _

// kernel: egtea_forward.17
$region0: #{egtea_forward.17}
  #allocation0 [shape = 'u32[]', space=smem, size = 0x4, offset = 0x4, fixed_abs, tag = 'smem constant byte address 0x4 - core index']
  #allocation1 [shape = 'u32[72,128]{1,0:T(1,128)}', space=vmem, size = 0x9000, scoped, tag = 'internal scratch']
  #allocation2 [shape = 'f32[8,32]{1,0:T(8,128)}', space=vmem, size = 0x1000, scoped, tag = 'scratch operand']
  %s0 = inlined_call_operand.vmem [shape: bf16[16,64], index: 0, kind: input, shape index: {}]
  %s1 = inlined_call_operand.vmem [shape: bf16[64,32], index: 1, kind: input, shape index: {}]
  %s2 = inlined_call_operand.vmem [shape: f32[1,32], index: 2, kind: input, shape index: {}]
  %s3 = inlined_call_operand.vmem [shape: f32[16,32], index: 3, kind: input, shape index: {}]
  %s4 = inlined_call_operand.vmem [shape: f32[1,32], index: 4, kind: input, shape index: {}]
  %s5 = inlined_call_operand.vmem [shape: f32[1,32], index: 5, kind: input, shape index: {}]
  %s6 = inlined_call_operand.vmem [shape: f32[16,32], index: 6, kind: output, shape index: {0}]
  %s7 = inlined_call_operand.vmem [shape: bf16[16,32], index: 7, kind: output, shape index: {1}]
  %8 = xla_tuple %s6, %s7
  %s9 = sld [smem:[#allocation0]]
  $region73: #{egtea_forward.17} parent=0
    _
  %s11 = ssub.s32 1, %s9
  %s12 = scalar_select 0, %s11, %s9
  loop: start=0, step=1, limit=4
  $region2: #{egtea_forward.17} parent=0 // loop_pre_header
    _
  $region3: #{egtea_forward.17} parent=0 // loop_header
    %s14 = sphi 0, %s18
    %p15 = scmp.ge.s32.totalorder %s14, 4
    %s21 = sphi 0, %s33
    %s22 = sphi 0, %s29
    %s23 = sphi 0, %s21
    %s24 = sphi 0, %s22
    %s25 = sphi 0, %s23
    %s26 = sphi 0, %s24
    %s38 = sphi 0, %s40
    %s41 = sphi 0, %s38
    %s42 = sphi 0, %s41
    %s58 = sphi 0, %s42
    %s64 = sphi 0, %s66
    %s67 = sphi 0, %s64
    %s68 = sphi 0, %s67
    %s84 = sphi 0, %s68
    %s88 = sphi 0, %s88
    %s90 = sphi 0, %s88
    %s91 = sphi 0, %s90
    %s105 = sphi 0, %s91
    %s111 = sphi 0, %s113
    %s114 = sphi 0, %s111
    %s115 = sphi 0, %s114
    %s131 = sphi 0, %s115
    %s135 = sphi 0, %s135
    %s137 = sphi 0, %s135
    %s138 = sphi 0, %s137
    %s152 = sphi 0, %s138
    %s156 = sphi 0, %s156
    %s158 = sphi 0, %s156
    %s159 = sphi 0, %s158
    %s173 = sphi 0, %s159
    %s179 = sphi 0, %s181
    %s182 = sphi 0, %s179
    %s183 = sphi 0, %s182
    %s199 = sphi 0, %s183
    %s205 = sphi 0, %s207
    %s208 = sphi 0, %s205
    %s209 = sphi 0, %s208
    %s225 = sphi 0, %s209
  $region4: #{egtea_forward.17} parent=0 // loop_header_branch
    %17 = sbr.rel (%p15) target = $region8
  $region5: #{egtea_forward.17} parent=0 // loop_body
    %s19 = ssub.s32 %s14, 1
    %s20 = ssub.s32 %s14, 2
    %s27 = sadd.s32 1, %s22
    %p28 = scmp.ge.s32.totalorder %s27, 1
    %s29 = scalar_select %p28, 0, %s27
    %s30 = sadd.s32 1, %s21
    %s31 = scalar_select %p28, %s30, %s21
    %p32 = scmp.ge.s32.totalorder %s31, 2
    %s33 = scalar_select %p32, 0, %s31
    %s34 = ssub.s32 %s21, %s33
    %s35 = ssub.s32 %s22, %s29
    %s36 = sor.u32 %s34, %s35
    %p37 = scmp.eq.s32.totalorder %s36, 0
    %s39 = sadd.s32 %s38, 1
    %s40 = scalar_select %p37, %s38, %s39
    %p43 = pneg %p37
    %p44 = scmp.eq.s32.totalorder %s14, 1
    %p45 = por %p43, %p44
    %p46 = scmp.ne.s32.totalorder %s38, %s41
    %p47 = scmp.eq.s32.totalorder %s14, 0
    %p48 = por %p46, %p47
    %p49 = scmp.ne.s32.totalorder %s38, %s41
    %p50 = scmp.eq.s32.totalorder %s19, 1
    %p51 = por %p49, %p50
    %p52 = scmp.ne.s32.totalorder %s41, %s42
    %p53 = scmp.eq.s32.totalorder %s19, 0
    %p54 = por %p52, %p53
    %p55 = scmp.ne.s32.totalorder %s41, %s42
    %p56 = scmp.eq.s32.totalorder %s20, 1
    %p57 = por %p55, %p56
    %p59 = scmp.ne.s32.totalorder %s42, %s58
    %p60 = scmp.eq.s32.totalorder %s20, 0
    %p61 = por %p59, %p60
    %s62 = ssub.s32 %s22, %s29
    %p63 = scmp.eq.s32.totalorder %s62, 0
    %s65 = sadd.s32 %s64, 1
    %s66 = scalar_select %p63, %s64, %s65
    %p69 = pneg %p63
    %p70 = scmp.eq.s32.totalorder %s14, 1
    %p71 = por %p69, %p70
    %p72 = scmp.ne.s32.totalorder %s64, %s67
    %p73 = scmp.eq.s32.totalorder %s14, 0
    %p74 = por %p72, %p73
    %p75 = scmp.ne.s32.totalorder %s64, %s67
    %p76 = scmp.eq.s32.totalorder %s19, 1
    %p77 = por %p75, %p76
    %p78 = scmp.ne.s32.totalorder %s67, %s68
    %p79 = scmp.eq.s32.totalorder %s19, 0
    %p80 = por %p78, %p79
    %p81 = scmp.ne.s32.totalorder %s67, %s68
    %p82 = scmp.eq.s32.totalorder %s20, 1
    %p83 = por %p81, %p82
    %p85 = scmp.ne.s32.totalorder %s68, %s84
    %p86 = scmp.eq.s32.totalorder %s20, 0
    %p87 = por %p85, %p86
    %s89 = sadd.s32 %s88, 1
    %p92 = scmp.eq.s32.totalorder %s14, 1
    %p93 = scmp.ne.s32.totalorder %s88, %s90
    %p94 = scmp.eq.s32.totalorder %s14, 0
    %p95 = por %p93, %p94
    %p96 = scmp.ne.s32.totalorder %s88, %s90
    %p97 = scmp.eq.s32.totalorder %s19, 1
    %p98 = por %p96, %p97
    %p99 = scmp.ne.s32.totalorder %s90, %s91
    %p100 = scmp.eq.s32.totalorder %s19, 0
    %p101 = por %p99, %p100
    %p102 = scmp.ne.s32.totalorder %s90, %s91
    %p103 = scmp.eq.s32.totalorder %s20, 1
    %p104 = por %p102, %p103
    %p106 = scmp.ne.s32.totalorder %s91, %s105
    %p107 = scmp.eq.s32.totalorder %s20, 0
    %p108 = por %p106, %p107
    %s109 = ssub.s32 %s21, %s33
    %p110 = scmp.eq.s32.totalorder %s109, 0
    %s112 = sadd.s32 %s111, 1
    %s113 = scalar_select %p110, %s111, %s112
    %p116 = pneg %p110
    %p117 = scmp.eq.s32.totalorder %s14, 1
    %p118 = por %p116, %p117
    %p119 = scmp.ne.s32.totalorder %s111, %s114
    %p120 = scmp.eq.s32.totalorder %s14, 0
    %p121 = por %p119, %p120
    %p122 = scmp.ne.s32.totalorder %s111, %s114
    %p123 = scmp.eq.s32.totalorder %s19, 1
    %p124 = por %p122, %p123
    %p125 = scmp.ne.s32.totalorder %s114, %s115
    %p126 = scmp.eq.s32.totalorder %s19, 0
    %p127 = por %p125, %p126
    %p128 = scmp.ne.s32.totalorder %s114, %s115
    %p129 = scmp.eq.s32.totalorder %s20, 1
    %p130 = por %p128, %p129
    %p132 = scmp.ne.s32.totalorder %s115, %s131
    %p133 = scmp.eq.s32.totalorder %s20, 0
    %p134 = por %p132, %p133
    %s136 = sadd.s32 %s135, 1
    %p139 = scmp.eq.s32.totalorder %s14, 1
    %p140 = scmp.ne.s32.totalorder %s135, %s137
    %p141 = scmp.eq.s32.totalorder %s14, 0
    %p142 = por %p140, %p141
    %p143 = scmp.ne.s32.totalorder %s135, %s137
    %p144 = scmp.eq.s32.totalorder %s19, 1
    %p145 = por %p143, %p144
    %p146 = scmp.ne.s32.totalorder %s137, %s138
    %p147 = scmp.eq.s32.totalorder %s19, 0
    %p148 = por %p146, %p147
    %p149 = scmp.ne.s32.totalorder %s137, %s138
    %p150 = scmp.eq.s32.totalorder %s20, 1
    %p151 = por %p149, %p150
    %p153 = scmp.ne.s32.totalorder %s138, %s152
    %p154 = scmp.eq.s32.totalorder %s20, 0
    %p155 = por %p153, %p154
    %s157 = sadd.s32 %s156, 1
    %p160 = scmp.eq.s32.totalorder %s14, 1
    %p161 = scmp.ne.s32.totalorder %s156, %s158
    %p162 = scmp.eq.s32.totalorder %s14, 0
    %p163 = por %p161, %p162
    %p164 = scmp.ne.s32.totalorder %s156, %s158
    %p165 = scmp.eq.s32.totalorder %s19, 1
    %p166 = por %p164, %p165
    %p167 = scmp.ne.s32.totalorder %s158, %s159
    %p168 = scmp.eq.s32.totalorder %s19, 0
    %p169 = por %p167, %p168
    %p170 = scmp.ne.s32.totalorder %s158, %s159
    %p171 = scmp.eq.s32.totalorder %s20, 1
    %p172 = por %p170, %p171
    %p174 = scmp.ne.s32.totalorder %s159, %s173
    %p175 = scmp.eq.s32.totalorder %s20, 0
    %p176 = por %p174, %p175
    %s177 = ssub.s32 %s21, %s33
    %p178 = scmp.eq.s32.totalorder %s177, 0
    %s180 = sadd.s32 %s179, 1
    %s181 = scalar_select %p178, %s179, %s180
    %p184 = pneg %p178
    %p185 = scmp.eq.s32.totalorder %s14, 1
    %p186 = por %p184, %p185
    %p187 = scmp.ne.s32.totalorder %s179, %s182
    %p188 = scmp.eq.s32.totalorder %s14, 0
    %p189 = por %p187, %p188
    %p190 = scmp.ne.s32.totalorder %s179, %s182
    %p191 = scmp.eq.s32.totalorder %s19, 1
    %p192 = por %p190, %p191
    %p193 = scmp.ne.s32.totalorder %s182, %s183
    %p194 = scmp.eq.s32.totalorder %s19, 0
    %p195 = por %p193, %p194
    %p196 = scmp.ne.s32.totalorder %s182, %s183
    %p197 = scmp.eq.s32.totalorder %s20, 1
    %p198 = por %p196, %p197
    %p200 = scmp.ne.s32.totalorder %s183, %s199
    %p201 = scmp.eq.s32.totalorder %s20, 0
    %p202 = por %p200, %p201
    %s203 = ssub.s32 %s21, %s33
    %p204 = scmp.eq.s32.totalorder %s203, 0
    %s206 = sadd.s32 %s205, 1
    %s207 = scalar_select %p204, %s205, %s206
    %p210 = pneg %p204
    %p211 = scmp.eq.s32.totalorder %s14, 1
    %p212 = por %p210, %p211
    %p213 = scmp.ne.s32.totalorder %s205, %s208
    %p214 = scmp.eq.s32.totalorder %s14, 0
    %p215 = por %p213, %p214
    %p216 = scmp.ne.s32.totalorder %s205, %s208
    %p217 = scmp.eq.s32.totalorder %s19, 1
    %p218 = por %p216, %p217
    %p219 = scmp.ne.s32.totalorder %s208, %s209
    %p220 = scmp.eq.s32.totalorder %s19, 0
    %p221 = por %p219, %p220
    %p222 = scmp.ne.s32.totalorder %s208, %s209
    %p223 = scmp.eq.s32.totalorder %s20, 1
    %p224 = por %p222, %p223
    %p226 = scmp.ne.s32.totalorder %s209, %s225
    %p227 = scmp.eq.s32.totalorder %s20, 0
    %p228 = por %p226, %p227
    %p229 = scmp.le.s32.totalorder 1, %s14
    %p230 = scmp.lt.s32.totalorder %s14, 3
    %p231 = pnand %p229, %p230
    %p232 = pneg %p231
    // Predicated region
    $region9: #{egtea_forward.17} parent=5 // pred_check
      _
    $region10: #{egtea_forward.17} parent=5 // pred_check_branch
      %234 = sbr.rel (%p231) target = $region12
    $region11: #{egtea_forward.17} parent=5 // pred_region
      %s235 = ssub.s32 %s14, 1
      // Predicated region
      $region13: #{egtea_forward.17} parent=11 // pred_check
        %p236 = pneg %p80
      $region14: #{egtea_forward.17} parent=11 // pred_check_branch
        %238 = sbr.rel (%p236) target = $region16
      $region15: #{egtea_forward.17} parent=11 // pred_region
        %s239 = smul.u32 8, %s24
        %p240 = scmp.lt.s32.totalorder %s239, 7
        %s241 = scalar_select %p240, %s239, 7
        %s242 = smul.addr %s241, 4
        %s243 = scalar_lea.vmem %s1, %s242
        %s244 = smul.u32 8, %s24
      $region16: #{egtea_forward.17} parent=11 // pred_fallthru
        _
      // Predicated region
      $region17: #{egtea_forward.17} parent=11 // pred_check
        %p245 = pneg %p101
      $region18: #{egtea_forward.17} parent=11 // pred_check_branch
        %247 = sbr.rel (%p245) target = $region20
      $region19: #{egtea_forward.17} parent=11 // pred_region
        _
      $region20: #{egtea_forward.17} parent=11 // pred_fallthru
        _
      // Predicated region
      $region21: #{egtea_forward.17} parent=11 // pred_check
        %p248 = pneg %p148
      $region22: #{egtea_forward.17} parent=11 // pred_check_branch
        %250 = sbr.rel (%p248) target = $region24
      $region23: #{egtea_forward.17} parent=11 // pred_region
        _
      $region24: #{egtea_forward.17} parent=11 // pred_fallthru
        _
      // Predicated region
      $region25: #{egtea_forward.17} parent=11 // pred_check
        %p251 = pneg %p169
      $region26: #{egtea_forward.17} parent=11 // pred_check_branch
        %253 = sbr.rel (%p251) target = $region28
      $region27: #{egtea_forward.17} parent=11 // pred_region
        _
      $region28: #{egtea_forward.17} parent=11 // pred_fallthru
        _
    $region12: #{egtea_forward.17} parent=5 // pred_fallthru
      _
    %p254 = scmp.lt.s32.totalorder %s14, 2
    // Predicated region
    $region29: #{egtea_forward.17} parent=5 // pred_check
      %p255 = pneg %p254
    $region30: #{egtea_forward.17} parent=5 // pred_check_branch
      %257 = sbr.rel (%p255) target = $region32
    $region31: #{egtea_forward.17} parent=5 // pred_region
      // Predicated region
      $region33: #{egtea_forward.17} parent=31 // pred_check
        %p258 = pneg %p48
      $region34: #{egtea_forward.17} parent=31 // pred_check_branch
        %260 = sbr.rel (%p258) target = $region36
      $region35: #{egtea_forward.17} parent=31 // pred_region
        %p261 = scmp.lt.s32.totalorder %s21, 1
        %s262 = scalar_select %p261, %s21, 1
        %p263 = scmp.lt.s32.totalorder %s22, 0
        %s264 = scalar_select %p263, %s22, 0
        %s265 = sadd.s32 %s264, %s262
        %s266 = smul.addr %s265, 4
        %s267 = scalar_lea.vmem %s0, %s266
      $region36: #{egtea_forward.17} parent=31 // pred_fallthru
        _
      // Predicated region
      $region37: #{egtea_forward.17} parent=31 // pred_check
        %p268 = pneg %p121
      $region38: #{egtea_forward.17} parent=31 // pred_check_branch
        %270 = sbr.rel (%p268) target = $region40
      $region39: #{egtea_forward.17} parent=31 // pred_region
        %p271 = scmp.lt.s32.totalorder %s21, 1
        %s272 = scalar_select %p271, %s21, 1
        %s273 = smul.addr %s272, 8
        %s274 = scalar_lea.vmem %s3, %s273
      $region40: #{egtea_forward.17} parent=31 // pred_fallthru
        _
    $region32: #{egtea_forward.17} parent=5 // pred_fallthru
      _
    %p275 = scmp.le.s32.totalorder 1, %s14
    %p276 = scmp.lt.s32.totalorder %s14, 3
    %p277 = pnand %p275, %p276
    %p278 = pneg %p277
    // Predicated region
    $region41: #{egtea_forward.17} parent=5 // pred_check
      _
    $region42: #{egtea_forward.17} parent=5 // pred_check_branch
      %280 = sbr.rel (%p277) target = $region44
    $region43: #{egtea_forward.17} parent=5 // pred_region
      %s281 = ssub.s32 %s14, 1
      %p282 = scmp.lt.s32.totalorder %s23, 1
      %s283 = scalar_select %p282, %s23, 1
      %p284 = scmp.lt.s32.totalorder %s24, 0
      %s285 = scalar_select %p284, %s24, 0
      %s286 = sadd.s32 %s285, %s283
      %s287 = smul.addr %s286, 4
      %s288 = scalar_lea.vmem %s0, %s287
      %p289 = pneg %p54
      %p290 = pneg %p51
      %s291 = smul.u32 8, %s24
      %p292 = scmp.lt.s32.totalorder %s291, 7
      %s293 = scalar_select %p292, %s291, 7
      %s294 = smul.addr %s293, 4
      %s295 = scalar_lea.vmem %s1, %s294
      %p296 = pneg %p80
      %p297 = pneg %p77
      %p298 = pneg %p101
      %p299 = pneg %p98
      %p300 = scmp.lt.s32.totalorder %s23, 1
      %s301 = scalar_select %p300, %s23, 1
      %s302 = smul.addr %s301, 8
      %s303 = scalar_lea.vmem %s3, %s302
      %p304 = pneg %p127
      %p305 = pneg %p124
      %p306 = pneg %p148
      %p307 = pneg %p145
      %p308 = pneg %p169
      %p309 = pneg %p166
      %p310 = pneg %p195
      %p311 = pneg %p192
      %p312 = scmp.lt.s32.totalorder %s23, 1
      %s313 = scalar_select %p312, %s23, 1
      %s314 = smul.addr %s313, 8
      %s315 = scalar_lea.vmem %s6, %s314
      %p316 = pneg %p221
      %p317 = pneg %p218
      %p318 = scmp.lt.s32.totalorder %s23, 1
      %s319 = scalar_select %p318, %s23, 1
      %s320 = smul.addr %s319, 4
      %s321 = scalar_lea.vmem %s7, %s320
      %p322 = scmp.lt.s32.totalorder %s23, 1
      %s323 = scalar_select %p322, %s23, 1
      %p324 = scmp.lt.s32.totalorder %s24, 0
      %s325 = scalar_select %p324, %s24, 0
      %s326 = sadd.s32 %s325, %s323
      %s327 = smul.addr %s326, 4
      %s328 = scalar_lea.vmem %s0, %s327
      %s329 = smul.u32 8, %s24
      %p330 = scmp.lt.s32.totalorder %s329, 7
      %s331 = scalar_select %p330, %s329, 7
      %s332 = smul.addr %s331, 4
      %s333 = scalar_lea.vmem %s1, %s332
      %s334 = smul.u32 8, %s24
      %p335 = scmp.lt.s32.totalorder %s23, 1
      %s336 = scalar_select %p335, %s23, 1
      %s337 = smul.addr %s336, 8
      %s338 = scalar_lea.vmem %s3, %s337
      %p339 = scmp.lt.s32.totalorder %s23, 1
      %s340 = scalar_select %p339, %s23, 1
      %s341 = smul.addr %s340, 8
      %s342 = scalar_lea.vmem %s6, %s341
      %p343 = scmp.lt.s32.totalorder %s23, 1
      %s344 = scalar_select %p343, %s23, 1
      %s345 = smul.addr %s344, 4
      %s346 = scalar_lea.vmem %s7, %s345
      %p348 = scmp.eq.s32.totalorder %s24, 0
      // Predicated region
      $region45: #{egtea_forward.17} parent=43 // pred_check
        %p349 = pneg %p348
      $region46: #{egtea_forward.17} parent=43 // pred_check_branch
        %351 = sbr.rel (%p349) target = $region48
      $region47: #{egtea_forward.17} parent=43 // pred_region
        %vm352 = vcmask 261120
        %353 = vst.msk [vmem:[#allocation2] sm:$0xff] %vm352, 0.0
      $region48: #{egtea_forward.17} parent=43 // pred_fallthru
        _
      %v354 = vld [vmem:[#allocation2] sm:$0xff]
      %v355 = vld [vmem:[%s328] sm:$0xf]
      %v356 = vld [vmem:[%s333] sm:$0xf]
      %v357 = vld [vmem:[%s333 + $0x4] sm:$0xf]
      %v358 = vld [vmem:[%s333 + $0x8] sm:$0xf]
      %v359 = vld [vmem:[%s333 + $0xc] sm:$0xf]
      %v360 = vld [vmem:[%s333 + $0x10] sm:$0xf]
      %v361 = vld [vmem:[%s333 + $0x14] sm:$0xf]
      %v362 = vld [vmem:[%s333 + $0x18] sm:$0xf]
      %v363 = vld [vmem:[%s333 + $0x1c] sm:$0xf]
      %v372 = vunpack.c.l.b16 %v356
      %v373 = vunpack.c.l.b16 %v357
      %v374 = vunpack.c.l.b16 %v358
      %v375 = vunpack.c.l.b16 %v359
      %v376 = vunpack.c.l.b16 %v360
      %v377 = vunpack.c.l.b16 %v361
      %v378 = vunpack.c.l.b16 %v362
      %v379 = vunpack.c.l.b16 %v363
      %v380 = vpack.c.b16 %v373, %v372
      %v381 = vpack.c.b16 %v375, %v374
      %v382 = vpack.c.b16 %v377, %v376
      %v383 = vpack.c.b16 %v379, %v378
      %vm388 = vcmask 523264
      %v390 = vsel %vm388, %v355, 0
      %392 = vmatpush.bf16.msra.mxu0 0
      %393 = vmatpush.bf16.msra.mxu0 0
      %394 = vmatpush.bf16.msra.mxu0 0
      %395 = vmatpush.bf16.msra.mxu0 0
      %396 = vmatpush.bf16.msra.mxu0 %v383
      %397 = vmatpush.bf16.msra.mxu0 %v382
      %398 = vmatpush.bf16.msra.mxu0 %v381
      %399 = vmatpush.bf16.msra.mxu0 %v380
      %400 = vmatmul.bf16.gmra.mxu0 %v390
      %v401 = vpop.f32.mrf.mxu0
      %v402 = vadd.f32 0.0, %v401
      %v403 = vpop.f32.mrf.mxu0
      %404 = vdwg.mxu0
      %v405 = vadd.f32 %v354, %v402
      %vm406 = vcmask 261120
      %407 = vst.msk [vmem:[#allocation2] sm:$0xff] %vm406, %v405
      // Predicated region
      $region49: #{egtea_forward.17} parent=43 // pred_check
        %p408 = pneg %p348
      $region50: #{egtea_forward.17} parent=43 // pred_check_branch
        %410 = sbr.rel (%p408) target = $region52
      $region51: #{egtea_forward.17} parent=43 // pred_region
        %v411 = vld [vmem:[#allocation2] sm:$0xff]
        %v412 = vld [vmem:[%s2] sm:$0x1]
        %v414 = vperm.slane %v412, 0
        %v416 = vadd.f32 %v411, %v414
        %v417 = vld [vmem:[%s338] sm:$0xff]
        %v418 = vadd.f32 %v416, %v417
        %v419 = vsel %vm406, %v418, 0.0
        %420 = vadd.xlane.f32.xlu0 %v419
        %v421 = vpop.xlane.xlu0 %420
        %v422 = vrcp.pop 32.0
        %v423 = vmul.f32 32.0, %v422
        %v424 = vsub.f32 1.0, %v423
        %v425 = vmul.f32 %v422, %v424
        %v426 = vadd.f32 %v422, %v425
        %vm427 = vweird.f32 %v422
        %v428 = vsel %vm427, %v422, %v426
        %v429 = vmul.f32 %v421, %v428
        %v430 = vmul.f32 %v418, %v418
        %v431 = vsel %vm406, %v430, 0.0
        %432 = vadd.xlane.f32.xlu0 %v431
        %v433 = vpop.xlane.xlu0 %432
        %v434 = vmul.f32 %v433, %v428
        %v435 = vmul.f32 %v429, %v429
        %v436 = vsub.f32 %v434, %v435
        %v437 = vmax.f32 %v436, 0.0
        %v438 = vsub.f32 %v418, %v429
        %v439 = vadd.f32 %v437, 1e-12
        %v440 = vrsqrt.pop %v439
        %v441 = vmul.f32 %v440, %v439
        %v442 = vmul.f32 %v441, %v440
        %v443 = vmul.f32 0.5, %v442
        %v444 = vsub.f32 1.5, %v443
        %v445 = vmul.f32 %v440, %v444
        %vm446 = vweird.f32 %v439
        %vm447 = vweird.f32 %v440
        %vm448 = vmor %vm446, %vm447
        %v449 = vsel %vm448, %v440, %v445
        %v450 = vmul.f32 %v438, %v449
        %v451 = vld [vmem:[%s4] sm:$0x1]
        %v453 = vperm.slane %v451, 0
        %v455 = vmul.f32 %v450, %v453
        %v456 = vld [vmem:[%s5] sm:$0x1]
        %v458 = vperm.slane %v456, 0
        %v460 = vadd.f32 %v455, %v458
        %461 = vst.msk [vmem:[%s342] sm:$0xff] %vm406, %v460
        %v462 = vpack.c.bf16 %v460, %v460
        %vm463 = vcmask 257024
        %464 = vst.msk [vmem:[%s346] sm:$0xf] %vm463, %v462
      $region52: #{egtea_forward.17} parent=43 // pred_fallthru
        _
      %p465 = scmp.lt.s32.totalorder %s23, 1
      %s466 = scalar_select %p465, %s23, 1
      %s467 = smul.addr %s466, 8
      %s468 = scalar_lea.vmem %s6, %s467
      %p469 = scmp.lt.s32.totalorder %s23, 1
      %s470 = scalar_select %p469, %s23, 1
      %s471 = smul.addr %s470, 4
      %s472 = scalar_lea.vmem %s7, %s471
      // Predicated region
      $region53: #{egtea_forward.17} parent=43 // pred_check
        %p473 = pneg %p192
      $region54: #{egtea_forward.17} parent=43 // pred_check_branch
        %475 = sbr.rel (%p473) target = $region56
      $region55: #{egtea_forward.17} parent=43 // pred_region
        _
      $region56: #{egtea_forward.17} parent=43 // pred_fallthru
        _
      // Predicated region
      $region57: #{egtea_forward.17} parent=43 // pred_check
        %p476 = pneg %p218
      $region58: #{egtea_forward.17} parent=43 // pred_check_branch
        %478 = sbr.rel (%p476) target = $region60
      $region59: #{egtea_forward.17} parent=43 // pred_region
        _
      $region60: #{egtea_forward.17} parent=43 // pred_fallthru
        _
    $region44: #{egtea_forward.17} parent=5 // pred_fallthru
      _
    %p479 = scmp.le.s32.totalorder 2, %s14
    // Predicated region
    $region61: #{egtea_forward.17} parent=5 // pred_check
      %p480 = pneg %p479
    $region62: #{egtea_forward.17} parent=5 // pred_check_branch
      %482 = sbr.rel (%p480) target = $region64
    $region63: #{egtea_forward.17} parent=5 // pred_region
      %s483 = ssub.s32 %s14, 2
      // Predicated region
      $region65: #{egtea_forward.17} parent=63 // pred_check
        %p484 = pneg %p198
      $region66: #{egtea_forward.17} parent=63 // pred_check_branch
        %486 = sbr.rel (%p484) target = $region68
      $region67: #{egtea_forward.17} parent=63 // pred_region
        %p487 = scmp.lt.s32.totalorder %s25, 1
        %s488 = scalar_select %p487, %s25, 1
        %s489 = smul.addr %s488, 8
        %s490 = scalar_lea.vmem %s6, %s489
      $region68: #{egtea_forward.17} parent=63 // pred_fallthru
        _
      // Predicated region
      $region69: #{egtea_forward.17} parent=63 // pred_check
        %p491 = pneg %p224
      $region70: #{egtea_forward.17} parent=63 // pred_check_branch
        %493 = sbr.rel (%p491) target = $region72
      $region71: #{egtea_forward.17} parent=63 // pred_region
        %p494 = scmp.lt.s32.totalorder %s25, 1
        %s495 = scalar_select %p494, %s25, 1
        %s496 = smul.addr %s495, 4
        %s497 = scalar_lea.vmem %s7, %s496
      $region72: #{egtea_forward.17} parent=63 // pred_fallthru
        _
    $region64: #{egtea_forward.17} parent=5 // pred_fallthru
      _
  $region6: #{egtea_forward.17} parent=0 // loop_footer
    %s18 = sadd.s32 1, %s14
  $region7: #{egtea_forward.17} parent=0 // loop_footer_branch
    %13 = sbr.rel target = $region3
  $region8: #{egtea_forward.17} parent=0 // loop_exit
    _

</llo_original>
